<compile_context>
chip_gen: v5e
topology: v5e:2x2
jax: 0.10.0
libtpu: 0.0.40
codegen_flags: <defaults>
</compile_context>

<pallas_src>
import jax
import jax.numpy as jnp
from jax import lax
from jax.experimental import pallas as pl
from jax.experimental.pallas import tpu as pltpu


def _round_up(x, m):
    return (x + m - 1) // m * m


# ----------------------------- Pallas kernel ---------------------------------
def _bilstm_avg_kernel(lens_ref, xf_ref, xb_ref,
                       wih_f_ref, wih_b_ref, b_f_ref, b_b_ref,
                       whh_f_ref, whh_b_ref,
                       wmlp_f_ref, wmlp_b_ref, b_mlp_ref,
                       wcls_ref, b_cls_ref,
                       out_ref,
                       zf_buf, zb_buf,
                       hf_s, cf_s, hb_s, cb_s, accf_s, accb_s):
    i = pl.program_id(0)
    n_chunks = pl.num_programs(0)
    Bp, Hp = hf_s.shape
    tt = zf_buf.shape[0] // Bp            # timesteps in this chunk
    Tp = tt * n_chunks                    # padded sequence length

    # ----------------------- init persistent state ---------------------------
    @pl.when(i == 0)
    def _init():
        hf_s[...] = jnp.zeros_like(hf_s)
        cf_s[...] = jnp.zeros_like(cf_s)
        hb_s[...] = jnp.zeros_like(hb_s)
        cb_s[...] = jnp.zeros_like(cb_s)
        accf_s[...] = jnp.zeros_like(accf_s)
        accb_s[...] = jnp.zeros_like(accb_s)

    # ---- hoisted input projections for this T-chunk (stored bf16) -----------
    zf_buf[...] = (jnp.dot(xf_ref[...], wih_f_ref[...],
                           preferred_element_type=jnp.float32)
                   + b_f_ref[...]).astype(jnp.bfloat16)
    zb_buf[...] = (jnp.dot(xb_ref[...], wih_b_ref[...],
                           preferred_element_type=jnp.float32)
                   + b_b_ref[...]).astype(jnp.bfloat16)

    lens = lens_ref[...]                  # (Bp, 1) int32, resident (no stream)
    t0 = i * tt                           # global forward step of row-block 0

    # ---------------- fwd+bwd recurrence over this chunk ----------------------
    # TODO(synk): keep whh_f/whh_b staged in MXU weight registers across steps
    # via pltpu.matmul_push_rhs / matmul_acc_lhs / matmul_pop once validated on
    # all target chips; jnp.dot re-pushes the identical RHS every timestep.
    def step(j, carry):
        hf, cf, hb, cb = carry
        t = t0 + j                        # scalar step index

        # forward direction: (Bp,Hp) @ (Hp,4Hp) -- no dead columns
        zf = jnp.dot(hf.astype(jnp.bfloat16), whh_f_ref[...],
                     preferred_element_type=jnp.float32)
        jf = pl.multiple_of(j * Bp, Bp)
        zf = zf + zf_buf[pl.ds(jf, Bp), :].astype(jnp.float32)

        # backward direction walks this chunk in reversed time (scalar index)
        zb = jnp.dot(hb.astype(jnp.bfloat16), whh_b_ref[...],
                     preferred_element_type=jnp.float32)
        jb = pl.multiple_of((tt - 1 - j) * Bp, Bp)
        zb = zb + zb_buf[pl.ds(jb, Bp), :].astype(jnp.float32)

        def lstm_gates(z, c):
            # PyTorch gate order i, f, g, o (lane-aligned Hp slices)
            ig = jax.nn.sigmoid(z[:, 0 * Hp:1 * Hp])
            fg = jax.nn.sigmoid(z[:, 1 * Hp:2 * Hp])
            gg = jnp.tanh(z[:, 2 * Hp:3 * Hp])
            og = jax.nn.sigmoid(z[:, 3 * Hp:4 * Hp])
            c_new = fg * c + ig * gg
            return og * jnp.tanh(c_new), c_new

        hf_new, cf_new = lstm_gates(zf, cf)
        hb_new, cb_new = lstm_gates(zb, cb)

        # validity from sequence lengths (prefix mask); freeze state outside
        valid_f = lens > t                                  # (Bp, 1) bool
        valid_b = lens > (Tp - 1 - t)
        hf = jnp.where(valid_f, hf_new, hf)
        cf = jnp.where(valid_f, cf_new, cf)
        hb = jnp.where(valid_b, hb_new, hb)
        cb = jnp.where(valid_b, cb_new, cb)

        # masked accumulation straight into VMEM (off the h->matmul dep chain,
        # keeps the fori_loop carry small -> fewer vreg spills)
        accf_s[...] += jnp.where(valid_f, hf, 0.0)
        accb_s[...] += jnp.where(valid_b, hb, 0.0)
        return (hf, cf, hb, cb)

    hf, cf, hb, cb = lax.fori_loop(
        0, tt, step, (hf_s[...], cf_s[...], hb_s[...], cb_s[...]))
    hf_s[...] = hf
    cf_s[...] = cf
    hb_s[...] = hb
    cb_s[...] = cb

    # ---------------- finalize: average pooling + MLP + classifier ------------
    @pl.when(i == n_chunks - 1)
    def _finalize():
        denom = jnp.maximum(lens, 1).astype(jnp.float32)    # (Bp, 1), no /0
        inv = 1.0 / denom                                   # exact, runs once
        sent_f = (accf_s[...] * inv).astype(jnp.bfloat16)
        sent_b = (accb_s[...] * inv).astype(jnp.bfloat16)
        # split-weight MLP avoids any (Bp, 2Hp) lane concatenate
        sent = (jnp.dot(sent_f, wmlp_f_ref[...], preferred_element_type=jnp.float32)
                + jnp.dot(sent_b, wmlp_b_ref[...], preferred_element_type=jnp.float32)
                + b_mlp_ref[...])
        logits = (jnp.dot(sent.astype(jnp.bfloat16), wcls_ref[...],
                          preferred_element_type=jnp.float32)
                  + b_cls_ref[...])                          # lane-dense (Bp, NCp)
        out_ref[...] = logits


# ----------------------------- wrapper helpers --------------------------------
def _pad_gate_cols(w, H, Hp):
    """(rows, 4H) -> (rows, 4Hp): each of the 4 gate blocks zero-padded to Hp."""
    rows = w.shape[0]
    out = jnp.zeros((rows, 4 * Hp), w.dtype)
    for k in range(4):
        out = out.at[:, k * Hp:k * Hp + H].set(w[:, k * H:(k + 1) * H])
    return out


def _vmem_budget_bytes():
    # ~15% headroom below physical per-core VMEM
    # (v7x: ~54 MiB, v5e/v6e: ~109 MiB), Mosaic internals need the rest.
    try:
        phys = int(pltpu.get_tpu_info().vmem_capacity_bytes)
    except Exception:
        phys = 64 * 2 ** 20              # conservative default: v7x per-TC VMEM
    return int(phys * 0.85)


# ----------------------------- wrapper ----------------------------------------
def bilstm_average_forward(word_inputs, mask, seq_lengths, params, *, chunk_t=None):
    """Forward pass. Assumes prefix masks: mask[b, t] == (t < seq_lengths[b])."""
    del mask                             # lengths fully encode the (prefix) mask
    B, T = word_inputs.shape
    # Embedding gather is glue, done in plain JAX.
    emb = params["embedding"][word_inputs]                 # (B, T, D) f32
    D = emb.shape[-1]
    H = params["whh_f_t"].shape[0]
    mlp_dim = params["wmlp_t"].shape[-1]
    n_class = params["wcls_t"].shape[-1]

    # ---- TPU-friendly padding (lane / sublane alignment) ----------------------
    Bp = _round_up(B, 16)                # bf16 sublane tile = 16 rows
    Hp = _round_up(H, 128)               # lane-aligned gate slices
    MLPp = _round_up(mlp_dim, 128)
    NCp = _round_up(n_class, 128)        # lane-dense classifier output

    bf = jnp.bfloat16
    # gate-block zero padding keeps the padded state columns exactly 0
    wih_f = _pad_gate_cols(params["wih_f_t"], H, Hp).astype(bf)           # (D, 4Hp)
    wih_b = _pad_gate_cols(params["wih_b_t"], H, Hp).astype(bf)
    b_f = _pad_gate_cols(params["b_f"], H, Hp).astype(jnp.float32)        # (1, 4Hp)
    b_b = _pad_gate_cols(params["b_b"], H, Hp).astype(jnp.float32)
    whh_f = _pad_gate_cols(jnp.pad(params["whh_f_t"], ((0, Hp - H), (0, 0))),
                           H, Hp).astype(bf)                              # (Hp, 4Hp)
    whh_b = _pad_gate_cols(jnp.pad(params["whh_b_t"], ((0, Hp - H), (0, 0))),
                           H, Hp).astype(bf)
    wmlp_f = jnp.zeros((Hp, MLPp), jnp.float32).at[:H, :mlp_dim].set(
        params["wmlp_t"][:H]).astype(bf)                                  # (Hp, MLPp)
    wmlp_b = jnp.zeros((Hp, MLPp), jnp.float32).at[:H, :mlp_dim].set(
        params["wmlp_t"][H:]).astype(bf)
    b_mlp = jnp.zeros((1, MLPp), jnp.float32).at[:, :mlp_dim].set(params["b_mlp"])
    wcls = jnp.zeros((MLPp, NCp), jnp.float32).at[:mlp_dim, :n_class].set(
        params["wcls_t"]).astype(bf)                                      # (MLPp, NCp)
    b_cls = jnp.zeros((1, NCp), jnp.float32).at[:, :n_class].set(params["b_cls"])

    weights = (wih_f, wih_b, b_f, b_b, whh_f, whh_b,
               wmlp_f, wmlp_b, b_mlp, wcls, b_cls)
    weight_bytes = sum(int(w.size) * w.dtype.itemsize for w in weights)

    # resident per-row sequence lengths (replaces the streamed per-step mask)
    lens = jnp.zeros((Bp, 1), jnp.int32).at[:B, 0].set(
        seq_lengths.astype(jnp.int32))

    # ---- chunk_t from the VMEM budget (instead of a fixed 128) ----------------
    budget = _vmem_budget_bytes()
    per_t = Bp * (2 * 2 * D * 2          # xf + xb streams, double-buffered, bf16
                  + 2 * 4 * Hp * 2)      # zf + zb scratch, bf16
    fixed = (2 * weight_bytes            # conservative: weights double-buffered
             + 6 * Bp * Hp * 4           # h/c/acc state, both directions, f32
             + 2 * Bp * NCp * 4          # output double buffer
             + 2 * Bp * 4)               # lengths
    if chunk_t is None:
        ct_max = int((int(budget * 0.8) - fixed) // per_t)
        ct_max = max(8, min(ct_max, 1024, _round_up(T, 8)))
        ct_max = max(8, (ct_max // 8) * 8)
        n_even = -(-T // ct_max)                         # spread T evenly
        chunk_t = min(ct_max, _round_up(-(-T // n_even), 8))
    chunk_t = max(1, int(chunk_t))
    Tp = _round_up(T, chunk_t)
    n_chunks = Tp // chunk_t

    # ---- pack activations: time-major, flattened (Tp*Bp, D), bf16 -------------
    x = jnp.transpose(emb, (1, 0, 2)).astype(bf)          # (T, B, D)
    x = jnp.pad(x, ((0, Tp - T), (0, Bp - B), (0, 0)))
    x2 = x.reshape(Tp * Bp, D)

    est = per_t * chunk_t + fixed
    vmem_limit = int(min(budget, max(int(est * 1.5), 24 * 2 ** 20)))

    scratch_shapes = [
        pltpu.VMEM((chunk_t * Bp, 4 * Hp), jnp.bfloat16),  # zf (hoisted fwd proj)
        pltpu.VMEM((chunk_t * Bp, 4 * Hp), jnp.bfloat16),  # zb (hoisted bwd proj)
        pltpu.VMEM((Bp, Hp), jnp.float32),                 # h   fwd
        pltpu.VMEM((Bp, Hp), jnp.float32),                 # c   fwd
        pltpu.VMEM((Bp, Hp), jnp.float32),                 # h   bwd
        pltpu.VMEM((Bp, Hp), jnp.float32),                 # c   bwd
        pltpu.VMEM((Bp, Hp), jnp.float32),                 # acc fwd
        pltpu.VMEM((Bp, Hp), jnp.float32),                 # acc bwd
    ]

    def build(single_buffer_weights):
        def const_spec(shape):
            if single_buffer_weights:
                return pl.BlockSpec(shape, lambda i: (0, 0),
                                    pipeline_mode=pl.Buffered(buffer_count=1))
            return pl.BlockSpec(shape, lambda i: (0, 0))

        in_specs = [
            const_spec(lens.shape),                                    # lengths
            pl.BlockSpec((chunk_t * Bp, D), lambda i: (i, 0)),         # x, fwd order
            pl.BlockSpec((chunk_t * Bp, D),
                         lambda i: (n_chunks - 1 - i, 0)),             # x, bwd order
        ] + [const_spec(w.shape) for w in weights]

        return pl.pallas_call(
            _bilstm_avg_kernel,
            out_shape=jax.ShapeDtypeStruct((Bp, NCp), jnp.float32),
            grid_spec=pltpu.PrefetchScalarGridSpec(
                num_scalar_prefetch=0,
                grid=(n_chunks,),
                in_specs=in_specs,
                out_specs=pl.BlockSpec((Bp, NCp), lambda i: (0, 0)),
                scratch_shapes=scratch_shapes),
            compiler_params=pltpu.CompilerParams(
                dimension_semantics=("arbitrary",),   # state carries across chunks
                vmem_limit_bytes=vmem_limit),
        )

    args = (lens, x2, x2) + weights
    # TODO(synk): on v7x, split the two LSTM directions across the two
    # TensorCores (leading parallel grid axis / pl.core_map) and combine the
    # pooled halves in a tiny epilogue; kept single-core fused here so v5e/v6e
    # (1 TC) retain per-step fwd/bwd ILP.
    try:
        out = jax.block_until_ready(build(True)(*args))
    except Exception:
        # pl.Buffered(1) single-buffering unavailable -> default double-buffering
        out = build(False)(*args)

    return out[:B, :n_class]


# ----------------------------- parameter init --------------------------------
def init_params(key, vocab_size, word_dim, lstm_dim, mlp_dim, n_class):
    ks = jax.random.split(key, 16)
    u = lambda k, shape, bound: jax.random.uniform(k, shape, jnp.float32,
                                                   -bound, bound)
    kl = 1.0 / float(jnp.sqrt(jnp.float32(lstm_dim)))
    km = 1.0 / float(jnp.sqrt(jnp.float32(2 * lstm_dim)))
    kc = 1.0 / float(jnp.sqrt(jnp.float32(mlp_dim)))

    embedding = jax.random.normal(ks[0], (vocab_size, word_dim), jnp.float32)

    wih_f = u(ks[1], (4 * lstm_dim, word_dim), kl)
    whh_f = u(ks[2], (4 * lstm_dim, lstm_dim), kl)
    b_f = u(ks[3], (4 * lstm_dim,), kl) + u(ks[4], (4 * lstm_dim,), kl)
    wih_b = u(ks[5], (4 * lstm_dim, word_dim), kl)
    whh_b = u(ks[6], (4 * lstm_dim, lstm_dim), kl)
    b_b = u(ks[7], (4 * lstm_dim,), kl) + u(ks[8], (4 * lstm_dim,), kl)

    wmlp = u(ks[9], (mlp_dim, 2 * lstm_dim), km)
    bmlp = u(ks[10], (mlp_dim,), km)
    wcls = u(ks[11], (n_class, mlp_dim), kc)
    bcls = u(ks[12], (n_class,), kc)

    return dict(
        embedding=embedding,
        wih_f_t=wih_f.T, whh_f_t=whh_f.T, b_f=b_f[None, :],
        wih_b_t=wih_b.T, whh_b_t=whh_b.T, b_b=b_b[None, :],
        wmlp_t=wmlp.T, b_mlp=bmlp[None, :],
        wcls_t=wcls.T, b_cls=bcls[None, :],
    )


# ----------------------------- pure-JAX f32 reference ------------------------
def reference_forward(word_inputs, mask, params, lstm_dim):
    emb = params["embedding"][word_inputs].astype(jnp.float32)   # (B, T, D)
    B, T, _ = emb.shape
    H = lstm_dim
    m = mask.astype(jnp.float32)

    def cell(x_t, h, c, wih_t, whh_t, b):
        z = x_t @ wih_t + h @ whh_t + b
        i = jax.nn.sigmoid(z[:, :H]); f = jax.nn.sigmoid(z[:, H:2 * H])
        g = jnp.tanh(z[:, 2 * H:3 * H]); o = jax.nn.sigmoid(z[:, 3 * H:])
        c_new = f * c + i * g
        return o * jnp.tanh(c_new), c_new

    h = c = jnp.zeros((B, H), jnp.float32); acc_f = jnp.zeros((B, H), jnp.float32)
    for t in range(T):
        hn, cn = cell(emb[:, t], h, c, params["wih_f_t"], params["whh_f_t"],
                      params["b_f"])
        v = (m[:, t:t + 1] > 0)
        h = jnp.where(v, hn, h); c = jnp.where(v, cn, c)
        acc_f = acc_f + m[:, t:t + 1] * h

    h = c = jnp.zeros((B, H), jnp.float32); acc_b = jnp.zeros((B, H), jnp.float32)
    for t in range(T - 1, -1, -1):
        hn, cn = cell(emb[:, t], h, c, params["wih_b_t"], params["whh_b_t"],
                      params["b_b"])
        v = (m[:, t:t + 1] > 0)
        h = jnp.where(v, hn, h); c = jnp.where(v, cn, c)
        acc_b = acc_b + m[:, t:t + 1] * h

    sent = jnp.concatenate([acc_f, acc_b], axis=1) / jnp.sum(m, 1, keepdims=True)
    sent = sent @ params["wmlp_t"] + params["b_mlp"]
    return sent @ params["wcls_t"] + params["b_cls"]


# ----------------------------- main -------------------------------------------
if __name__ == "__main__":
    vocab_size, word_dim, lstm_dim, mlp_dim, n_class = 100, 16, 32, 32, 4
    B, T = 2, 8

    key = jax.random.PRNGKey(0)
    k_param, k_tok = jax.random.split(key)
    params = init_params(k_param, vocab_size, word_dim, lstm_dim, mlp_dim, n_class)

    word_inputs = jax.random.randint(k_tok, (B, T), 0, vocab_size, jnp.int32)
    seq_lengths = jnp.array([8, 5], jnp.int32)
    mask = (jnp.arange(T)[None, :] < seq_lengths[:, None]).astype(jnp.float32)

    ref = reference_forward(word_inputs, mask, params, lstm_dim)

    # chunk_t=4 -> grid of 2 T-chunks, exercising persistent-state streaming.
    logits = bilstm_average_forward(word_inputs, mask, seq_lengths, params,
                                    chunk_t=4)
    logits = jax.block_until_ready(logits)
    assert logits.shape == (B, n_class)
    # bf16 matmuls / bf16 z-scratch vs f32 reference -> loose tolerance
    assert jnp.allclose(logits, ref, rtol=3e-2, atol=3e-2), (logits, ref)

    # default path: chunk_t sized from the device VMEM budget (single chunk here)
    logits2 = jax.block_until_ready(
        bilstm_average_forward(word_inputs, mask, seq_lengths, params))
    assert jnp.allclose(logits2, ref, rtol=3e-2, atol=3e-2), (logits2, ref)

    print("KERNEL_OK")
</pallas_src>

<mosaic_0001>
module attributes {stable_mosaic.version = 11 : i64} {
  func.func @_bilstm_avg_kernel(%arg0: i32, %arg1: memref<16x1xi32, #tpu.memory_space<vmem>>, %arg2: memref<64x16xbf16, #tpu.memory_space<vmem>>, %arg3: memref<64x16xbf16, #tpu.memory_space<vmem>>, %arg4: memref<16x512xbf16, #tpu.memory_space<vmem>>, %arg5: memref<16x512xbf16, #tpu.memory_space<vmem>>, %arg6: memref<1x512xf32, #tpu.memory_space<vmem>>, %arg7: memref<1x512xf32, #tpu.memory_space<vmem>>, %arg8: memref<128x512xbf16, #tpu.memory_space<vmem>>, %arg9: memref<128x512xbf16, #tpu.memory_space<vmem>>, %arg10: memref<128x128xbf16, #tpu.memory_space<vmem>>, %arg11: memref<128x128xbf16, #tpu.memory_space<vmem>>, %arg12: memref<1x128xf32, #tpu.memory_space<vmem>>, %arg13: memref<128x128xbf16, #tpu.memory_space<vmem>>, %arg14: memref<1x128xf32, #tpu.memory_space<vmem>>, %arg15: memref<16x128xf32, #tpu.memory_space<vmem>>, %arg16: memref<64x512xbf16, #tpu.memory_space<vmem>>, %arg17: memref<64x512xbf16, #tpu.memory_space<vmem>>, %arg18: memref<16x128xf32, #tpu.memory_space<vmem>>, %arg19: memref<16x128xf32, #tpu.memory_space<vmem>>, %arg20: memref<16x128xf32, #tpu.memory_space<vmem>>, %arg21: memref<16x128xf32, #tpu.memory_space<vmem>>, %arg22: memref<16x128xf32, #tpu.memory_space<vmem>>, %arg23: memref<16x128xf32, #tpu.memory_space<vmem>>) attributes {dimension_semantics = [#tpu.dimension_semantics<arbitrary>], iteration_bounds = array<i64: 2>, scalar_prefetch = 0 : i64, scratch_operands = 8 : i64, tpu.core_type = #tpu.core_type<tc>, window_params = [{pipeline_mode = #tpu.pipeline_mode<synchronous>, transform_indices = @transform_0, window_bounds = array<i64: 16, 1>}, {transform_indices = @transform_1, window_bounds = array<i64: 64, 16>}, {transform_indices = @transform_2, window_bounds = array<i64: 64, 16>}, {pipeline_mode = #tpu.pipeline_mode<synchronous>, transform_indices = @transform_3, window_bounds = array<i64: 16, 512>}, {pipeline_mode = #tpu.pipeline_mode<synchronous>, transform_indices = @transform_4, window_bounds = array<i64: 16, 512>}, {pipeline_mode = #tpu.pipeline_mode<synchronous>, transform_indices = @transform_5, window_bounds = array<i64: 1, 512>}, {pipeline_mode = #tpu.pipeline_mode<synchronous>, transform_indices = @transform_6, window_bounds = array<i64: 1, 512>}, {pipeline_mode = #tpu.pipeline_mode<synchronous>, transform_indices = @transform_7, window_bounds = array<i64: 128, 512>}, {pipeline_mode = #tpu.pipeline_mode<synchronous>, transform_indices = @transform_8, window_bounds = array<i64: 128, 512>}, {pipeline_mode = #tpu.pipeline_mode<synchronous>, transform_indices = @transform_9, window_bounds = array<i64: 128, 128>}, {pipeline_mode = #tpu.pipeline_mode<synchronous>, transform_indices = @transform_10, window_bounds = array<i64: 128, 128>}, {pipeline_mode = #tpu.pipeline_mode<synchronous>, transform_indices = @transform_11, window_bounds = array<i64: 1, 128>}, {pipeline_mode = #tpu.pipeline_mode<synchronous>, transform_indices = @transform_12, window_bounds = array<i64: 128, 128>}, {pipeline_mode = #tpu.pipeline_mode<synchronous>, transform_indices = @transform_13, window_bounds = array<i64: 1, 128>}, {pipeline_mode = #tpu.pipeline_mode<synchronous>, transform_indices = @transform_14, window_bounds = array<i64: 16, 128>}]} {
    %c0_i32 = arith.constant 0 : i32
    %0 = arith.cmpi eq, %arg0, %c0_i32 : i32
    %1 = arith.extui %0 : i1 to i32
    %c0_i32_0 = arith.constant 0 : i32
    %2 = arith.cmpi ne, %1, %c0_i32_0 : i32
    scf.if %2 {
      %cst_40 = arith.constant 0.000000e+00 : f32
      %34 = vector.broadcast %cst_40 : f32 to vector<16x128xf32>
      %c0_41 = arith.constant 0 : index
      %c0_42 = arith.constant 0 : index
      %35 = vector.load %arg18[%c0_41, %c0_42] : memref<16x128xf32, #tpu.memory_space<vmem>>, vector<16x128xf32>
      tpu.vector_store %arg18[%c0_41, %c0_42], %34 {strides = array<i32>} : memref<16x128xf32, #tpu.memory_space<vmem>>, vector<16x128xf32>,
      %cst_43 = arith.constant 0.000000e+00 : f32
      %36 = vector.broadcast %cst_43 : f32 to vector<16x128xf32>
      %c0_44 = arith.constant 0 : index
      %c0_45 = arith.constant 0 : index
      %37 = vector.load %arg19[%c0_44, %c0_45] : memref<16x128xf32, #tpu.memory_space<vmem>>, vector<16x128xf32>
      tpu.vector_store %arg19[%c0_44, %c0_45], %36 {strides = array<i32>} : memref<16x128xf32, #tpu.memory_space<vmem>>, vector<16x128xf32>,
      %cst_46 = arith.constant 0.000000e+00 : f32
      %38 = vector.broadcast %cst_46 : f32 to vector<16x128xf32>
      %c0_47 = arith.constant 0 : index
      %c0_48 = arith.constant 0 : index
      %39 = vector.load %arg20[%c0_47, %c0_48] : memref<16x128xf32, #tpu.memory_space<vmem>>, vector<16x128xf32>
      tpu.vector_store %arg20[%c0_47, %c0_48], %38 {strides = array<i32>} : memref<16x128xf32, #tpu.memory_space<vmem>>, vector<16x128xf32>,
      %cst_49 = arith.constant 0.000000e+00 : f32
      %40 = vector.broadcast %cst_49 : f32 to vector<16x128xf32>
      %c0_50 = arith.constant 0 : index
      %c0_51 = arith.constant 0 : index
      %41 = vector.load %arg21[%c0_50, %c0_51] : memref<16x128xf32, #tpu.memory_space<vmem>>, vector<16x128xf32>
      tpu.vector_store %arg21[%c0_50, %c0_51], %40 {strides = array<i32>} : memref<16x128xf32, #tpu.memory_space<vmem>>, vector<16x128xf32>,
      %cst_52 = arith.constant 0.000000e+00 : f32
      %42 = vector.broadcast %cst_52 : f32 to vector<16x128xf32>
      %c0_53 = arith.constant 0 : index
      %c0_54 = arith.constant 0 : index
      %43 = vector.load %arg22[%c0_53, %c0_54] : memref<16x128xf32, #tpu.memory_space<vmem>>, vector<16x128xf32>
      tpu.vector_store %arg22[%c0_53, %c0_54], %42 {strides = array<i32>} : memref<16x128xf32, #tpu.memory_space<vmem>>, vector<16x128xf32>,
      %cst_55 = arith.constant 0.000000e+00 : f32
      %44 = vector.broadcast %cst_55 : f32 to vector<16x128xf32>
      %c0_56 = arith.constant 0 : index
      %c0_57 = arith.constant 0 : index
      %45 = vector.load %arg23[%c0_56, %c0_57] : memref<16x128xf32, #tpu.memory_space<vmem>>, vector<16x128xf32>
      tpu.vector_store %arg23[%c0_56, %c0_57], %44 {strides = array<i32>} : memref<16x128xf32, #tpu.memory_space<vmem>>, vector<16x128xf32>,
    } else {
    }
    %c0 = arith.constant 0 : index
    %c0_1 = arith.constant 0 : index
    %3 = vector.load %arg2[%c0, %c0_1] : memref<64x16xbf16, #tpu.memory_space<vmem>>, vector<64x16xbf16>
    %c0_2 = arith.constant 0 : index
    %c0_3 = arith.constant 0 : index
    %4 = vector.load %arg4[%c0_2, %c0_3] : memref<16x512xbf16, #tpu.memory_space<vmem>>, vector<16x512xbf16>
    %cst = arith.constant dense<0.000000e+00> : vector<64x512xf32>
    %5 = tpu.matmul %3, %4, %cst {dimension_numbers = #tpu.dot_dimension_numbers<[1], [0], [0], [1], [0, 0, 1, 1], [], []>} : vector<64x16xbf16>, vector<16x512xbf16>, vector<64x512xf32> -> vector<64x512xf32>
    %c0_4 = arith.constant 0 : index
    %c0_5 = arith.constant 0 : index
    %6 = vector.load %arg6[%c0_4, %c0_5] : memref<1x512xf32, #tpu.memory_space<vmem>>, vector<1x512xf32>
    %7 = vector.broadcast %6 : vector<1x512xf32> to vector<64x512xf32>
    %8 = arith.addf %5, %7 : vector<64x512xf32>
    %9 = arith.truncf %8 : vector<64x512xf32> to vector<64x512xbf16>
    %c0_6 = arith.constant 0 : index
    %c0_7 = arith.constant 0 : index
    %10 = vector.load %arg16[%c0_6, %c0_7] : memref<64x512xbf16, #tpu.memory_space<vmem>>, vector<64x512xbf16>
    tpu.vector_store %arg16[%c0_6, %c0_7], %9 {strides = array<i32>} : memref<64x512xbf16, #tpu.memory_space<vmem>>, vector<64x512xbf16>,
    %c0_8 = arith.constant 0 : index
    %c0_9 = arith.constant 0 : index
    %11 = vector.load %arg3[%c0_8, %c0_9] : memref<64x16xbf16, #tpu.memory_space<vmem>>, vector<64x16xbf16>
    %c0_10 = arith.constant 0 : index
    %c0_11 = arith.constant 0 : index
    %12 = vector.load %arg5[%c0_10, %c0_11] : memref<16x512xbf16, #tpu.memory_space<vmem>>, vector<16x512xbf16>
    %cst_12 = arith.constant dense<0.000000e+00> : vector<64x512xf32>
    %13 = tpu.matmul %11, %12, %cst_12 {dimension_numbers = #tpu.dot_dimension_numbers<[1], [0], [0], [1], [0, 0, 1, 1], [], []>} : vector<64x16xbf16>, vector<16x512xbf16>, vector<64x512xf32> -> vector<64x512xf32>
    %c0_13 = arith.constant 0 : index
    %c0_14 = arith.constant 0 : index
    %14 = vector.load %arg7[%c0_13, %c0_14] : memref<1x512xf32, #tpu.memory_space<vmem>>, vector<1x512xf32>
    %15 = vector.broadcast %14 : vector<1x512xf32> to vector<64x512xf32>
    %16 = arith.addf %13, %15 : vector<64x512xf32>
    %17 = arith.truncf %16 : vector<64x512xf32> to vector<64x512xbf16>
    %c0_15 = arith.constant 0 : index
    %c0_16 = arith.constant 0 : index
    %18 = vector.load %arg17[%c0_15, %c0_16] : memref<64x512xbf16, #tpu.memory_space<vmem>>, vector<64x512xbf16>
    tpu.vector_store %arg17[%c0_15, %c0_16], %17 {strides = array<i32>} : memref<64x512xbf16, #tpu.memory_space<vmem>>, vector<64x512xbf16>,
    %c0_17 = arith.constant 0 : index
    %c0_18 = arith.constant 0 : index
    %19 = vector.load %arg1[%c0_17, %c0_18] : memref<16x1xi32, #tpu.memory_space<vmem>>, vector<16x1xi32>
    %c4_i32 = arith.constant 4 : i32
    %20 = arith.muli %arg0, %c4_i32 : i32
    %c0_19 = arith.constant 0 : index
    %c0_20 = arith.constant 0 : index
    %21 = vector.load %arg18[%c0_19, %c0_20] : memref<16x128xf32, #tpu.memory_space<vmem>>, vector<16x128xf32>
    %c0_21 = arith.constant 0 : index
    %c0_22 = arith.constant 0 : index
    %22 = vector.load %arg19[%c0_21, %c0_22] : memref<16x128xf32, #tpu.memory_space<vmem>>, vector<16x128xf32>
    %c0_23 = arith.constant 0 : index
    %c0_24 = arith.constant 0 : index
    %23 = vector.load %arg20[%c0_23, %c0_24] : memref<16x128xf32, #tpu.memory_space<vmem>>, vector<16x128xf32>
    %c0_25 = arith.constant 0 : index
    %c0_26 = arith.constant 0 : index
    %24 = vector.load %arg21[%c0_25, %c0_26] : memref<16x128xf32, #tpu.memory_space<vmem>>, vector<16x128xf32>
    %c0_i32_27 = arith.constant 0 : i32
    %c4_i32_28 = arith.constant 4 : i32
    %25 = arith.addi %c0_i32_27, %c4_i32_28 : i32
    %c1_i32 = arith.constant 1 : i32
    %26:4 = scf.for %arg24 = %c0_i32_27 to %25 step %c1_i32 iter_args(%arg25 = %21, %arg26 = %22, %arg27 = %23, %arg28 = %24) -> (vector<16x128xf32>, vector<16x128xf32>, vector<16x128xf32>, vector<16x128xf32>)  : i32 {
      %34 = arith.addi %20, %arg24 : i32
      %35 = arith.truncf %arg25 : vector<16x128xf32> to vector<16x128xbf16>
      %c0_40 = arith.constant 0 : index
      %c0_41 = arith.constant 0 : index
      %36 = vector.load %arg8[%c0_40, %c0_41] : memref<128x512xbf16, #tpu.memory_space<vmem>>, vector<128x512xbf16>
      %cst_42 = arith.constant dense<0.000000e+00> : vector<16x512xf32>
      %37 = tpu.matmul %35, %36, %cst_42 {dimension_numbers = #tpu.dot_dimension_numbers<[1], [0], [0], [1], [0, 0, 1, 1], [], []>} : vector<16x128xbf16>, vector<128x512xbf16>, vector<16x512xf32> -> vector<16x512xf32>
      %c16_i32 = arith.constant 16 : i32
      %38 = arith.muli %arg24, %c16_i32 : i32
      %39 = tpu.assume_multiple %38, 16 : i32
      %40 = arith.index_cast %39 : i32 to index
      %c0_43 = arith.constant 0 : index
      %41 = vector.load %arg16[%40, %c0_43] : memref<64x512xbf16, #tpu.memory_space<vmem>>, vector<16x512xbf16>
      %42 = arith.extf %41 : vector<16x512xbf16> to vector<16x512xf32>
      %43 = arith.addf %37, %42 : vector<16x512xf32>
      %44 = arith.truncf %arg27 : vector<16x128xf32> to vector<16x128xbf16>
      %c0_44 = arith.constant 0 : index
      %c0_45 = arith.constant 0 : index
      %45 = vector.load %arg9[%c0_44, %c0_45] : memref<128x512xbf16, #tpu.memory_space<vmem>>, vector<128x512xbf16>
      %cst_46 = arith.constant dense<0.000000e+00> : vector<16x512xf32>
      %46 = tpu.matmul %44, %45, %cst_46 {dimension_numbers = #tpu.dot_dimension_numbers<[1], [0], [0], [1], [0, 0, 1, 1], [], []>} : vector<16x128xbf16>, vector<128x512xbf16>, vector<16x512xf32> -> vector<16x512xf32>
      %c3_i32 = arith.constant 3 : i32
      %47 = arith.subi %c3_i32, %arg24 : i32
      %c16_i32_47 = arith.constant 16 : i32
      %48 = arith.muli %47, %c16_i32_47 : i32
      %49 = tpu.assume_multiple %48, 16 : i32
      %50 = arith.index_cast %49 : i32 to index
      %c0_48 = arith.constant 0 : index
      %51 = vector.load %arg17[%50, %c0_48] : memref<64x512xbf16, #tpu.memory_space<vmem>>, vector<16x512xbf16>
      %52 = arith.extf %51 : vector<16x512xbf16> to vector<16x512xf32>
      %53 = arith.addf %46, %52 : vector<16x512xf32>
      %54 = vector.extract_strided_slice %43 {offsets = [0, 0], sizes = [16, 128], strides = [1, 1]} : vector<16x512xf32> to vector<16x128xf32>
      %55 = arith.negf %54 : vector<16x128xf32>
      %56 = math.exp %55 : vector<16x128xf32>
      %cst_49 = arith.constant 1.000000e+00 : f32
      %57 = vector.broadcast %cst_49 : f32 to vector<16x128xf32>
      %58 = arith.addf %57, %56 : vector<16x128xf32>
      %59 = arith.divf %57, %58 : vector<16x128xf32>
      %60 = vector.extract_strided_slice %43 {offsets = [0, 128], sizes = [16, 128], strides = [1, 1]} : vector<16x512xf32> to vector<16x128xf32>
      %61 = arith.negf %60 : vector<16x128xf32>
      %62 = math.exp %61 : vector<16x128xf32>
      %cst_50 = arith.constant 1.000000e+00 : f32
      %63 = vector.broadcast %cst_50 : f32 to vector<16x128xf32>
      %64 = arith.addf %63, %62 : vector<16x128xf32>
      %65 = arith.divf %63, %64 : vector<16x128xf32>
      %66 = vector.extract_strided_slice %43 {offsets = [0, 256], sizes = [16, 128], strides = [1, 1]} : vector<16x512xf32> to vector<16x128xf32>
      %67 = math.tanh %66 : vector<16x128xf32>
      %68 = vector.extract_strided_slice %43 {offsets = [0, 384], sizes = [16, 128], strides = [1, 1]} : vector<16x512xf32> to vector<16x128xf32>
      %69 = arith.negf %68 : vector<16x128xf32>
      %70 = math.exp %69 : vector<16x128xf32>
      %cst_51 = arith.constant 1.000000e+00 : f32
      %71 = vector.broadcast %cst_51 : f32 to vector<16x128xf32>
      %72 = arith.addf %71, %70 : vector<16x128xf32>
      %73 = arith.divf %71, %72 : vector<16x128xf32>
      %74 = arith.mulf %65, %arg26 : vector<16x128xf32>
      %75 = arith.mulf %59, %67 : vector<16x128xf32>
      %76 = arith.addf %74, %75 : vector<16x128xf32>
      %77 = math.tanh %76 : vector<16x128xf32>
      %78 = arith.mulf %73, %77 : vector<16x128xf32>
      %79 = vector.extract_strided_slice %53 {offsets = [0, 0], sizes = [16, 128], strides = [1, 1]} : vector<16x512xf32> to vector<16x128xf32>
      %80 = arith.negf %79 : vector<16x128xf32>
      %81 = math.exp %80 : vector<16x128xf32>
      %cst_52 = arith.constant 1.000000e+00 : f32
      %82 = vector.broadcast %cst_52 : f32 to vector<16x128xf32>
      %83 = arith.addf %82, %81 : vector<16x128xf32>
      %84 = arith.divf %82, %83 : vector<16x128xf32>
      %85 = vector.extract_strided_slice %53 {offsets = [0, 128], sizes = [16, 128], strides = [1, 1]} : vector<16x512xf32> to vector<16x128xf32>
      %86 = arith.negf %85 : vector<16x128xf32>
      %87 = math.exp %86 : vector<16x128xf32>
      %cst_53 = arith.constant 1.000000e+00 : f32
      %88 = vector.broadcast %cst_53 : f32 to vector<16x128xf32>
      %89 = arith.addf %88, %87 : vector<16x128xf32>
      %90 = arith.divf %88, %89 : vector<16x128xf32>
      %91 = vector.extract_strided_slice %53 {offsets = [0, 256], sizes = [16, 128], strides = [1, 1]} : vector<16x512xf32> to vector<16x128xf32>
      %92 = math.tanh %91 : vector<16x128xf32>
      %93 = vector.extract_strided_slice %53 {offsets = [0, 384], sizes = [16, 128], strides = [1, 1]} : vector<16x512xf32> to vector<16x128xf32>
      %94 = arith.negf %93 : vector<16x128xf32>
      %95 = math.exp %94 : vector<16x128xf32>
      %cst_54 = arith.constant 1.000000e+00 : f32
      %96 = vector.broadcast %cst_54 : f32 to vector<16x128xf32>
      %97 = arith.addf %96, %95 : vector<16x128xf32>
      %98 = arith.divf %96, %97 : vector<16x128xf32>
      %99 = arith.mulf %90, %arg28 : vector<16x128xf32>
      %100 = arith.mulf %84, %92 : vector<16x128xf32>
      %101 = arith.addf %99, %100 : vector<16x128xf32>
      %102 = math.tanh %101 : vector<16x128xf32>
      %103 = arith.mulf %98, %102 : vector<16x128xf32>
      %104 = vector.broadcast %34 : i32 to vector<16x1xi32>
      %105 = arith.cmpi sgt, %19, %104 : vector<16x1xi32>
      %c7_i32 = arith.constant 7 : i32
      %106 = arith.subi %c7_i32, %34 : i32
      %107 = vector.broadcast %106 : i32 to vector<16x1xi32>
      %108 = arith.cmpi sgt, %19, %107 : vector<16x1xi32>
      %109 = vector.shape_cast %105 : vector<16x1xi1> to vector<16x1xi1>
      %110 = vector.broadcast %109 : vector<16x1xi1> to vector<16x128xi1>
      %111 = arith.select %110, %78, %arg25 : vector<16x128xi1>, vector<16x128xf32>
      %112 = vector.shape_cast %105 : vector<16x1xi1> to vector<16x1xi1>
      %113 = vector.broadcast %112 : vector<16x1xi1> to vector<16x128xi1>
      %114 = arith.select %113, %76, %arg26 : vector<16x128xi1>, vector<16x128xf32>
      %115 = vector.shape_cast %108 : vector<16x1xi1> to vector<16x1xi1>
      %116 = vector.broadcast %115 : vector<16x1xi1> to vector<16x128xi1>
      %117 = arith.select %116, %103, %arg27 : vector<16x128xi1>, vector<16x128xf32>
      %118 = vector.shape_cast %108 : vector<16x1xi1> to vector<16x1xi1>
      %119 = vector.broadcast %118 : vector<16x1xi1> to vector<16x128xi1>
      %120 = arith.select %119, %101, %arg28 : vector<16x128xi1>, vector<16x128xf32>
      %c0_55 = arith.constant 0 : index
      %c0_56 = arith.constant 0 : index
      %121 = vector.load %arg22[%c0_55, %c0_56] : memref<16x128xf32, #tpu.memory_space<vmem>>, vector<16x128xf32>
      %cst_57 = arith.constant 0.000000e+00 : f32
      %122 = vector.shape_cast %105 : vector<16x1xi1> to vector<16x1xi1>
      %123 = vector.broadcast %122 : vector<16x1xi1> to vector<16x128xi1>
      %124 = vector.broadcast %cst_57 : f32 to vector<16x128xf32>
      %125 = arith.select %123, %111, %124 : vector<16x128xi1>, vector<16x128xf32>
      %126 = arith.addf %121, %125 : vector<16x128xf32>
      %c0_58 = arith.constant 0 : index
      %c0_59 = arith.constant 0 : index
      %127 = vector.load %arg22[%c0_58, %c0_59] : memref<16x128xf32, #tpu.memory_space<vmem>>, vector<16x128xf32>
      tpu.vector_store %arg22[%c0_58, %c0_59], %126 {strides = array<i32>} : memref<16x128xf32, #tpu.memory_space<vmem>>, vector<16x128xf32>,
      %c0_60 = arith.constant 0 : index
      %c0_61 = arith.constant 0 : index
      %128 = vector.load %arg23[%c0_60, %c0_61] : memref<16x128xf32, #tpu.memory_space<vmem>>, vector<16x128xf32>
      %cst_62 = arith.constant 0.000000e+00 : f32
      %129 = vector.shape_cast %108 : vector<16x1xi1> to vector<16x1xi1>
      %130 = vector.broadcast %129 : vector<16x1xi1> to vector<16x128xi1>
      %131 = vector.broadcast %cst_62 : f32 to vector<16x128xf32>
      %132 = arith.select %130, %117, %131 : vector<16x128xi1>, vector<16x128xf32>
      %133 = arith.addf %128, %132 : vector<16x128xf32>
      %c0_63 = arith.constant 0 : index
      %c0_64 = arith.constant 0 : index
      %134 = vector.load %arg23[%c0_63, %c0_64] : memref<16x128xf32, #tpu.memory_space<vmem>>, vector<16x128xf32>
      tpu.vector_store %arg23[%c0_63, %c0_64], %133 {strides = array<i32>} : memref<16x128xf32, #tpu.memory_space<vmem>>, vector<16x128xf32>,
      scf.yield %111, %114, %117, %120 : vector<16x128xf32>, vector<16x128xf32>, vector<16x128xf32>, vector<16x128xf32>
    }
    %c4_i32_29 = arith.constant 4 : i32
    %c0_30 = arith.constant 0 : index
    %c0_31 = arith.constant 0 : index
    %27 = vector.load %arg18[%c0_30, %c0_31] : memref<16x128xf32, #tpu.memory_space<vmem>>, vector<16x128xf32>
    tpu.vector_store %arg18[%c0_30, %c0_31], %26#0 {strides = array<i32>} : memref<16x128xf32, #tpu.memory_space<vmem>>, vector<16x128xf32>,
    %c0_32 = arith.constant 0 : index
    %c0_33 = arith.constant 0 : index
    %28 = vector.load %arg19[%c0_32, %c0_33] : memref<16x128xf32, #tpu.memory_space<vmem>>, vector<16x128xf32>
    tpu.vector_store %arg19[%c0_32, %c0_33], %26#1 {strides = array<i32>} : memref<16x128xf32, #tpu.memory_space<vmem>>, vector<16x128xf32>,
    %c0_34 = arith.constant 0 : index
    %c0_35 = arith.constant 0 : index
    %29 = vector.load %arg20[%c0_34, %c0_35] : memref<16x128xf32, #tpu.memory_space<vmem>>, vector<16x128xf32>
    tpu.vector_store %arg20[%c0_34, %c0_35], %26#2 {strides = array<i32>} : memref<16x128xf32, #tpu.memory_space<vmem>>, vector<16x128xf32>,
    %c0_36 = arith.constant 0 : index
    %c0_37 = arith.constant 0 : index
    %30 = vector.load %arg21[%c0_36, %c0_37] : memref<16x128xf32, #tpu.memory_space<vmem>>, vector<16x128xf32>
    tpu.vector_store %arg21[%c0_36, %c0_37], %26#3 {strides = array<i32>} : memref<16x128xf32, #tpu.memory_space<vmem>>, vector<16x128xf32>,
    %c1_i32_38 = arith.constant 1 : i32
    %31 = arith.cmpi eq, %arg0, %c1_i32_38 : i32
    %32 = arith.extui %31 : i1 to i32
    %c0_i32_39 = arith.constant 0 : i32
    %33 = arith.cmpi ne, %32, %c0_i32_39 : i32
    scf.if %33 {
      %c1_i32_40 = arith.constant 1 : i32
      %34 = vector.broadcast %c1_i32_40 : i32 to vector<16x1xi32>
      %35 = arith.maxsi %19, %34 : vector<16x1xi32>
      %36 = arith.sitofp %35 : vector<16x1xi32> to vector<16x1xf32>
      %cst_41 = arith.constant 1.000000e+00 : f32
      %37 = vector.broadcast %cst_41 : f32 to vector<16x1xf32>
      %38 = arith.divf %37, %36 : vector<16x1xf32>
      %c0_42 = arith.constant 0 : index
      %c0_43 = arith.constant 0 : index
      %39 = vector.load %arg22[%c0_42, %c0_43] : memref<16x128xf32, #tpu.memory_space<vmem>>, vector<16x128xf32>
      %40 = vector.broadcast %38 : vector<16x1xf32> to vector<16x128xf32>
      %41 = arith.mulf %39, %40 : vector<16x128xf32>
      %42 = arith.truncf %41 : vector<16x128xf32> to vector<16x128xbf16>
      %c0_44 = arith.constant 0 : index
      %c0_45 = arith.constant 0 : index
      %43 = vector.load %arg23[%c0_44, %c0_45] : memref<16x128xf32, #tpu.memory_space<vmem>>, vector<16x128xf32>
      %44 = vector.broadcast %38 : vector<16x1xf32> to vector<16x128xf32>
      %45 = arith.mulf %43, %44 : vector<16x128xf32>
      %46 = arith.truncf %45 : vector<16x128xf32> to vector<16x128xbf16>
      %c0_46 = arith.constant 0 : index
      %c0_47 = arith.constant 0 : index
      %47 = vector.load %arg10[%c0_46, %c0_47] : memref<128x128xbf16, #tpu.memory_space<vmem>>, vector<128x128xbf16>
      %cst_48 = arith.constant dense<0.000000e+00> : vector<16x128xf32>
      %48 = tpu.matmul %42, %47, %cst_48 {dimension_numbers = #tpu.dot_dimension_numbers<[1], [0], [0], [1], [0, 0, 1, 1], [], []>} : vector<16x128xbf16>, vector<128x128xbf16>, vector<16x128xf32> -> vector<16x128xf32>
      %c0_49 = arith.constant 0 : index
      %c0_50 = arith.constant 0 : index
      %49 = vector.load %arg11[%c0_49, %c0_50] : memref<128x128xbf16, #tpu.memory_space<vmem>>, vector<128x128xbf16>
      %cst_51 = arith.constant dense<0.000000e+00> : vector<16x128xf32>
      %50 = tpu.matmul %46, %49, %cst_51 {dimension_numbers = #tpu.dot_dimension_numbers<[1], [0], [0], [1], [0, 0, 1, 1], [], []>} : vector<16x128xbf16>, vector<128x128xbf16>, vector<16x128xf32> -> vector<16x128xf32>
      %51 = arith.addf %48, %50 : vector<16x128xf32>
      %c0_52 = arith.constant 0 : index
      %c0_53 = arith.constant 0 : index
      %52 = vector.load %arg12[%c0_52, %c0_53] : memref<1x128xf32, #tpu.memory_space<vmem>>, vector<1x128xf32>
      %53 = vector.broadcast %52 : vector<1x128xf32> to vector<16x128xf32>
      %54 = arith.addf %51, %53 : vector<16x128xf32>
      %55 = arith.truncf %54 : vector<16x128xf32> to vector<16x128xbf16>
      %c0_54 = arith.constant 0 : index
      %c0_55 = arith.constant 0 : index
      %56 = vector.load %arg13[%c0_54, %c0_55] : memref<128x128xbf16, #tpu.memory_space<vmem>>, vector<128x128xbf16>
      %cst_56 = arith.constant dense<0.000000e+00> : vector<16x128xf32>
      %57 = tpu.matmul %55, %56, %cst_56 {dimension_numbers = #tpu.dot_dimension_numbers<[1], [0], [0], [1], [0, 0, 1, 1], [], []>} : vector<16x128xbf16>, vector<128x128xbf16>, vector<16x128xf32> -> vector<16x128xf32>
      %c0_57 = arith.constant 0 : index
      %c0_58 = arith.constant 0 : index
      %58 = vector.load %arg14[%c0_57, %c0_58] : memref<1x128xf32, #tpu.memory_space<vmem>>, vector<1x128xf32>
      %59 = vector.broadcast %58 : vector<1x128xf32> to vector<16x128xf32>
      %60 = arith.addf %57, %59 : vector<16x128xf32>
      %c0_59 = arith.constant 0 : index
      %c0_60 = arith.constant 0 : index
      %61 = vector.load %arg15[%c0_59, %c0_60] : memref<16x128xf32, #tpu.memory_space<vmem>>, vector<16x128xf32>
      tpu.vector_store %arg15[%c0_59, %c0_60], %60 {strides = array<i32>} : memref<16x128xf32, #tpu.memory_space<vmem>>, vector<16x128xf32>,
    } else {
    }
    return
  }
  func.func @transform_0(%arg0: i32) -> (i32, i32) {
    %c0_i32 = arith.constant 0 : i32
    %c0_i32_0 = arith.constant 0 : i32
    %c0_i32_1 = arith.constant 0 : i32
    return %c0_i32, %c0_i32_0 : i32, i32
  }
  func.func @transform_1(%arg0: i32) -> (i32, i32) {
    %c0_i32 = arith.constant 0 : i32
    %c0_i32_0 = arith.constant 0 : i32
    return %arg0, %c0_i32 : i32, i32
  }
  func.func @transform_2(%arg0: i32) -> (i32, i32) {
    %c1_i32 = arith.constant 1 : i32
    %0 = arith.subi %c1_i32, %arg0 : i32
    %c0_i32 = arith.constant 0 : i32
    %c0_i32_0 = arith.constant 0 : i32
    return %0, %c0_i32 : i32, i32
  }
  func.func @transform_3(%arg0: i32) -> (i32, i32) {
    %c0_i32 = arith.constant 0 : i32
    %c0_i32_0 = arith.constant 0 : i32
    %c0_i32_1 = arith.constant 0 : i32
    return %c0_i32, %c0_i32_0 : i32, i32
  }
  func.func @transform_4(%arg0: i32) -> (i32, i32) {
    %c0_i32 = arith.constant 0 : i32
    %c0_i32_0 = arith.constant 0 : i32
    %c0_i32_1 = arith.constant 0 : i32
    return %c0_i32, %c0_i32_0 : i32, i32
  }
  func.func @transform_5(%arg0: i32) -> (i32, i32) {
    %c0_i32 = arith.constant 0 : i32
    %c0_i32_0 = arith.constant 0 : i32
    %c0_i32_1 = arith.constant 0 : i32
    return %c0_i32, %c0_i32_0 : i32, i32
  }
  func.func @transform_6(%arg0: i32) -> (i32, i32) {
    %c0_i32 = arith.constant 0 : i32
    %c0_i32_0 = arith.constant 0 : i32
    %c0_i32_1 = arith.constant 0 : i32
    return %c0_i32, %c0_i32_0 : i32, i32
  }
  func.func @transform_7(%arg0: i32) -> (i32, i32) {
    %c0_i32 = arith.constant 0 : i32
    %c0_i32_0 = arith.constant 0 : i32
    %c0_i32_1 = arith.constant 0 : i32
    return %c0_i32, %c0_i32_0 : i32, i32
  }
  func.func @transform_8(%arg0: i32) -> (i32, i32) {
    %c0_i32 = arith.constant 0 : i32
    %c0_i32_0 = arith.constant 0 : i32
    %c0_i32_1 = arith.constant 0 : i32
    return %c0_i32, %c0_i32_0 : i32, i32
  }
  func.func @transform_9(%arg0: i32) -> (i32, i32) {
    %c0_i32 = arith.constant 0 : i32
    %c0_i32_0 = arith.constant 0 : i32
    %c0_i32_1 = arith.constant 0 : i32
    return %c0_i32, %c0_i32_0 : i32, i32
  }
  func.func @transform_10(%arg0: i32) -> (i32, i32) {
    %c0_i32 = arith.constant 0 : i32
    %c0_i32_0 = arith.constant 0 : i32
    %c0_i32_1 = arith.constant 0 : i32
    return %c0_i32, %c0_i32_0 : i32, i32
  }
  func.func @transform_11(%arg0: i32) -> (i32, i32) {
    %c0_i32 = arith.constant 0 : i32
    %c0_i32_0 = arith.constant 0 : i32
    %c0_i32_1 = arith.constant 0 : i32
    return %c0_i32, %c0_i32_0 : i32, i32
  }
  func.func @transform_12(%arg0: i32) -> (i32, i32) {
    %c0_i32 = arith.constant 0 : i32
    %c0_i32_0 = arith.constant 0 : i32
    %c0_i32_1 = arith.constant 0 : i32
    return %c0_i32, %c0_i32_0 : i32, i32
  }
  func.func @transform_13(%arg0: i32) -> (i32, i32) {
    %c0_i32 = arith.constant 0 : i32
    %c0_i32_0 = arith.constant 0 : i32
    %c0_i32_1 = arith.constant 0 : i32
    return %c0_i32, %c0_i32_0 : i32, i32
  }
  func.func @transform_14(%arg0: i32) -> (i32, i32) {
    %c0_i32 = arith.constant 0 : i32
    %c0_i32_0 = arith.constant 0 : i32
    %c0_i32_1 = arith.constant 0 : i32
    return %c0_i32, %c0_i32_0 : i32, i32
  }
}

module attributes {stable_mosaic.version = 11 : i64} {
  func.func @_bilstm_avg_kernel(%arg0: i32, %arg1: memref<16x1xi32, #tpu.memory_space<vmem>>, %arg2: memref<64x16xbf16, #tpu.memory_space<vmem>>, %arg3: memref<64x16xbf16, #tpu.memory_space<vmem>>, %arg4: memref<16x512xbf16, #tpu.memory_space<vmem>>, %arg5: memref<16x512xbf16, #tpu.memory_space<vmem>>, %arg6: memref<1x512xf32, #tpu.memory_space<vmem>>, %arg7: memref<1x512xf32, #tpu.memory_space<vmem>>, %arg8: memref<128x512xbf16, #tpu.memory_space<vmem>>, %arg9: memref<128x512xbf16, #tpu.memory_space<vmem>>, %arg10: memref<128x128xbf16, #tpu.memory_space<vmem>>, %arg11: memref<128x128xbf16, #tpu.memory_space<vmem>>, %arg12: memref<1x128xf32, #tpu.memory_space<vmem>>, %arg13: memref<128x128xbf16, #tpu.memory_space<vmem>>, %arg14: memref<1x128xf32, #tpu.memory_space<vmem>>, %arg15: memref<16x128xf32, #tpu.memory_space<vmem>>, %arg16: memref<64x512xbf16, #tpu.memory_space<vmem>>, %arg17: memref<64x512xbf16, #tpu.memory_space<vmem>>, %arg18: memref<16x128xf32, #tpu.memory_space<vmem>>, %arg19: memref<16x128xf32, #tpu.memory_space<vmem>>, %arg20: memref<16x128xf32, #tpu.memory_space<vmem>>, %arg21: memref<16x128xf32, #tpu.memory_space<vmem>>, %arg22: memref<16x128xf32, #tpu.memory_space<vmem>>, %arg23: memref<16x128xf32, #tpu.memory_space<vmem>>) attributes {dimension_semantics = [#tpu.dimension_semantics<arbitrary>], iteration_bounds = array<i64: 2>, scalar_prefetch = 0 : i64, scratch_operands = 8 : i64, tpu.core_type = #tpu.core_type<tc>, window_params = [{pipeline_mode = #tpu.pipeline_mode<synchronous>, transform_indices = @transform_0, window_bounds = array<i64: 16, 1>}, {transform_indices = @transform_1, window_bounds = array<i64: 64, 16>}, {transform_indices = @transform_2, window_bounds = array<i64: 64, 16>}, {pipeline_mode = #tpu.pipeline_mode<synchronous>, transform_indices = @transform_3, window_bounds = array<i64: 16, 512>}, {pipeline_mode = #tpu.pipeline_mode<synchronous>, transform_indices = @transform_4, window_bounds = array<i64: 16, 512>}, {pipeline_mode = #tpu.pipeline_mode<synchronous>, transform_indices = @transform_5, window_bounds = array<i64: 1, 512>}, {pipeline_mode = #tpu.pipeline_mode<synchronous>, transform_indices = @transform_6, window_bounds = array<i64: 1, 512>}, {pipeline_mode = #tpu.pipeline_mode<synchronous>, transform_indices = @transform_7, window_bounds = array<i64: 128, 512>}, {pipeline_mode = #tpu.pipeline_mode<synchronous>, transform_indices = @transform_8, window_bounds = array<i64: 128, 512>}, {pipeline_mode = #tpu.pipeline_mode<synchronous>, transform_indices = @transform_9, window_bounds = array<i64: 128, 128>}, {pipeline_mode = #tpu.pipeline_mode<synchronous>, transform_indices = @transform_10, window_bounds = array<i64: 128, 128>}, {pipeline_mode = #tpu.pipeline_mode<synchronous>, transform_indices = @transform_11, window_bounds = array<i64: 1, 128>}, {pipeline_mode = #tpu.pipeline_mode<synchronous>, transform_indices = @transform_12, window_bounds = array<i64: 128, 128>}, {pipeline_mode = #tpu.pipeline_mode<synchronous>, transform_indices = @transform_13, window_bounds = array<i64: 1, 128>}, {pipeline_mode = #tpu.pipeline_mode<synchronous>, transform_indices = @transform_14, window_bounds = array<i64: 16, 128>}]} {
    %c0_i32 = arith.constant 0 : i32
    %0 = arith.cmpi eq, %arg0, %c0_i32 : i32
    %1 = arith.extui %0 : i1 to i32
    %c0_i32_0 = arith.constant 0 : i32
    %2 = arith.cmpi ne, %1, %c0_i32_0 : i32
    scf.if %2 {
      %cst_40 = arith.constant 0.000000e+00 : f32
      %34 = vector.broadcast %cst_40 : f32 to vector<16x128xf32>
      %c0_41 = arith.constant 0 : index
      %c0_42 = arith.constant 0 : index
      %35 = vector.load %arg18[%c0_41, %c0_42] : memref<16x128xf32, #tpu.memory_space<vmem>>, vector<16x128xf32>
      tpu.vector_store %arg18[%c0_41, %c0_42], %34 {strides = array<i32>} : memref<16x128xf32, #tpu.memory_space<vmem>>, vector<16x128xf32>,
      %cst_43 = arith.constant 0.000000e+00 : f32
      %36 = vector.broadcast %cst_43 : f32 to vector<16x128xf32>
      %c0_44 = arith.constant 0 : index
      %c0_45 = arith.constant 0 : index
      %37 = vector.load %arg19[%c0_44, %c0_45] : memref<16x128xf32, #tpu.memory_space<vmem>>, vector<16x128xf32>
      tpu.vector_store %arg19[%c0_44, %c0_45], %36 {strides = array<i32>} : memref<16x128xf32, #tpu.memory_space<vmem>>, vector<16x128xf32>,
      %cst_46 = arith.constant 0.000000e+00 : f32
      %38 = vector.broadcast %cst_46 : f32 to vector<16x128xf32>
      %c0_47 = arith.constant 0 : index
      %c0_48 = arith.constant 0 : index
      %39 = vector.load %arg20[%c0_47, %c0_48] : memref<16x128xf32, #tpu.memory_space<vmem>>, vector<16x128xf32>
      tpu.vector_store %arg20[%c0_47, %c0_48], %38 {strides = array<i32>} : memref<16x128xf32, #tpu.memory_space<vmem>>, vector<16x128xf32>,
      %cst_49 = arith.constant 0.000000e+00 : f32
      %40 = vector.broadcast %cst_49 : f32 to vector<16x128xf32>
      %c0_50 = arith.constant 0 : index
      %c0_51 = arith.constant 0 : index
      %41 = vector.load %arg21[%c0_50, %c0_51] : memref<16x128xf32, #tpu.memory_space<vmem>>, vector<16x128xf32>
      tpu.vector_store %arg21[%c0_50, %c0_51], %40 {strides = array<i32>} : memref<16x128xf32, #tpu.memory_space<vmem>>, vector<16x128xf32>,
      %cst_52 = arith.constant 0.000000e+00 : f32
      %42 = vector.broadcast %cst_52 : f32 to vector<16x128xf32>
      %c0_53 = arith.constant 0 : index
      %c0_54 = arith.constant 0 : index
      %43 = vector.load %arg22[%c0_53, %c0_54] : memref<16x128xf32, #tpu.memory_space<vmem>>, vector<16x128xf32>
      tpu.vector_store %arg22[%c0_53, %c0_54], %42 {strides = array<i32>} : memref<16x128xf32, #tpu.memory_space<vmem>>, vector<16x128xf32>,
      %cst_55 = arith.constant 0.000000e+00 : f32
      %44 = vector.broadcast %cst_55 : f32 to vector<16x128xf32>
      %c0_56 = arith.constant 0 : index
      %c0_57 = arith.constant 0 : index
      %45 = vector.load %arg23[%c0_56, %c0_57] : memref<16x128xf32, #tpu.memory_space<vmem>>, vector<16x128xf32>
      tpu.vector_store %arg23[%c0_56, %c0_57], %44 {strides = array<i32>} : memref<16x128xf32, #tpu.memory_space<vmem>>, vector<16x128xf32>,
    } else {
    }
    %c0 = arith.constant 0 : index
    %c0_1 = arith.constant 0 : index
    %3 = vector.load %arg2[%c0, %c0_1] : memref<64x16xbf16, #tpu.memory_space<vmem>>, vector<64x16xbf16>
    %c0_2 = arith.constant 0 : index
    %c0_3 = arith.constant 0 : index
    %4 = vector.load %arg4[%c0_2, %c0_3] : memref<16x512xbf16, #tpu.memory_space<vmem>>, vector<16x512xbf16>
    %cst = arith.constant dense<0.000000e+00> : vector<64x512xf32>
    %5 = tpu.matmul %3, %4, %cst {dimension_numbers = #tpu.dot_dimension_numbers<[1], [0], [0], [1], [0, 0, 1, 1], [], []>} : vector<64x16xbf16>, vector<16x512xbf16>, vector<64x512xf32> -> vector<64x512xf32>
    %c0_4 = arith.constant 0 : index
    %c0_5 = arith.constant 0 : index
    %6 = vector.load %arg6[%c0_4, %c0_5] : memref<1x512xf32, #tpu.memory_space<vmem>>, vector<1x512xf32>
    %7 = vector.broadcast %6 : vector<1x512xf32> to vector<64x512xf32>
    %8 = arith.addf %5, %7 : vector<64x512xf32>
    %9 = arith.truncf %8 : vector<64x512xf32> to vector<64x512xbf16>
    %c0_6 = arith.constant 0 : index
    %c0_7 = arith.constant 0 : index
    %10 = vector.load %arg16[%c0_6, %c0_7] : memref<64x512xbf16, #tpu.memory_space<vmem>>, vector<64x512xbf16>
    tpu.vector_store %arg16[%c0_6, %c0_7], %9 {strides = array<i32>} : memref<64x512xbf16, #tpu.memory_space<vmem>>, vector<64x512xbf16>,
    %c0_8 = arith.constant 0 : index
    %c0_9 = arith.constant 0 : index
    %11 = vector.load %arg3[%c0_8, %c0_9] : memref<64x16xbf16, #tpu.memory_space<vmem>>, vector<64x16xbf16>
    %c0_10 = arith.constant 0 : index
    %c0_11 = arith.constant 0 : index
    %12 = vector.load %arg5[%c0_10, %c0_11] : memref<16x512xbf16, #tpu.memory_space<vmem>>, vector<16x512xbf16>
    %cst_12 = arith.constant dense<0.000000e+00> : vector<64x512xf32>
    %13 = tpu.matmul %11, %12, %cst_12 {dimension_numbers = #tpu.dot_dimension_numbers<[1], [0], [0], [1], [0, 0, 1, 1], [], []>} : vector<64x16xbf16>, vector<16x512xbf16>, vector<64x512xf32> -> vector<64x512xf32>
    %c0_13 = arith.constant 0 : index
    %c0_14 = arith.constant 0 : index
    %14 = vector.load %arg7[%c0_13, %c0_14] : memref<1x512xf32, #tpu.memory_space<vmem>>, vector<1x512xf32>
    %15 = vector.broadcast %14 : vector<1x512xf32> to vector<64x512xf32>
    %16 = arith.addf %13, %15 : vector<64x512xf32>
    %17 = arith.truncf %16 : vector<64x512xf32> to vector<64x512xbf16>
    %c0_15 = arith.constant 0 : index
    %c0_16 = arith.constant 0 : index
    %18 = vector.load %arg17[%c0_15, %c0_16] : memref<64x512xbf16, #tpu.memory_space<vmem>>, vector<64x512xbf16>
    tpu.vector_store %arg17[%c0_15, %c0_16], %17 {strides = array<i32>} : memref<64x512xbf16, #tpu.memory_space<vmem>>, vector<64x512xbf16>,
    %c0_17 = arith.constant 0 : index
    %c0_18 = arith.constant 0 : index
    %19 = vector.load %arg1[%c0_17, %c0_18] : memref<16x1xi32, #tpu.memory_space<vmem>>, vector<16x1xi32>
    %c4_i32 = arith.constant 4 : i32
    %20 = arith.muli %arg0, %c4_i32 : i32
    %c0_19 = arith.constant 0 : index
    %c0_20 = arith.constant 0 : index
    %21 = vector.load %arg18[%c0_19, %c0_20] : memref<16x128xf32, #tpu.memory_space<vmem>>, vector<16x128xf32>
    %c0_21 = arith.constant 0 : index
    %c0_22 = arith.constant 0 : index
    %22 = vector.load %arg19[%c0_21, %c0_22] : memref<16x128xf32, #tpu.memory_space<vmem>>, vector<16x128xf32>
    %c0_23 = arith.constant 0 : index
    %c0_24 = arith.constant 0 : index
    %23 = vector.load %arg20[%c0_23, %c0_24] : memref<16x128xf32, #tpu.memory_space<vmem>>, vector<16x128xf32>
    %c0_25 = arith.constant 0 : index
    %c0_26 = arith.constant 0 : index
    %24 = vector.load %arg21[%c0_25, %c0_26] : memref<16x128xf32, #tpu.memory_space<vmem>>, vector<16x128xf32>
    %c0_i32_27 = arith.constant 0 : i32
    %c4_i32_28 = arith.constant 4 : i32
    %25 = arith.addi %c0_i32_27, %c4_i32_28 : i32
    %c1_i32 = arith.constant 1 : i32
    %26:4 = scf.for %arg24 = %c0_i32_27 to %25 step %c1_i32 iter_args(%arg25 = %21, %arg26 = %22, %arg27 = %23, %arg28 = %24) -> (vector<16x128xf32>, vector<16x128xf32>, vector<16x128xf32>, vector<16x128xf32>)  : i32 {
      %34 = arith.addi %20, %arg24 : i32
      %35 = arith.truncf %arg25 : vector<16x128xf32> to vector<16x128xbf16>
      %c0_40 = arith.constant 0 : index
      %c0_41 = arith.constant 0 : index
      %36 = vector.load %arg8[%c0_40, %c0_41] : memref<128x512xbf16, #tpu.memory_space<vmem>>, vector<128x512xbf16>
      %cst_42 = arith.constant dense<0.000000e+00> : vector<16x512xf32>
      %37 = tpu.matmul %35, %36, %cst_42 {dimension_numbers = #tpu.dot_dimension_numbers<[1], [0], [0], [1], [0, 0, 1, 1], [], []>} : vector<16x128xbf16>, vector<128x512xbf16>, vector<16x512xf32> -> vector<16x512xf32>
      %c16_i32 = arith.constant 16 : i32
      %38 = arith.muli %arg24, %c16_i32 : i32
      %39 = tpu.assume_multiple %38, 16 : i32
      %40 = arith.index_cast %39 : i32 to index
      %c0_43 = arith.constant 0 : index
      %41 = vector.load %arg16[%40, %c0_43] : memref<64x512xbf16, #tpu.memory_space<vmem>>, vector<16x512xbf16>
      %42 = arith.extf %41 : vector<16x512xbf16> to vector<16x512xf32>
      %43 = arith.addf %37, %42 : vector<16x512xf32>
      %44 = arith.truncf %arg27 : vector<16x128xf32> to vector<16x128xbf16>
      %c0_44 = arith.constant 0 : index
      %c0_45 = arith.constant 0 : index
      %45 = vector.load %arg9[%c0_44, %c0_45] : memref<128x512xbf16, #tpu.memory_space<vmem>>, vector<128x512xbf16>
      %cst_46 = arith.constant dense<0.000000e+00> : vector<16x512xf32>
      %46 = tpu.matmul %44, %45, %cst_46 {dimension_numbers = #tpu.dot_dimension_numbers<[1], [0], [0], [1], [0, 0, 1, 1], [], []>} : vector<16x128xbf16>, vector<128x512xbf16>, vector<16x512xf32> -> vector<16x512xf32>
      %c3_i32 = arith.constant 3 : i32
      %47 = arith.subi %c3_i32, %arg24 : i32
      %c16_i32_47 = arith.constant 16 : i32
      %48 = arith.muli %47, %c16_i32_47 : i32
      %49 = tpu.assume_multiple %48, 16 : i32
      %50 = arith.index_cast %49 : i32 to index
      %c0_48 = arith.constant 0 : index
      %51 = vector.load %arg17[%50, %c0_48] : memref<64x512xbf16, #tpu.memory_space<vmem>>, vector<16x512xbf16>
      %52 = arith.extf %51 : vector<16x512xbf16> to vector<16x512xf32>
      %53 = arith.addf %46, %52 : vector<16x512xf32>
      %54 = vector.extract_strided_slice %43 {offsets = [0, 0], sizes = [16, 128], strides = [1, 1]} : vector<16x512xf32> to vector<16x128xf32>
      %55 = arith.negf %54 : vector<16x128xf32>
      %56 = math.exp %55 : vector<16x128xf32>
      %cst_49 = arith.constant 1.000000e+00 : f32
      %57 = vector.broadcast %cst_49 : f32 to vector<16x128xf32>
      %58 = arith.addf %57, %56 : vector<16x128xf32>
      %59 = arith.divf %57, %58 : vector<16x128xf32>
      %60 = vector.extract_strided_slice %43 {offsets = [0, 128], sizes = [16, 128], strides = [1, 1]} : vector<16x512xf32> to vector<16x128xf32>
      %61 = arith.negf %60 : vector<16x128xf32>
      %62 = math.exp %61 : vector<16x128xf32>
      %cst_50 = arith.constant 1.000000e+00 : f32
      %63 = vector.broadcast %cst_50 : f32 to vector<16x128xf32>
      %64 = arith.addf %63, %62 : vector<16x128xf32>
      %65 = arith.divf %63, %64 : vector<16x128xf32>
      %66 = vector.extract_strided_slice %43 {offsets = [0, 256], sizes = [16, 128], strides = [1, 1]} : vector<16x512xf32> to vector<16x128xf32>
      %67 = math.tanh %66 : vector<16x128xf32>
      %68 = vector.extract_strided_slice %43 {offsets = [0, 384], sizes = [16, 128], strides = [1, 1]} : vector<16x512xf32> to vector<16x128xf32>
      %69 = arith.negf %68 : vector<16x128xf32>
      %70 = math.exp %69 : vector<16x128xf32>
      %cst_51 = arith.constant 1.000000e+00 : f32
      %71 = vector.broadcast %cst_51 : f32 to vector<16x128xf32>
      %72 = arith.addf %71, %70 : vector<16x128xf32>
      %73 = arith.divf %71, %72 : vector<16x128xf32>
      %74 = arith.mulf %65, %arg26 : vector<16x128xf32>
      %75 = arith.mulf %59, %67 : vector<16x128xf32>
      %76 = arith.addf %74, %75 : vector<16x128xf32>
      %77 = math.tanh %76 : vector<16x128xf32>
      %78 = arith.mulf %73, %77 : vector<16x128xf32>
      %79 = vector.extract_strided_slice %53 {offsets = [0, 0], sizes = [16, 128], strides = [1, 1]} : vector<16x512xf32> to vector<16x128xf32>
      %80 = arith.negf %79 : vector<16x128xf32>
      %81 = math.exp %80 : vector<16x128xf32>
      %cst_52 = arith.constant 1.000000e+00 : f32
      %82 = vector.broadcast %cst_52 : f32 to vector<16x128xf32>
      %83 = arith.addf %82, %81 : vector<16x128xf32>
      %84 = arith.divf %82, %83 : vector<16x128xf32>
      %85 = vector.extract_strided_slice %53 {offsets = [0, 128], sizes = [16, 128], strides = [1, 1]} : vector<16x512xf32> to vector<16x128xf32>
      %86 = arith.negf %85 : vector<16x128xf32>
      %87 = math.exp %86 : vector<16x128xf32>
      %cst_53 = arith.constant 1.000000e+00 : f32
      %88 = vector.broadcast %cst_53 : f32 to vector<16x128xf32>
      %89 = arith.addf %88, %87 : vector<16x128xf32>
      %90 = arith.divf %88, %89 : vector<16x128xf32>
      %91 = vector.extract_strided_slice %53 {offsets = [0, 256], sizes = [16, 128], strides = [1, 1]} : vector<16x512xf32> to vector<16x128xf32>
      %92 = math.tanh %91 : vector<16x128xf32>
      %93 = vector.extract_strided_slice %53 {offsets = [0, 384], sizes = [16, 128], strides = [1, 1]} : vector<16x512xf32> to vector<16x128xf32>
      %94 = arith.negf %93 : vector<16x128xf32>
      %95 = math.exp %94 : vector<16x128xf32>
      %cst_54 = arith.constant 1.000000e+00 : f32
      %96 = vector.broadcast %cst_54 : f32 to vector<16x128xf32>
      %97 = arith.addf %96, %95 : vector<16x128xf32>
      %98 = arith.divf %96, %97 : vector<16x128xf32>
      %99 = arith.mulf %90, %arg28 : vector<16x128xf32>
      %100 = arith.mulf %84, %92 : vector<16x128xf32>
      %101 = arith.addf %99, %100 : vector<16x128xf32>
      %102 = math.tanh %101 : vector<16x128xf32>
      %103 = arith.mulf %98, %102 : vector<16x128xf32>
      %104 = vector.broadcast %34 : i32 to vector<16x1xi32>
      %105 = arith.cmpi sgt, %19, %104 : vector<16x1xi32>
      %c7_i32 = arith.constant 7 : i32
      %106 = arith.subi %c7_i32, %34 : i32
      %107 = vector.broadcast %106 : i32 to vector<16x1xi32>
      %108 = arith.cmpi sgt, %19, %107 : vector<16x1xi32>
      %109 = vector.shape_cast %105 : vector<16x1xi1> to vector<16x1xi1>
      %110 = vector.broadcast %109 : vector<16x1xi1> to vector<16x128xi1>
      %111 = arith.select %110, %78, %arg25 : vector<16x128xi1>, vector<16x128xf32>
      %112 = vector.shape_cast %105 : vector<16x1xi1> to vector<16x1xi1>
      %113 = vector.broadcast %112 : vector<16x1xi1> to vector<16x128xi1>
      %114 = arith.select %113, %76, %arg26 : vector<16x128xi1>, vector<16x128xf32>
      %115 = vector.shape_cast %108 : vector<16x1xi1> to vector<16x1xi1>
      %116 = vector.broadcast %115 : vector<16x1xi1> to vector<16x128xi1>
      %117 = arith.select %116, %103, %arg27 : vector<16x128xi1>, vector<16x128xf32>
      %118 = vector.shape_cast %108 : vector<16x1xi1> to vector<16x1xi1>
      %119 = vector.broadcast %118 : vector<16x1xi1> to vector<16x128xi1>
      %120 = arith.select %119, %101, %arg28 : vector<16x128xi1>, vector<16x128xf32>
      %c0_55 = arith.constant 0 : index
      %c0_56 = arith.constant 0 : index
      %121 = vector.load %arg22[%c0_55, %c0_56] : memref<16x128xf32, #tpu.memory_space<vmem>>, vector<16x128xf32>
      %cst_57 = arith.constant 0.000000e+00 : f32
      %122 = vector.shape_cast %105 : vector<16x1xi1> to vector<16x1xi1>
      %123 = vector.broadcast %122 : vector<16x1xi1> to vector<16x128xi1>
      %124 = vector.broadcast %cst_57 : f32 to vector<16x128xf32>
      %125 = arith.select %123, %111, %124 : vector<16x128xi1>, vector<16x128xf32>
      %126 = arith.addf %121, %125 : vector<16x128xf32>
      %c0_58 = arith.constant 0 : index
      %c0_59 = arith.constant 0 : index
      %127 = vector.load %arg22[%c0_58, %c0_59] : memref<16x128xf32, #tpu.memory_space<vmem>>, vector<16x128xf32>
      tpu.vector_store %arg22[%c0_58, %c0_59], %126 {strides = array<i32>} : memref<16x128xf32, #tpu.memory_space<vmem>>, vector<16x128xf32>,
      %c0_60 = arith.constant 0 : index
      %c0_61 = arith.constant 0 : index
      %128 = vector.load %arg23[%c0_60, %c0_61] : memref<16x128xf32, #tpu.memory_space<vmem>>, vector<16x128xf32>
      %cst_62 = arith.constant 0.000000e+00 : f32
      %129 = vector.shape_cast %108 : vector<16x1xi1> to vector<16x1xi1>
      %130 = vector.broadcast %129 : vector<16x1xi1> to vector<16x128xi1>
      %131 = vector.broadcast %cst_62 : f32 to vector<16x128xf32>
      %132 = arith.select %130, %117, %131 : vector<16x128xi1>, vector<16x128xf32>
      %133 = arith.addf %128, %132 : vector<16x128xf32>
      %c0_63 = arith.constant 0 : index
      %c0_64 = arith.constant 0 : index
      %134 = vector.load %arg23[%c0_63, %c0_64] : memref<16x128xf32, #tpu.memory_space<vmem>>, vector<16x128xf32>
      tpu.vector_store %arg23[%c0_63, %c0_64], %133 {strides = array<i32>} : memref<16x128xf32, #tpu.memory_space<vmem>>, vector<16x128xf32>,
      scf.yield %111, %114, %117, %120 : vector<16x128xf32>, vector<16x128xf32>, vector<16x128xf32>, vector<16x128xf32>
    }
    %c4_i32_29 = arith.constant 4 : i32
    %c0_30 = arith.constant 0 : index
    %c0_31 = arith.constant 0 : index
    %27 = vector.load %arg18[%c0_30, %c0_31] : memref<16x128xf32, #tpu.memory_space<vmem>>, vector<16x128xf32>
    tpu.vector_store %arg18[%c0_30, %c0_31], %26#0 {strides = array<i32>} : memref<16x128xf32, #tpu.memory_space<vmem>>, vector<16x128xf32>,
    %c0_32 = arith.constant 0 : index
    %c0_33 = arith.constant 0 : index
    %28 = vector.load %arg19[%c0_32, %c0_33] : memref<16x128xf32, #tpu.memory_space<vmem>>, vector<16x128xf32>
    tpu.vector_store %arg19[%c0_32, %c0_33], %26#1 {strides = array<i32>} : memref<16x128xf32, #tpu.memory_space<vmem>>, vector<16x128xf32>,
    %c0_34 = arith.constant 0 : index
    %c0_35 = arith.constant 0 : index
    %29 = vector.load %arg20[%c0_34, %c0_35] : memref<16x128xf32, #tpu.memory_space<vmem>>, vector<16x128xf32>
    tpu.vector_store %arg20[%c0_34, %c0_35], %26#2 {strides = array<i32>} : memref<16x128xf32, #tpu.memory_space<vmem>>, vector<16x128xf32>,
    %c0_36 = arith.constant 0 : index
    %c0_37 = arith.constant 0 : index
    %30 = vector.load %arg21[%c0_36, %c0_37] : memref<16x128xf32, #tpu.memory_space<vmem>>, vector<16x128xf32>
    tpu.vector_store %arg21[%c0_36, %c0_37], %26#3 {strides = array<i32>} : memref<16x128xf32, #tpu.memory_space<vmem>>, vector<16x128xf32>,
    %c1_i32_38 = arith.constant 1 : i32
    %31 = arith.cmpi eq, %arg0, %c1_i32_38 : i32
    %32 = arith.extui %31 : i1 to i32
    %c0_i32_39 = arith.constant 0 : i32
    %33 = arith.cmpi ne, %32, %c0_i32_39 : i32
    scf.if %33 {
      %c1_i32_40 = arith.constant 1 : i32
      %34 = vector.broadcast %c1_i32_40 : i32 to vector<16x1xi32>
      %35 = arith.maxsi %19, %34 : vector<16x1xi32>
      %36 = arith.sitofp %35 : vector<16x1xi32> to vector<16x1xf32>
      %cst_41 = arith.constant 1.000000e+00 : f32
      %37 = vector.broadcast %cst_41 : f32 to vector<16x1xf32>
      %38 = arith.divf %37, %36 : vector<16x1xf32>
      %c0_42 = arith.constant 0 : index
      %c0_43 = arith.constant 0 : index
      %39 = vector.load %arg22[%c0_42, %c0_43] : memref<16x128xf32, #tpu.memory_space<vmem>>, vector<16x128xf32>
      %40 = vector.broadcast %38 : vector<16x1xf32> to vector<16x128xf32>
      %41 = arith.mulf %39, %40 : vector<16x128xf32>
      %42 = arith.truncf %41 : vector<16x128xf32> to vector<16x128xbf16>
      %c0_44 = arith.constant 0 : index
      %c0_45 = arith.constant 0 : index
      %43 = vector.load %arg23[%c0_44, %c0_45] : memref<16x128xf32, #tpu.memory_space<vmem>>, vector<16x128xf32>
      %44 = vector.broadcast %38 : vector<16x1xf32> to vector<16x128xf32>
      %45 = arith.mulf %43, %44 : vector<16x128xf32>
      %46 = arith.truncf %45 : vector<16x128xf32> to vector<16x128xbf16>
      %c0_46 = arith.constant 0 : index
      %c0_47 = arith.constant 0 : index
      %47 = vector.load %arg10[%c0_46, %c0_47] : memref<128x128xbf16, #tpu.memory_space<vmem>>, vector<128x128xbf16>
      %cst_48 = arith.constant dense<0.000000e+00> : vector<16x128xf32>
      %48 = tpu.matmul %42, %47, %cst_48 {dimension_numbers = #tpu.dot_dimension_numbers<[1], [0], [0], [1], [0, 0, 1, 1], [], []>} : vector<16x128xbf16>, vector<128x128xbf16>, vector<16x128xf32> -> vector<16x128xf32>
      %c0_49 = arith.constant 0 : index
      %c0_50 = arith.constant 0 : index
      %49 = vector.load %arg11[%c0_49, %c0_50] : memref<128x128xbf16, #tpu.memory_space<vmem>>, vector<128x128xbf16>
      %cst_51 = arith.constant dense<0.000000e+00> : vector<16x128xf32>
      %50 = tpu.matmul %46, %49, %cst_51 {dimension_numbers = #tpu.dot_dimension_numbers<[1], [0], [0], [1], [0, 0, 1, 1], [], []>} : vector<16x128xbf16>, vector<128x128xbf16>, vector<16x128xf32> -> vector<16x128xf32>
      %51 = arith.addf %48, %50 : vector<16x128xf32>
      %c0_52 = arith.constant 0 : index
      %c0_53 = arith.constant 0 : index
      %52 = vector.load %arg12[%c0_52, %c0_53] : memref<1x128xf32, #tpu.memory_space<vmem>>, vector<1x128xf32>
      %53 = vector.broadcast %52 : vector<1x128xf32> to vector<16x128xf32>
      %54 = arith.addf %51, %53 : vector<16x128xf32>
      %55 = arith.truncf %54 : vector<16x128xf32> to vector<16x128xbf16>
      %c0_54 = arith.constant 0 : index
      %c0_55 = arith.constant 0 : index
      %56 = vector.load %arg13[%c0_54, %c0_55] : memref<128x128xbf16, #tpu.memory_space<vmem>>, vector<128x128xbf16>
      %cst_56 = arith.constant dense<0.000000e+00> : vector<16x128xf32>
      %57 = tpu.matmul %55, %56, %cst_56 {dimension_numbers = #tpu.dot_dimension_numbers<[1], [0], [0], [1], [0, 0, 1, 1], [], []>} : vector<16x128xbf16>, vector<128x128xbf16>, vector<16x128xf32> -> vector<16x128xf32>
      %c0_57 = arith.constant 0 : index
      %c0_58 = arith.constant 0 : index
      %58 = vector.load %arg14[%c0_57, %c0_58] : memref<1x128xf32, #tpu.memory_space<vmem>>, vector<1x128xf32>
      %59 = vector.broadcast %58 : vector<1x128xf32> to vector<16x128xf32>
      %60 = arith.addf %57, %59 : vector<16x128xf32>
      %c0_59 = arith.constant 0 : index
      %c0_60 = arith.constant 0 : index
      %61 = vector.load %arg15[%c0_59, %c0_60] : memref<16x128xf32, #tpu.memory_space<vmem>>, vector<16x128xf32>
      tpu.vector_store %arg15[%c0_59, %c0_60], %60 {strides = array<i32>} : memref<16x128xf32, #tpu.memory_space<vmem>>, vector<16x128xf32>,
    } else {
    }
    return
  }
  func.func @transform_0(%arg0: i32) -> (i32, i32) {
    %c0_i32 = arith.constant 0 : i32
    %c0_i32_0 = arith.constant 0 : i32
    %c0_i32_1 = arith.constant 0 : i32
    return %c0_i32, %c0_i32_0 : i32, i32
  }
  func.func @transform_1(%arg0: i32) -> (i32, i32) {
    %c0_i32 = arith.constant 0 : i32
    %c0_i32_0 = arith.constant 0 : i32
    return %arg0, %c0_i32 : i32, i32
  }
  func.func @transform_2(%arg0: i32) -> (i32, i32) {
    %c1_i32 = arith.constant 1 : i32
    %0 = arith.subi %c1_i32, %arg0 : i32
    %c0_i32 = arith.constant 0 : i32
    %c0_i32_0 = arith.constant 0 : i32
    return %0, %c0_i32 : i32, i32
  }
  func.func @transform_3(%arg0: i32) -> (i32, i32) {
    %c0_i32 = arith.constant 0 : i32
    %c0_i32_0 = arith.constant 0 : i32
    %c0_i32_1 = arith.constant 0 : i32
    return %c0_i32, %c0_i32_0 : i32, i32
  }
  func.func @transform_4(%arg0: i32) -> (i32, i32) {
    %c0_i32 = arith.constant 0 : i32
    %c0_i32_0 = arith.constant 0 : i32
    %c0_i32_1 = arith.constant 0 : i32
    return %c0_i32, %c0_i32_0 : i32, i32
  }
  func.func @transform_5(%arg0: i32) -> (i32, i32) {
    %c0_i32 = arith.constant 0 : i32
    %c0_i32_0 = arith.constant 0 : i32
    %c0_i32_1 = arith.constant 0 : i32
    return %c0_i32, %c0_i32_0 : i32, i32
  }
  func.func @transform_6(%arg0: i32) -> (i32, i32) {
    %c0_i32 = arith.constant 0 : i32
    %c0_i32_0 = arith.constant 0 : i32
    %c0_i32_1 = arith.constant 0 : i32
    return %c0_i32, %c0_i32_0 : i32, i32
  }
  func.func @transform_7(%arg0: i32) -> (i32, i32) {
    %c0_i32 = arith.constant 0 : i32
    %c0_i32_0 = arith.constant 0 : i32
    %c0_i32_1 = arith.constant 0 : i32
    return %c0_i32, %c0_i32_0 : i32, i32
  }
  func.func @transform_8(%arg0: i32) -> (i32, i32) {
    %c0_i32 = arith.constant 0 : i32
    %c0_i32_0 = arith.constant 0 : i32
    %c0_i32_1 = arith.constant 0 : i32
    return %c0_i32, %c0_i32_0 : i32, i32
  }
  func.func @transform_9(%arg0: i32) -> (i32, i32) {
    %c0_i32 = arith.constant 0 : i32
    %c0_i32_0 = arith.constant 0 : i32
    %c0_i32_1 = arith.constant 0 : i32
    return %c0_i32, %c0_i32_0 : i32, i32
  }
  func.func @transform_10(%arg0: i32) -> (i32, i32) {
    %c0_i32 = arith.constant 0 : i32
    %c0_i32_0 = arith.constant 0 : i32
    %c0_i32_1 = arith.constant 0 : i32
    return %c0_i32, %c0_i32_0 : i32, i32
  }
  func.func @transform_11(%arg0: i32) -> (i32, i32) {
    %c0_i32 = arith.constant 0 : i32
    %c0_i32_0 = arith.constant 0 : i32
    %c0_i32_1 = arith.constant 0 : i32
    return %c0_i32, %c0_i32_0 : i32, i32
  }
  func.func @transform_12(%arg0: i32) -> (i32, i32) {
    %c0_i32 = arith.constant 0 : i32
    %c0_i32_0 = arith.constant 0 : i32
    %c0_i32_1 = arith.constant 0 : i32
    return %c0_i32, %c0_i32_0 : i32, i32
  }
  func.func @transform_13(%arg0: i32) -> (i32, i32) {
    %c0_i32 = arith.constant 0 : i32
    %c0_i32_0 = arith.constant 0 : i32
    %c0_i32_1 = arith.constant 0 : i32
    return %c0_i32, %c0_i32_0 : i32, i32
  }
  func.func @transform_14(%arg0: i32) -> (i32, i32) {
    %c0_i32 = arith.constant 0 : i32
    %c0_i32_0 = arith.constant 0 : i32
    %c0_i32_1 = arith.constant 0 : i32
    return %c0_i32, %c0_i32_0 : i32, i32
  }
}

</mosaic_0001>

<llo_original>
// kernel: tpu_custom_call.1
$region0: #{tpu_custom_call.1}
  #allocation0 [shape = 'u32[]', space=smem, size = 0x4, offset = 0x4, fixed_abs, tag = 'smem constant byte address 0x4 - core index']
  #allocation1 [shape = 'u32[72,128]{1,0:T(1,128)}', space=vmem, size = 0x9000, scoped, tag = 'internal scratch']
  #allocation2 [shape = 'bf16[64,512]{1,0:T(8,128)(2,1)}', space=vmem, size = 0x10000, scoped, tag = 'scratch operand']
  #allocation3 [shape = 'bf16[64,512]{1,0:T(8,128)(2,1)}', space=vmem, size = 0x10000, scoped, tag = 'scratch operand']
  #allocation4 [shape = 'f32[16,128]{1,0:T(8,128)}', space=vmem, size = 0x2000, scoped, tag = 'scratch operand']
  #allocation5 [shape = 'f32[16,128]{1,0:T(8,128)}', space=vmem, size = 0x2000, scoped, tag = 'scratch operand']
  #allocation6 [shape = 'f32[16,128]{1,0:T(8,128)}', space=vmem, size = 0x2000, scoped, tag = 'scratch operand']
  #allocation7 [shape = 'f32[16,128]{1,0:T(8,128)}', space=vmem, size = 0x2000, scoped, tag = 'scratch operand']
  #allocation8 [shape = 'f32[16,128]{1,0:T(8,128)}', space=vmem, size = 0x2000, scoped, tag = 'scratch operand']
  #allocation9 [shape = 'f32[16,128]{1,0:T(8,128)}', space=vmem, size = 0x2000, scoped, tag = 'scratch operand']
  %s0 = inlined_call_operand.vmem [shape: s32[16,1], index: 0, kind: input, shape index: {}]
  %s1 = inlined_call_operand.vmem [shape: bf16[128,16], index: 1, kind: input, shape index: {}]
  %s2 = inlined_call_operand.vmem [shape: bf16[128,16], index: 2, kind: input, shape index: {}]
  %s3 = inlined_call_operand.hbm [shape: bf16[16,512], index: 3, kind: input, shape index: {}]
  %s4 = inlined_call_operand.hbm [shape: bf16[16,512], index: 4, kind: input, shape index: {}]
  %s5 = inlined_call_operand.vmem [shape: f32[1,512], index: 5, kind: input, shape index: {}]
  %s6 = inlined_call_operand.vmem [shape: f32[1,512], index: 6, kind: input, shape index: {}]
  %s7 = inlined_call_operand.hbm [shape: bf16[128,512], index: 7, kind: input, shape index: {}]
  %s8 = inlined_call_operand.hbm [shape: bf16[128,512], index: 8, kind: input, shape index: {}]
  %s9 = inlined_call_operand.vmem [shape: bf16[128,128], index: 9, kind: input, shape index: {}]
  %s10 = inlined_call_operand.vmem [shape: bf16[128,128], index: 10, kind: input, shape index: {}]
  %s11 = inlined_call_operand.vmem [shape: f32[1,128], index: 11, kind: input, shape index: {}]
  %s12 = inlined_call_operand.hbm [shape: bf16[128,128], index: 12, kind: input, shape index: {}]
  %s13 = inlined_call_operand.vmem [shape: f32[1,128], index: 13, kind: input, shape index: {}]
  %s14 = inlined_call_operand.hbm [shape: f32[16,128], index: 14, kind: output, shape index: {}]
  %s15 = sld [smem:[#allocation0]]
  $region124: #{tpu_custom_call.1} parent=0
    _
  %s17 = ssub.s32 1, %s15
  %s18 = scalar_select 0, %s17, %s15
  $region1: #{tpu_custom_call.1} parent=0
    #allocation10 [shape = 'u8[16384]{0}', space=vmem, size = 0x4000, scoped, tag = 'input window, operand 3, single buffered']
    #allocation11 [shape = 's32[2]{0}', space=sflag, size = 0x8, scoped, tag = 'scoped memory for tpu_custom_call.1']
    #allocation12 [shape = 's32[2]{0}', space=sflag, size = 0x8, scoped, tag = 'scoped memory for tpu_custom_call.1']
    #allocation13 [shape = 'u8[16384]{0}', space=vmem, size = 0x4000, scoped, tag = 'input window, operand 4, single buffered']
    #allocation14 [shape = 's32[1]{0}', space=sflag, size = 0x4, scoped, tag = 'scoped memory for tpu_custom_call.1']
    #allocation15 [shape = 'u8[131072]{0}', space=vmem, size = 0x20000, scoped, tag = 'input window, operand 7, single buffered']
    #allocation16 [shape = 'u8[131072]{0}', space=vmem, size = 0x20000, scoped, tag = 'input window, operand 8, single buffered']
    #allocation17 [shape = 's32[1]{0}', space=sflag, size = 0x4, scoped, tag = 'scoped memory for tpu_custom_call.1']
    #allocation18 [shape = 'u8[32768]{0}', space=vmem, size = 0x8000, scoped, tag = 'input window, operand 12, single buffered']
    #allocation19 [shape = 'u8[8192]{0}', space=vmem, size = 0x2000, scoped, tag = 'output window, operand 0, single buffered']
    %19 = vsyncpa [#allocation11], 0
    %20 = vsyncpa [#allocation14], 0
    %21 = vsyncpa [#allocation17], 0
    %22 = vsyncpa [#allocation12], 0
    loop: start=0, step=1, limit=4
    $region2: #{tpu_custom_call.1} parent=1 // loop_pre_header
      _
    $region3: #{tpu_custom_call.1} parent=1 // loop_header
      %s24 = sphi 0, %s28
      %p25 = scmp.ge.s32.totalorder %s24, 4
      %s32 = sphi 0, %s32
      %s34 = sphi 0, %s32
      %s35 = sphi 0, %s34
      %s49 = sphi 0, %s35
      %s55 = sphi 0, %s57
      %s58 = sphi 0, %s55
      %s59 = sphi 0, %s58
      %s75 = sphi 0, %s59
      %s83 = sphi 0, %s85
      %s86 = sphi 0, %s83
      %s87 = sphi 0, %s86
      %s103 = sphi 0, %s87
      %s107 = sphi 0, %s107
      %s109 = sphi 0, %s107
      %s110 = sphi 0, %s109
      %s124 = sphi 0, %s110
      %s128 = sphi 0, %s128
      %s130 = sphi 0, %s128
      %s131 = sphi 0, %s130
      %s145 = sphi 0, %s131
      %s149 = sphi 0, %s149
      %s151 = sphi 0, %s149
      %s152 = sphi 0, %s151
      %s166 = sphi 0, %s152
      %s170 = sphi 0, %s170
      %s172 = sphi 0, %s170
      %s173 = sphi 0, %s172
      %s187 = sphi 0, %s173
      %s191 = sphi 0, %s191
      %s193 = sphi 0, %s191
      %s194 = sphi 0, %s193
      %s208 = sphi 0, %s194
      %s212 = sphi 0, %s212
      %s214 = sphi 0, %s212
      %s215 = sphi 0, %s214
      %s229 = sphi 0, %s215
      %s233 = sphi 0, %s233
      %s235 = sphi 0, %s233
      %s236 = sphi 0, %s235
      %s250 = sphi 0, %s236
      %s254 = sphi 0, %s254
      %s256 = sphi 0, %s254
      %s257 = sphi 0, %s256
      %s271 = sphi 0, %s257
      %s275 = sphi 0, %s275
      %s277 = sphi 0, %s275
      %s278 = sphi 0, %s277
      %s292 = sphi 0, %s278
      %s296 = sphi 0, %s296
      %s298 = sphi 0, %s296
      %s299 = sphi 0, %s298
      %s313 = sphi 0, %s299
      %s317 = sphi 0, %s317
      %s319 = sphi 0, %s317
      %s320 = sphi 0, %s319
      %s334 = sphi 0, %s320
      %s338 = sphi 0, %s338
      %s340 = sphi 0, %s338
      %s341 = sphi 0, %s340
      %s355 = sphi 0, %s341
    $region4: #{tpu_custom_call.1} parent=1 // loop_header_branch
      %27 = sbr.rel (%p25) target = $region8
    $region5: #{tpu_custom_call.1} parent=1 // loop_body
      %s29 = ssub.s32 %s24, 1
      %s30 = ssub.s32 %s24, 2
      %s31 = sadd.s32 %s24, 1
      %s33 = sadd.s32 %s32, 1
      %p36 = scmp.eq.s32.totalorder %s24, 1
      %p37 = scmp.ne.s32.totalorder %s32, %s34
      %p38 = scmp.eq.s32.totalorder %s24, 0
      %p39 = por %p37, %p38
      %p40 = scmp.ne.s32.totalorder %s32, %s34
      %p41 = scmp.eq.s32.totalorder %s29, 1
      %p42 = por %p40, %p41
      %p43 = scmp.ne.s32.totalorder %s34, %s35
      %p44 = scmp.eq.s32.totalorder %s29, 0
      %p45 = por %p43, %p44
      %p46 = scmp.ne.s32.totalorder %s34, %s35
      %p47 = scmp.eq.s32.totalorder %s30, 1
      %p48 = por %p46, %p47
      %p50 = scmp.ne.s32.totalorder %s35, %s49
      %p51 = scmp.eq.s32.totalorder %s30, 0
      %p52 = por %p50, %p51
      %s53 = ssub.s32 %s24, %s31
      %p54 = scmp.eq.s32.totalorder %s53, 0
      %s56 = sadd.s32 %s55, 1
      %s57 = scalar_select %p54, %s55, %s56
      %p60 = pneg %p54
      %p61 = scmp.eq.s32.totalorder %s24, 1
      %p62 = por %p60, %p61
      %p63 = scmp.ne.s32.totalorder %s55, %s58
      %p64 = scmp.eq.s32.totalorder %s24, 0
      %p65 = por %p63, %p64
      %p66 = scmp.ne.s32.totalorder %s55, %s58
      %p67 = scmp.eq.s32.totalorder %s29, 1
      %p68 = por %p66, %p67
      %p69 = scmp.ne.s32.totalorder %s58, %s59
      %p70 = scmp.eq.s32.totalorder %s29, 0
      %p71 = por %p69, %p70
      %p72 = scmp.ne.s32.totalorder %s58, %s59
      %p73 = scmp.eq.s32.totalorder %s30, 1
      %p74 = por %p72, %p73
      %p76 = scmp.ne.s32.totalorder %s59, %s75
      %p77 = scmp.eq.s32.totalorder %s30, 0
      %p78 = por %p76, %p77
      %s79 = ssub.s32 1, %s24
      %s80 = ssub.s32 1, %s31
      %s81 = ssub.s32 %s79, %s80
      %p82 = scmp.eq.s32.totalorder %s81, 0
      %s84 = sadd.s32 %s83, 1
      %s85 = scalar_select %p82, %s83, %s84
      %p88 = pneg %p82
      %p89 = scmp.eq.s32.totalorder %s24, 1
      %p90 = por %p88, %p89
      %p91 = scmp.ne.s32.totalorder %s83, %s86
      %p92 = scmp.eq.s32.totalorder %s24, 0
      %p93 = por %p91, %p92
      %p94 = scmp.ne.s32.totalorder %s83, %s86
      %p95 = scmp.eq.s32.totalorder %s29, 1
      %p96 = por %p94, %p95
      %p97 = scmp.ne.s32.totalorder %s86, %s87
      %p98 = scmp.eq.s32.totalorder %s29, 0
      %p99 = por %p97, %p98
      %p100 = scmp.ne.s32.totalorder %s86, %s87
      %p101 = scmp.eq.s32.totalorder %s30, 1
      %p102 = por %p100, %p101
      %p104 = scmp.ne.s32.totalorder %s87, %s103
      %p105 = scmp.eq.s32.totalorder %s30, 0
      %p106 = por %p104, %p105
      %s108 = sadd.s32 %s107, 1
      %p111 = scmp.eq.s32.totalorder %s24, 1
      %p112 = scmp.ne.s32.totalorder %s107, %s109
      %p113 = scmp.eq.s32.totalorder %s24, 0
      %p114 = por %p112, %p113
      %p115 = scmp.ne.s32.totalorder %s107, %s109
      %p116 = scmp.eq.s32.totalorder %s29, 1
      %p117 = por %p115, %p116
      %p118 = scmp.ne.s32.totalorder %s109, %s110
      %p119 = scmp.eq.s32.totalorder %s29, 0
      %p120 = por %p118, %p119
      %p121 = scmp.ne.s32.totalorder %s109, %s110
      %p122 = scmp.eq.s32.totalorder %s30, 1
      %p123 = por %p121, %p122
      %p125 = scmp.ne.s32.totalorder %s110, %s124
      %p126 = scmp.eq.s32.totalorder %s30, 0
      %p127 = por %p125, %p126
      %s129 = sadd.s32 %s128, 1
      %p132 = scmp.eq.s32.totalorder %s24, 1
      %p133 = scmp.ne.s32.totalorder %s128, %s130
      %p134 = scmp.eq.s32.totalorder %s24, 0
      %p135 = por %p133, %p134
      %p136 = scmp.ne.s32.totalorder %s128, %s130
      %p137 = scmp.eq.s32.totalorder %s29, 1
      %p138 = por %p136, %p137
      %p139 = scmp.ne.s32.totalorder %s130, %s131
      %p140 = scmp.eq.s32.totalorder %s29, 0
      %p141 = por %p139, %p140
      %p142 = scmp.ne.s32.totalorder %s130, %s131
      %p143 = scmp.eq.s32.totalorder %s30, 1
      %p144 = por %p142, %p143
      %p146 = scmp.ne.s32.totalorder %s131, %s145
      %p147 = scmp.eq.s32.totalorder %s30, 0
      %p148 = por %p146, %p147
      %s150 = sadd.s32 %s149, 1
      %p153 = scmp.eq.s32.totalorder %s24, 1
      %p154 = scmp.ne.s32.totalorder %s149, %s151
      %p155 = scmp.eq.s32.totalorder %s24, 0
      %p156 = por %p154, %p155
      %p157 = scmp.ne.s32.totalorder %s149, %s151
      %p158 = scmp.eq.s32.totalorder %s29, 1
      %p159 = por %p157, %p158
      %p160 = scmp.ne.s32.totalorder %s151, %s152
      %p161 = scmp.eq.s32.totalorder %s29, 0
      %p162 = por %p160, %p161
      %p163 = scmp.ne.s32.totalorder %s151, %s152
      %p164 = scmp.eq.s32.totalorder %s30, 1
      %p165 = por %p163, %p164
      %p167 = scmp.ne.s32.totalorder %s152, %s166
      %p168 = scmp.eq.s32.totalorder %s30, 0
      %p169 = por %p167, %p168
      %s171 = sadd.s32 %s170, 1
      %p174 = scmp.eq.s32.totalorder %s24, 1
      %p175 = scmp.ne.s32.totalorder %s170, %s172
      %p176 = scmp.eq.s32.totalorder %s24, 0
      %p177 = por %p175, %p176
      %p178 = scmp.ne.s32.totalorder %s170, %s172
      %p179 = scmp.eq.s32.totalorder %s29, 1
      %p180 = por %p178, %p179
      %p181 = scmp.ne.s32.totalorder %s172, %s173
      %p182 = scmp.eq.s32.totalorder %s29, 0
      %p183 = por %p181, %p182
      %p184 = scmp.ne.s32.totalorder %s172, %s173
      %p185 = scmp.eq.s32.totalorder %s30, 1
      %p186 = por %p184, %p185
      %p188 = scmp.ne.s32.totalorder %s173, %s187
      %p189 = scmp.eq.s32.totalorder %s30, 0
      %p190 = por %p188, %p189
      %s192 = sadd.s32 %s191, 1
      %p195 = scmp.eq.s32.totalorder %s24, 1
      %p196 = scmp.ne.s32.totalorder %s191, %s193
      %p197 = scmp.eq.s32.totalorder %s24, 0
      %p198 = por %p196, %p197
      %p199 = scmp.ne.s32.totalorder %s191, %s193
      %p200 = scmp.eq.s32.totalorder %s29, 1
      %p201 = por %p199, %p200
      %p202 = scmp.ne.s32.totalorder %s193, %s194
      %p203 = scmp.eq.s32.totalorder %s29, 0
      %p204 = por %p202, %p203
      %p205 = scmp.ne.s32.totalorder %s193, %s194
      %p206 = scmp.eq.s32.totalorder %s30, 1
      %p207 = por %p205, %p206
      %p209 = scmp.ne.s32.totalorder %s194, %s208
      %p210 = scmp.eq.s32.totalorder %s30, 0
      %p211 = por %p209, %p210
      %s213 = sadd.s32 %s212, 1
      %p216 = scmp.eq.s32.totalorder %s24, 1
      %p217 = scmp.ne.s32.totalorder %s212, %s214
      %p218 = scmp.eq.s32.totalorder %s24, 0
      %p219 = por %p217, %p218
      %p220 = scmp.ne.s32.totalorder %s212, %s214
      %p221 = scmp.eq.s32.totalorder %s29, 1
      %p222 = por %p220, %p221
      %p223 = scmp.ne.s32.totalorder %s214, %s215
      %p224 = scmp.eq.s32.totalorder %s29, 0
      %p225 = por %p223, %p224
      %p226 = scmp.ne.s32.totalorder %s214, %s215
      %p227 = scmp.eq.s32.totalorder %s30, 1
      %p228 = por %p226, %p227
      %p230 = scmp.ne.s32.totalorder %s215, %s229
      %p231 = scmp.eq.s32.totalorder %s30, 0
      %p232 = por %p230, %p231
      %s234 = sadd.s32 %s233, 1
      %p237 = scmp.eq.s32.totalorder %s24, 1
      %p238 = scmp.ne.s32.totalorder %s233, %s235
      %p239 = scmp.eq.s32.totalorder %s24, 0
      %p240 = por %p238, %p239
      %p241 = scmp.ne.s32.totalorder %s233, %s235
      %p242 = scmp.eq.s32.totalorder %s29, 1
      %p243 = por %p241, %p242
      %p244 = scmp.ne.s32.totalorder %s235, %s236
      %p245 = scmp.eq.s32.totalorder %s29, 0
      %p246 = por %p244, %p245
      %p247 = scmp.ne.s32.totalorder %s235, %s236
      %p248 = scmp.eq.s32.totalorder %s30, 1
      %p249 = por %p247, %p248
      %p251 = scmp.ne.s32.totalorder %s236, %s250
      %p252 = scmp.eq.s32.totalorder %s30, 0
      %p253 = por %p251, %p252
      %s255 = sadd.s32 %s254, 1
      %p258 = scmp.eq.s32.totalorder %s24, 1
      %p259 = scmp.ne.s32.totalorder %s254, %s256
      %p260 = scmp.eq.s32.totalorder %s24, 0
      %p261 = por %p259, %p260
      %p262 = scmp.ne.s32.totalorder %s254, %s256
      %p263 = scmp.eq.s32.totalorder %s29, 1
      %p264 = por %p262, %p263
      %p265 = scmp.ne.s32.totalorder %s256, %s257
      %p266 = scmp.eq.s32.totalorder %s29, 0
      %p267 = por %p265, %p266
      %p268 = scmp.ne.s32.totalorder %s256, %s257
      %p269 = scmp.eq.s32.totalorder %s30, 1
      %p270 = por %p268, %p269
      %p272 = scmp.ne.s32.totalorder %s257, %s271
      %p273 = scmp.eq.s32.totalorder %s30, 0
      %p274 = por %p272, %p273
      %s276 = sadd.s32 %s275, 1
      %p279 = scmp.eq.s32.totalorder %s24, 1
      %p280 = scmp.ne.s32.totalorder %s275, %s277
      %p281 = scmp.eq.s32.totalorder %s24, 0
      %p282 = por %p280, %p281
      %p283 = scmp.ne.s32.totalorder %s275, %s277
      %p284 = scmp.eq.s32.totalorder %s29, 1
      %p285 = por %p283, %p284
      %p286 = scmp.ne.s32.totalorder %s277, %s278
      %p287 = scmp.eq.s32.totalorder %s29, 0
      %p288 = por %p286, %p287
      %p289 = scmp.ne.s32.totalorder %s277, %s278
      %p290 = scmp.eq.s32.totalorder %s30, 1
      %p291 = por %p289, %p290
      %p293 = scmp.ne.s32.totalorder %s278, %s292
      %p294 = scmp.eq.s32.totalorder %s30, 0
      %p295 = por %p293, %p294
      %s297 = sadd.s32 %s296, 1
      %p300 = scmp.eq.s32.totalorder %s24, 1
      %p301 = scmp.ne.s32.totalorder %s296, %s298
      %p302 = scmp.eq.s32.totalorder %s24, 0
      %p303 = por %p301, %p302
      %p304 = scmp.ne.s32.totalorder %s296, %s298
      %p305 = scmp.eq.s32.totalorder %s29, 1
      %p306 = por %p304, %p305
      %p307 = scmp.ne.s32.totalorder %s298, %s299
      %p308 = scmp.eq.s32.totalorder %s29, 0
      %p309 = por %p307, %p308
      %p310 = scmp.ne.s32.totalorder %s298, %s299
      %p311 = scmp.eq.s32.totalorder %s30, 1
      %p312 = por %p310, %p311
      %p314 = scmp.ne.s32.totalorder %s299, %s313
      %p315 = scmp.eq.s32.totalorder %s30, 0
      %p316 = por %p314, %p315
      %s318 = sadd.s32 %s317, 1
      %p321 = scmp.eq.s32.totalorder %s24, 1
      %p322 = scmp.ne.s32.totalorder %s317, %s319
      %p323 = scmp.eq.s32.totalorder %s24, 0
      %p324 = por %p322, %p323
      %p325 = scmp.ne.s32.totalorder %s317, %s319
      %p326 = scmp.eq.s32.totalorder %s29, 1
      %p327 = por %p325, %p326
      %p328 = scmp.ne.s32.totalorder %s319, %s320
      %p329 = scmp.eq.s32.totalorder %s29, 0
      %p330 = por %p328, %p329
      %p331 = scmp.ne.s32.totalorder %s319, %s320
      %p332 = scmp.eq.s32.totalorder %s30, 1
      %p333 = por %p331, %p332
      %p335 = scmp.ne.s32.totalorder %s320, %s334
      %p336 = scmp.eq.s32.totalorder %s30, 0
      %p337 = por %p335, %p336
      %s339 = sadd.s32 %s338, 1
      %p342 = scmp.eq.s32.totalorder %s24, 1
      %p343 = scmp.ne.s32.totalorder %s338, %s340
      %p344 = scmp.eq.s32.totalorder %s24, 0
      %p345 = por %p343, %p344
      %p346 = scmp.ne.s32.totalorder %s338, %s340
      %p347 = scmp.eq.s32.totalorder %s29, 1
      %p348 = por %p346, %p347
      %p349 = scmp.ne.s32.totalorder %s340, %s341
      %p350 = scmp.eq.s32.totalorder %s29, 0
      %p351 = por %p349, %p350
      %p352 = scmp.ne.s32.totalorder %s340, %s341
      %p353 = scmp.eq.s32.totalorder %s30, 1
      %p354 = por %p352, %p353
      %p356 = scmp.ne.s32.totalorder %s341, %s355
      %p357 = scmp.eq.s32.totalorder %s30, 0
      %p358 = por %p356, %p357
      %p359 = scmp.le.s32.totalorder 1, %s24
      %p360 = scmp.lt.s32.totalorder %s24, 3
      %p361 = pnand %p359, %p360
      %p362 = pneg %p361
      // Predicated region
      $region9: #{tpu_custom_call.1} parent=5 // pred_check
        _
      $region10: #{tpu_custom_call.1} parent=5 // pred_check_branch
        %364 = sbr.rel (%p361) target = $region12
      $region11: #{tpu_custom_call.1} parent=5 // pred_region
        %s365 = ssub.s32 %s24, 1
        // Predicated region
        $region13: #{tpu_custom_call.1} parent=11 // pred_check
          %p366 = pneg %p45
        $region14: #{tpu_custom_call.1} parent=11 // pred_check_branch
          %368 = sbr.rel (%p366) target = $region16
        $region15: #{tpu_custom_call.1} parent=11 // pred_region
          _
        $region16: #{tpu_custom_call.1} parent=11 // pred_fallthru
          _
        // Predicated region
        $region17: #{tpu_custom_call.1} parent=11 // pred_check
          %p369 = pneg %p120
        $region18: #{tpu_custom_call.1} parent=11 // pred_check_branch
          %371 = sbr.rel (%p369) target = $region20
        $region19: #{tpu_custom_call.1} parent=11 // pred_region
          %373 = vsyncadd [#allocation11], 0
          %s374 = sshll.u32 %s3, 4
          %s375 = int_to_ptr.hbm [resolvable:$true] %s374
          %s376 = sshll.u32 [#allocation10], 4
          %s377 = int_to_ptr.vmem [resolvable:$true] %s376
          %382 = dma.hbm_to_vmem [thread:$0]  %s375, 512, %s377, [#allocation11], 256, 256, 16
        $region20: #{tpu_custom_call.1} parent=11 // pred_fallthru
          _
        // Predicated region
        $region21: #{tpu_custom_call.1} parent=11 // pred_check
          %p383 = pneg %p141
        $region22: #{tpu_custom_call.1} parent=11 // pred_check_branch
          %385 = sbr.rel (%p383) target = $region24
        $region23: #{tpu_custom_call.1} parent=11 // pred_region
          %387 = vsyncadd [#allocation14], 0
          %s388 = sshll.u32 %s4, 4
          %s389 = int_to_ptr.hbm [resolvable:$true] %s388
          %s390 = sshll.u32 [#allocation13], 4
          %s391 = int_to_ptr.vmem [resolvable:$true] %s390
          %396 = dma.hbm_to_vmem [thread:$0]  %s389, 512, %s391, [#allocation14], 256, 256, 16
        $region24: #{tpu_custom_call.1} parent=11 // pred_fallthru
          _
        // Predicated region
        $region25: #{tpu_custom_call.1} parent=11 // pred_check
          %p397 = pneg %p162
        $region26: #{tpu_custom_call.1} parent=11 // pred_check_branch
          %399 = sbr.rel (%p397) target = $region28
        $region27: #{tpu_custom_call.1} parent=11 // pred_region
          _
        $region28: #{tpu_custom_call.1} parent=11 // pred_fallthru
          _
        // Predicated region
        $region29: #{tpu_custom_call.1} parent=11 // pred_check
          %p400 = pneg %p183
        $region30: #{tpu_custom_call.1} parent=11 // pred_check_branch
          %402 = sbr.rel (%p400) target = $region32
        $region31: #{tpu_custom_call.1} parent=11 // pred_region
          _
        $region32: #{tpu_custom_call.1} parent=11 // pred_fallthru
          _
        // Predicated region
        $region33: #{tpu_custom_call.1} parent=11 // pred_check
          %p403 = pneg %p204
        $region34: #{tpu_custom_call.1} parent=11 // pred_check_branch
          %405 = sbr.rel (%p403) target = $region36
        $region35: #{tpu_custom_call.1} parent=11 // pred_region
          %407 = vsyncadd [#allocation14], 0
          %s408 = sshll.u32 %s7, 4
          %s409 = int_to_ptr.hbm [resolvable:$true] %s408
          %s410 = sshll.u32 [#allocation15], 4
          %s411 = int_to_ptr.vmem [resolvable:$true] %s410
          %416 = dma.hbm_to_vmem [thread:$0]  %s409, 4096, %s411, [#allocation14], 256, 256, 16
        $region36: #{tpu_custom_call.1} parent=11 // pred_fallthru
          _
        // Predicated region
        $region37: #{tpu_custom_call.1} parent=11 // pred_check
          %p417 = pneg %p225
        $region38: #{tpu_custom_call.1} parent=11 // pred_check_branch
          %419 = sbr.rel (%p417) target = $region40
        $region39: #{tpu_custom_call.1} parent=11 // pred_region
          %421 = vsyncadd [#allocation17], 0
          %s422 = sshll.u32 %s8, 4
          %s423 = int_to_ptr.hbm [resolvable:$true] %s422
          %s424 = sshll.u32 [#allocation16], 4
          %s425 = int_to_ptr.vmem [resolvable:$true] %s424
          %430 = dma.hbm_to_vmem [thread:$0]  %s423, 4096, %s425, [#allocation17], 256, 256, 16
        $region40: #{tpu_custom_call.1} parent=11 // pred_fallthru
          _
        // Predicated region
        $region41: #{tpu_custom_call.1} parent=11 // pred_check
          %p431 = pneg %p246
        $region42: #{tpu_custom_call.1} parent=11 // pred_check_branch
          %433 = sbr.rel (%p431) target = $region44
        $region43: #{tpu_custom_call.1} parent=11 // pred_region
          _
        $region44: #{tpu_custom_call.1} parent=11 // pred_fallthru
          _
        // Predicated region
        $region45: #{tpu_custom_call.1} parent=11 // pred_check
          %p434 = pneg %p267
        $region46: #{tpu_custom_call.1} parent=11 // pred_check_branch
          %436 = sbr.rel (%p434) target = $region48
        $region47: #{tpu_custom_call.1} parent=11 // pred_region
          _
        $region48: #{tpu_custom_call.1} parent=11 // pred_fallthru
          _
        // Predicated region
        $region49: #{tpu_custom_call.1} parent=11 // pred_check
          %p437 = pneg %p288
        $region50: #{tpu_custom_call.1} parent=11 // pred_check_branch
          %439 = sbr.rel (%p437) target = $region52
        $region51: #{tpu_custom_call.1} parent=11 // pred_region
          _
        $region52: #{tpu_custom_call.1} parent=11 // pred_fallthru
          _
        // Predicated region
        $region53: #{tpu_custom_call.1} parent=11 // pred_check
          %p440 = pneg %p309
        $region54: #{tpu_custom_call.1} parent=11 // pred_check_branch
          %442 = sbr.rel (%p440) target = $region56
        $region55: #{tpu_custom_call.1} parent=11 // pred_region
          %444 = vsyncadd [#allocation17], 0
          %s445 = sshll.u32 %s12, 4
          %s446 = int_to_ptr.hbm [resolvable:$true] %s445
          %s447 = sshll.u32 [#allocation18], 4
          %s448 = int_to_ptr.vmem [resolvable:$true] %s447
          %453 = dma.hbm_to_vmem [thread:$0]  %s446, 1024, %s448, [#allocation17], 64, 64, 4
        $region56: #{tpu_custom_call.1} parent=11 // pred_fallthru
          _
        // Predicated region
        $region57: #{tpu_custom_call.1} parent=11 // pred_check
          %p454 = pneg %p330
        $region58: #{tpu_custom_call.1} parent=11 // pred_check_branch
          %456 = sbr.rel (%p454) target = $region60
        $region59: #{tpu_custom_call.1} parent=11 // pred_region
          _
        $region60: #{tpu_custom_call.1} parent=11 // pred_fallthru
          _
      $region12: #{tpu_custom_call.1} parent=5 // pred_fallthru
        _
      %p457 = scmp.lt.s32.totalorder %s24, 2
      // Predicated region
      $region61: #{tpu_custom_call.1} parent=5 // pred_check
        %p458 = pneg %p457
      $region62: #{tpu_custom_call.1} parent=5 // pred_check_branch
        %460 = sbr.rel (%p458) target = $region64
      $region63: #{tpu_custom_call.1} parent=5 // pred_region
        // Predicated region
        $region65: #{tpu_custom_call.1} parent=63 // pred_check
          %p461 = pneg %p65
        $region66: #{tpu_custom_call.1} parent=63 // pred_check_branch
          %463 = sbr.rel (%p461) target = $region68
        $region67: #{tpu_custom_call.1} parent=63 // pred_region
          %s464 = smul.u32 8, %s24
          %p465 = scmp.lt.s32.totalorder %s464, 15
          %s466 = scalar_select %p465, %s464, 15
          %s467 = smul.addr %s466, 4
          %s468 = scalar_lea.vmem %s1, %s467
          %s469 = smul.u32 8, %s24
        $region68: #{tpu_custom_call.1} parent=63 // pred_fallthru
          _
        // Predicated region
        $region69: #{tpu_custom_call.1} parent=63 // pred_check
          %p470 = pneg %p93
        $region70: #{tpu_custom_call.1} parent=63 // pred_check_branch
          %472 = sbr.rel (%p470) target = $region72
        $region71: #{tpu_custom_call.1} parent=63 // pred_region
          %s473 = ssub.s32 1, %s24
          %s474 = smul.u32 8, %s473
          %p475 = scmp.lt.s32.totalorder %s474, 15
          %s476 = scalar_select %p475, %s474, 15
          %s477 = smul.addr %s476, 4
          %s478 = scalar_lea.vmem %s2, %s477
          %s479 = ssub.s32 1, %s24
          %s480 = smul.u32 8, %s479
        $region72: #{tpu_custom_call.1} parent=63 // pred_fallthru
          _
      $region64: #{tpu_custom_call.1} parent=5 // pred_fallthru
        _
      %p481 = scmp.le.s32.totalorder 1, %s24
      %p482 = scmp.lt.s32.totalorder %s24, 3
      %p483 = pnand %p481, %p482
      %p484 = pneg %p483
      // Predicated region
      $region73: #{tpu_custom_call.1} parent=5 // pred_check
        _
      $region74: #{tpu_custom_call.1} parent=5 // pred_check_branch
        %486 = sbr.rel (%p483) target = $region76
      $region75: #{tpu_custom_call.1} parent=5 // pred_region
        %s487 = ssub.s32 %s24, 1
        // Predicated region
        $region77: #{tpu_custom_call.1} parent=75 // pred_check
          %p488 = pneg %p120
        $region78: #{tpu_custom_call.1} parent=75 // pred_check_branch
          %490 = sbr.rel (%p488) target = $region80
        $region79: #{tpu_custom_call.1} parent=75 // pred_region
          %492 = dma.done [#allocation11], 512
        $region80: #{tpu_custom_call.1} parent=75 // pred_fallthru
          _
        // Predicated region
        $region81: #{tpu_custom_call.1} parent=75 // pred_check
          %p493 = pneg %p141
        $region82: #{tpu_custom_call.1} parent=75 // pred_check_branch
          %495 = sbr.rel (%p493) target = $region84
        $region83: #{tpu_custom_call.1} parent=75 // pred_region
          %497 = dma.done [#allocation14], 512
        $region84: #{tpu_custom_call.1} parent=75 // pred_fallthru
          _
        // Predicated region
        $region85: #{tpu_custom_call.1} parent=75 // pred_check
          %p498 = pneg %p204
        $region86: #{tpu_custom_call.1} parent=75 // pred_check_branch
          %500 = sbr.rel (%p498) target = $region88
        $region87: #{tpu_custom_call.1} parent=75 // pred_region
          %502 = dma.done [#allocation14], 4096
        $region88: #{tpu_custom_call.1} parent=75 // pred_fallthru
          _
        // Predicated region
        $region89: #{tpu_custom_call.1} parent=75 // pred_check
          %p503 = pneg %p225
        $region90: #{tpu_custom_call.1} parent=75 // pred_check_branch
          %505 = sbr.rel (%p503) target = $region92
        $region91: #{tpu_custom_call.1} parent=75 // pred_region
          %507 = dma.done [#allocation17], 4096
        $region92: #{tpu_custom_call.1} parent=75 // pred_fallthru
          _
        // Predicated region
        $region93: #{tpu_custom_call.1} parent=75 // pred_check
          %p508 = pneg %p309
        $region94: #{tpu_custom_call.1} parent=75 // pred_check_branch
          %510 = sbr.rel (%p508) target = $region96
        $region95: #{tpu_custom_call.1} parent=75 // pred_region
          %512 = dma.done [#allocation17], 1024
        $region96: #{tpu_custom_call.1} parent=75 // pred_fallthru
          _
        %p513 = pneg %p45
        %p514 = pneg %p42
        %s515 = smul.u32 8, %s29
        %p516 = scmp.lt.s32.totalorder %s515, 15
        %s517 = scalar_select %p516, %s515, 15
        %s518 = smul.addr %s517, 4
        %s519 = scalar_lea.vmem %s1, %s518
        %p520 = pneg %p71
        %p521 = pneg %p68
        %s522 = ssub.s32 1, %s29
        %s523 = smul.u32 8, %s522
        %p524 = scmp.lt.s32.totalorder %s523, 15
        %s525 = scalar_select %p524, %s523, 15
        %s526 = smul.addr %s525, 4
        %s527 = scalar_lea.vmem %s2, %s526
        %p528 = pneg %p99
        %p529 = pneg %p96
        %p530 = pneg %p120
        %p531 = pneg %p117
        %p532 = pneg %p141
        %p533 = pneg %p138
        %p534 = pneg %p162
        %p535 = pneg %p159
        %p536 = pneg %p183
        %p537 = pneg %p180
        %p538 = pneg %p204
        %p539 = pneg %p201
        %p540 = pneg %p225
        %p541 = pneg %p222
        %p542 = pneg %p246
        %p543 = pneg %p243
        %p544 = pneg %p267
        %p545 = pneg %p264
        %p546 = pneg %p288
        %p547 = pneg %p285
        %p548 = pneg %p309
        %p549 = pneg %p306
        %p550 = pneg %p330
        %p551 = pneg %p327
        %p552 = pneg %p351
        %p553 = pneg %p348
        %s554 = smul.u32 8, %s29
        %p555 = scmp.lt.s32.totalorder %s554, 15
        %s556 = scalar_select %p555, %s554, 15
        %s557 = smul.addr %s556, 4
        %s558 = scalar_lea.vmem %s1, %s557
        %s559 = smul.u32 8, %s29
        %s560 = ssub.s32 1, %s29
        %s561 = smul.u32 8, %s560
        %p562 = scmp.lt.s32.totalorder %s561, 15
        %s563 = scalar_select %p562, %s561, 15
        %s564 = smul.addr %s563, 4
        %s565 = scalar_lea.vmem %s2, %s564
        %s566 = ssub.s32 1, %s29
        %s567 = smul.u32 8, %s566
        %p569 = scmp.eq.s32.totalorder %s29, 0
        // Predicated region
        $region97: #{tpu_custom_call.1} parent=75 // pred_check
          %p570 = pneg %p569
        $region98: #{tpu_custom_call.1} parent=75 // pred_check_branch
          %572 = sbr.rel (%p570) target = $region100
        $region99: #{tpu_custom_call.1} parent=75 // pred_region
          %573 = vst [vmem:[#allocation4] sm:$0xff] 0.0
          %574 = vst [vmem:[#allocation4 + $0x8] sm:$0xff] 0.0
          %575 = vst [vmem:[#allocation5] sm:$0xff] 0.0
          %576 = vst [vmem:[#allocation5 + $0x8] sm:$0xff] 0.0
          %577 = vst [vmem:[#allocation6] sm:$0xff] 0.0
          %578 = vst [vmem:[#allocation6 + $0x8] sm:$0xff] 0.0
          %579 = vst [vmem:[#allocation7] sm:$0xff] 0.0
          %580 = vst [vmem:[#allocation7 + $0x8] sm:$0xff] 0.0
          %581 = vst [vmem:[#allocation8] sm:$0xff] 0.0
          %582 = vst [vmem:[#allocation8 + $0x8] sm:$0xff] 0.0
          %583 = vst [vmem:[#allocation9] sm:$0xff] 0.0
          %584 = vst [vmem:[#allocation9 + $0x8] sm:$0xff] 0.0
        $region100: #{tpu_custom_call.1} parent=75 // pred_fallthru
          _
        %v585 = vld [vmem:[%s558] sm:$0xf]
        %v586 = vld [vmem:[%s558 + $0x4] sm:$0xf]
        %v587 = vld [vmem:[%s558 + $0x8] sm:$0xf]
        %v588 = vld [vmem:[%s558 + $0xc] sm:$0xf]
        %v589 = vld [vmem:[%s558 + $0x10] sm:$0xf]
        %v590 = vld [vmem:[%s558 + $0x14] sm:$0xf]
        %v591 = vld [vmem:[%s558 + $0x18] sm:$0xf]
        %v592 = vld [vmem:[%s558 + $0x1c] sm:$0xf]
        %v593 = vld [vmem:[#allocation10] sm:$0xff]
        %v594 = vld [vmem:[#allocation10 + $0x8] sm:$0xff]
        %v595 = vld [vmem:[#allocation10 + $0x10] sm:$0xff]
        %v596 = vld [vmem:[#allocation10 + $0x18] sm:$0xff]
        %v597 = vld [vmem:[%s5] sm:$0xf]
        %v599 = vperm.slane %v597, 0
        %v600 = vperm.slane %v597, 1
        %v601 = vperm.slane %v597, 2
        %v602 = vperm.slane %v597, 3
        %v615 = vunpack.c.l.b16 %v585
        %v616 = vunpack.c.l.b16 %v586
        %v617 = vunpack.c.l.b16 %v587
        %v618 = vunpack.c.l.b16 %v588
        %v619 = vunpack.c.l.b16 %v589
        %v620 = vunpack.c.l.b16 %v590
        %v621 = vunpack.c.l.b16 %v591
        %v622 = vunpack.c.l.b16 %v592
        %v623 = vpack.c.b16 %v616, %v615
        %v624 = vpack.c.b16 %v618, %v617
        %v625 = vpack.c.b16 %v620, %v619
        %v626 = vpack.c.b16 %v622, %v621
        %v631 = vunpack.c.l.b16 %v593
        %v632 = vunpack.c.h.b16 %v593
        %v633 = vunpack.c.l.b16 %v594
        %v634 = vunpack.c.h.b16 %v594
        %v635 = vunpack.c.l.b16 %v595
        %v636 = vunpack.c.h.b16 %v595
        %v637 = vunpack.c.l.b16 %v596
        %v638 = vunpack.c.h.b16 %v596
        %v639 = vpack.c.b16 %v635, %v631
        %v640 = vpack.c.b16 %v636, %v632
        %v641 = vpack.c.b16 %v637, %v633
        %v642 = vpack.c.b16 %v638, %v634
        %vm647 = vcmask 130048
        %v649 = vsel %vm647, %v623, 0
        %v652 = vsel %vm647, %v624, 0
        %v655 = vsel %vm647, %v625, 0
        %v658 = vsel %vm647, %v626, 0
        %660 = vmatpush.bf16.msra.mxu0 0
        %661 = vmatpush.bf16.msra.mxu0 0
        %662 = vmatpush.bf16.msra.mxu0 0
        %663 = vmatpush.bf16.msra.mxu0 0
        %664 = vmatpush.bf16.msra.mxu0 0
        %665 = vmatpush.bf16.msra.mxu0 0
        %666 = vmatpush.bf16.msra.mxu0 0
        %667 = vmatpush.bf16.msra.mxu0 %v639
        %668 = vmatmul.bf16.gmra.mxu0 %v649
        %v669 = vpop.f32.mrf.mxu0
        %v670 = vadd.f32 %v599, %v669
        %v671 = vpop.f32.mrf.mxu0
        %v672 = vadd.f32 %v599, %v671
        %673 = vmatmul.bf16.gmra.mxu0 %v652
        %v674 = vpop.f32.mrf.mxu0
        %v675 = vadd.f32 %v599, %v674
        %v676 = vpop.f32.mrf.mxu0
        %v677 = vadd.f32 %v599, %v676
        %678 = vmatmul.bf16.gmra.mxu0 %v655
        %v679 = vpop.f32.mrf.mxu0
        %v680 = vadd.f32 %v599, %v679
        %v681 = vpop.f32.mrf.mxu0
        %v682 = vadd.f32 %v599, %v681
        %683 = vmatmul.bf16.gmra.mxu0 %v658
        %v684 = vpop.f32.mrf.mxu0
        %v685 = vadd.f32 %v599, %v684
        %v686 = vpop.f32.mrf.mxu0
        %v687 = vadd.f32 %v599, %v686
        %688 = vdwg.mxu0
        %689 = vmatpush.bf16.msra.mxu0 0
        %690 = vmatpush.bf16.msra.mxu0 0
        %691 = vmatpush.bf16.msra.mxu0 0
        %692 = vmatpush.bf16.msra.mxu0 0
        %693 = vmatpush.bf16.msra.mxu0 0
        %694 = vmatpush.bf16.msra.mxu0 0
        %695 = vmatpush.bf16.msra.mxu0 0
        %696 = vmatpush.bf16.msra.mxu0 %v640
        %697 = vmatmul.bf16.gmra.mxu0 %v649
        %v698 = vpop.f32.mrf.mxu0
        %v699 = vadd.f32 %v600, %v698
        %v700 = vpop.f32.mrf.mxu0
        %v701 = vadd.f32 %v600, %v700
        %702 = vmatmul.bf16.gmra.mxu0 %v652
        %v703 = vpop.f32.mrf.mxu0
        %v704 = vadd.f32 %v600, %v703
        %v705 = vpop.f32.mrf.mxu0
        %v706 = vadd.f32 %v600, %v705
        %707 = vmatmul.bf16.gmra.mxu0 %v655
        %v708 = vpop.f32.mrf.mxu0
        %v709 = vadd.f32 %v600, %v708
        %v710 = vpop.f32.mrf.mxu0
        %v711 = vadd.f32 %v600, %v710
        %712 = vmatmul.bf16.gmra.mxu0 %v658
        %v713 = vpop.f32.mrf.mxu0
        %v714 = vadd.f32 %v600, %v713
        %v715 = vpop.f32.mrf.mxu0
        %v716 = vadd.f32 %v600, %v715
        %717 = vdwg.mxu0
        %718 = vmatpush.bf16.msra.mxu0 0
        %719 = vmatpush.bf16.msra.mxu0 0
        %720 = vmatpush.bf16.msra.mxu0 0
        %721 = vmatpush.bf16.msra.mxu0 0
        %722 = vmatpush.bf16.msra.mxu0 0
        %723 = vmatpush.bf16.msra.mxu0 0
        %724 = vmatpush.bf16.msra.mxu0 0
        %725 = vmatpush.bf16.msra.mxu0 %v641
        %726 = vmatmul.bf16.gmra.mxu0 %v649
        %v727 = vpop.f32.mrf.mxu0
        %v728 = vadd.f32 %v601, %v727
        %v729 = vpop.f32.mrf.mxu0
        %v730 = vadd.f32 %v601, %v729
        %731 = vmatmul.bf16.gmra.mxu0 %v652
        %v732 = vpop.f32.mrf.mxu0
        %v733 = vadd.f32 %v601, %v732
        %v734 = vpop.f32.mrf.mxu0
        %v735 = vadd.f32 %v601, %v734
        %736 = vmatmul.bf16.gmra.mxu0 %v655
        %v737 = vpop.f32.mrf.mxu0
        %v738 = vadd.f32 %v601, %v737
        %v739 = vpop.f32.mrf.mxu0
        %v740 = vadd.f32 %v601, %v739
        %741 = vmatmul.bf16.gmra.mxu0 %v658
        %v742 = vpop.f32.mrf.mxu0
        %v743 = vadd.f32 %v601, %v742
        %v744 = vpop.f32.mrf.mxu0
        %v745 = vadd.f32 %v601, %v744
        %746 = vdwg.mxu0
        %747 = vmatpush.bf16.msra.mxu0 0
        %748 = vmatpush.bf16.msra.mxu0 0
        %749 = vmatpush.bf16.msra.mxu0 0
        %750 = vmatpush.bf16.msra.mxu0 0
        %751 = vmatpush.bf16.msra.mxu0 0
        %752 = vmatpush.bf16.msra.mxu0 0
        %753 = vmatpush.bf16.msra.mxu0 0
        %754 = vmatpush.bf16.msra.mxu0 %v642
        %755 = vmatmul.bf16.gmra.mxu0 %v649
        %v756 = vpop.f32.mrf.mxu0
        %v757 = vadd.f32 %v602, %v756
        %v758 = vpop.f32.mrf.mxu0
        %v759 = vadd.f32 %v602, %v758
        %760 = vmatmul.bf16.gmra.mxu0 %v652
        %v761 = vpop.f32.mrf.mxu0
        %v762 = vadd.f32 %v602, %v761
        %v763 = vpop.f32.mrf.mxu0
        %v764 = vadd.f32 %v602, %v763
        %765 = vmatmul.bf16.gmra.mxu0 %v655
        %v766 = vpop.f32.mrf.mxu0
        %v767 = vadd.f32 %v602, %v766
        %v768 = vpop.f32.mrf.mxu0
        %v769 = vadd.f32 %v602, %v768
        %770 = vmatmul.bf16.gmra.mxu0 %v658
        %v771 = vpop.f32.mrf.mxu0
        %v772 = vadd.f32 %v602, %v771
        %v773 = vpop.f32.mrf.mxu0
        %v774 = vadd.f32 %v602, %v773
        %775 = vdwg.mxu0
        %v776 = vpack.c.bf16 %v699, %v670
        %v777 = vpack.c.bf16 %v757, %v728
        %v778 = vpack.c.bf16 %v701, %v672
        %v779 = vpack.c.bf16 %v759, %v730
        %v780 = vpack.c.bf16 %v704, %v675
        %v781 = vpack.c.bf16 %v762, %v733
        %v782 = vpack.c.bf16 %v706, %v677
        %v783 = vpack.c.bf16 %v764, %v735
        %v784 = vpack.c.bf16 %v709, %v680
        %v785 = vpack.c.bf16 %v767, %v738
        %v786 = vpack.c.bf16 %v711, %v682
        %v787 = vpack.c.bf16 %v769, %v740
        %v788 = vpack.c.bf16 %v714, %v685
        %v789 = vpack.c.bf16 %v772, %v743
        %v790 = vpack.c.bf16 %v716, %v687
        %v791 = vpack.c.bf16 %v774, %v745
        %792 = vst [vmem:[#allocation2] sm:$0xff] %v776
        %793 = vst [vmem:[#allocation2 + $0x8] sm:$0xff] %v777
        %794 = vst [vmem:[#allocation2 + $0x10] sm:$0xff] %v778
        %795 = vst [vmem:[#allocation2 + $0x18] sm:$0xff] %v779
        %796 = vst [vmem:[#allocation2 + $0x20] sm:$0xff] %v780
        %797 = vst [vmem:[#allocation2 + $0x28] sm:$0xff] %v781
        %798 = vst [vmem:[#allocation2 + $0x30] sm:$0xff] %v782
        %799 = vst [vmem:[#allocation2 + $0x38] sm:$0xff] %v783
        %800 = vst [vmem:[#allocation2 + $0x40] sm:$0xff] %v784
        %801 = vst [vmem:[#allocation2 + $0x48] sm:$0xff] %v785
        %802 = vst [vmem:[#allocation2 + $0x50] sm:$0xff] %v786
        %803 = vst [vmem:[#allocation2 + $0x58] sm:$0xff] %v787
        %804 = vst [vmem:[#allocation2 + $0x60] sm:$0xff] %v788
        %805 = vst [vmem:[#allocation2 + $0x68] sm:$0xff] %v789
        %806 = vst [vmem:[#allocation2 + $0x70] sm:$0xff] %v790
        %807 = vst [vmem:[#allocation2 + $0x78] sm:$0xff] %v791
        %v808 = vld [vmem:[%s565] sm:$0xf]
        %v809 = vld [vmem:[%s565 + $0x4] sm:$0xf]
        %v810 = vld [vmem:[%s565 + $0x8] sm:$0xf]
        %v811 = vld [vmem:[%s565 + $0xc] sm:$0xf]
        %v812 = vld [vmem:[%s565 + $0x10] sm:$0xf]
        %v813 = vld [vmem:[%s565 + $0x14] sm:$0xf]
        %v814 = vld [vmem:[%s565 + $0x18] sm:$0xf]
        %v815 = vld [vmem:[%s565 + $0x1c] sm:$0xf]
        %v816 = vld [vmem:[#allocation13] sm:$0xff]
        %v817 = vld [vmem:[#allocation13 + $0x8] sm:$0xff]
        %v818 = vld [vmem:[#allocation13 + $0x10] sm:$0xff]
        %v819 = vld [vmem:[#allocation13 + $0x18] sm:$0xff]
        %v820 = vld [vmem:[%s6] sm:$0xf]
        %v822 = vperm.slane %v820, 0
        %v823 = vperm.slane %v820, 1
        %v824 = vperm.slane %v820, 2
        %v825 = vperm.slane %v820, 3
        %v838 = vunpack.c.l.b16 %v808
        %v839 = vunpack.c.l.b16 %v809
        %v840 = vunpack.c.l.b16 %v810
        %v841 = vunpack.c.l.b16 %v811
        %v842 = vunpack.c.l.b16 %v812
        %v843 = vunpack.c.l.b16 %v813
        %v844 = vunpack.c.l.b16 %v814
        %v845 = vunpack.c.l.b16 %v815
        %v846 = vpack.c.b16 %v839, %v838
        %v847 = vpack.c.b16 %v841, %v840
        %v848 = vpack.c.b16 %v843, %v842
        %v849 = vpack.c.b16 %v845, %v844
        %v854 = vunpack.c.l.b16 %v816
        %v855 = vunpack.c.h.b16 %v816
        %v856 = vunpack.c.l.b16 %v817
        %v857 = vunpack.c.h.b16 %v817
        %v858 = vunpack.c.l.b16 %v818
        %v859 = vunpack.c.h.b16 %v818
        %v860 = vunpack.c.l.b16 %v819
        %v861 = vunpack.c.h.b16 %v819
        %v862 = vpack.c.b16 %v858, %v854
        %v863 = vpack.c.b16 %v859, %v855
        %v864 = vpack.c.b16 %v860, %v856
        %v865 = vpack.c.b16 %v861, %v857
        %v871 = vsel %vm647, %v846, 0
        %v874 = vsel %vm647, %v847, 0
        %v877 = vsel %vm647, %v848, 0
        %v880 = vsel %vm647, %v849, 0
        %882 = vmatpush.bf16.msra.mxu0 0
        %883 = vmatpush.bf16.msra.mxu0 0
        %884 = vmatpush.bf16.msra.mxu0 0
        %885 = vmatpush.bf16.msra.mxu0 0
        %886 = vmatpush.bf16.msra.mxu0 0
        %887 = vmatpush.bf16.msra.mxu0 0
        %888 = vmatpush.bf16.msra.mxu0 0
        %889 = vmatpush.bf16.msra.mxu0 %v862
        %890 = vmatmul.bf16.gmra.mxu0 %v871
        %v891 = vpop.f32.mrf.mxu0
        %v892 = vadd.f32 %v822, %v891
        %v893 = vpop.f32.mrf.mxu0
        %v894 = vadd.f32 %v822, %v893
        %895 = vmatmul.bf16.gmra.mxu0 %v874
        %v896 = vpop.f32.mrf.mxu0
        %v897 = vadd.f32 %v822, %v896
        %v898 = vpop.f32.mrf.mxu0
        %v899 = vadd.f32 %v822, %v898
        %900 = vmatmul.bf16.gmra.mxu0 %v877
        %v901 = vpop.f32.mrf.mxu0
        %v902 = vadd.f32 %v822, %v901
        %v903 = vpop.f32.mrf.mxu0
        %v904 = vadd.f32 %v822, %v903
        %905 = vmatmul.bf16.gmra.mxu0 %v880
        %v906 = vpop.f32.mrf.mxu0
        %v907 = vadd.f32 %v822, %v906
        %v908 = vpop.f32.mrf.mxu0
        %v909 = vadd.f32 %v822, %v908
        %910 = vdwg.mxu0
        %911 = vmatpush.bf16.msra.mxu0 0
        %912 = vmatpush.bf16.msra.mxu0 0
        %913 = vmatpush.bf16.msra.mxu0 0
        %914 = vmatpush.bf16.msra.mxu0 0
        %915 = vmatpush.bf16.msra.mxu0 0
        %916 = vmatpush.bf16.msra.mxu0 0
        %917 = vmatpush.bf16.msra.mxu0 0
        %918 = vmatpush.bf16.msra.mxu0 %v863
        %919 = vmatmul.bf16.gmra.mxu0 %v871
        %v920 = vpop.f32.mrf.mxu0
        %v921 = vadd.f32 %v823, %v920
        %v922 = vpop.f32.mrf.mxu0
        %v923 = vadd.f32 %v823, %v922
        %924 = vmatmul.bf16.gmra.mxu0 %v874
        %v925 = vpop.f32.mrf.mxu0
        %v926 = vadd.f32 %v823, %v925
        %v927 = vpop.f32.mrf.mxu0
        %v928 = vadd.f32 %v823, %v927
        %929 = vmatmul.bf16.gmra.mxu0 %v877
        %v930 = vpop.f32.mrf.mxu0
        %v931 = vadd.f32 %v823, %v930
        %v932 = vpop.f32.mrf.mxu0
        %v933 = vadd.f32 %v823, %v932
        %934 = vmatmul.bf16.gmra.mxu0 %v880
        %v935 = vpop.f32.mrf.mxu0
        %v936 = vadd.f32 %v823, %v935
        %v937 = vpop.f32.mrf.mxu0
        %v938 = vadd.f32 %v823, %v937
        %939 = vdwg.mxu0
        %940 = vmatpush.bf16.msra.mxu0 0
        %941 = vmatpush.bf16.msra.mxu0 0
        %942 = vmatpush.bf16.msra.mxu0 0
        %943 = vmatpush.bf16.msra.mxu0 0
        %944 = vmatpush.bf16.msra.mxu0 0
        %945 = vmatpush.bf16.msra.mxu0 0
        %946 = vmatpush.bf16.msra.mxu0 0
        %947 = vmatpush.bf16.msra.mxu0 %v864
        %948 = vmatmul.bf16.gmra.mxu0 %v871
        %v949 = vpop.f32.mrf.mxu0
        %v950 = vadd.f32 %v824, %v949
        %v951 = vpop.f32.mrf.mxu0
        %v952 = vadd.f32 %v824, %v951
        %953 = vmatmul.bf16.gmra.mxu0 %v874
        %v954 = vpop.f32.mrf.mxu0
        %v955 = vadd.f32 %v824, %v954
        %v956 = vpop.f32.mrf.mxu0
        %v957 = vadd.f32 %v824, %v956
        %958 = vmatmul.bf16.gmra.mxu0 %v877
        %v959 = vpop.f32.mrf.mxu0
        %v960 = vadd.f32 %v824, %v959
        %v961 = vpop.f32.mrf.mxu0
        %v962 = vadd.f32 %v824, %v961
        %963 = vmatmul.bf16.gmra.mxu0 %v880
        %v964 = vpop.f32.mrf.mxu0
        %v965 = vadd.f32 %v824, %v964
        %v966 = vpop.f32.mrf.mxu0
        %v967 = vadd.f32 %v824, %v966
        %968 = vdwg.mxu0
        %969 = vmatpush.bf16.msra.mxu0 0
        %970 = vmatpush.bf16.msra.mxu0 0
        %971 = vmatpush.bf16.msra.mxu0 0
        %972 = vmatpush.bf16.msra.mxu0 0
        %973 = vmatpush.bf16.msra.mxu0 0
        %974 = vmatpush.bf16.msra.mxu0 0
        %975 = vmatpush.bf16.msra.mxu0 0
        %976 = vmatpush.bf16.msra.mxu0 %v865
        %977 = vmatmul.bf16.gmra.mxu0 %v871
        %v978 = vpop.f32.mrf.mxu0
        %v979 = vadd.f32 %v825, %v978
        %v980 = vpop.f32.mrf.mxu0
        %v981 = vadd.f32 %v825, %v980
        %982 = vmatmul.bf16.gmra.mxu0 %v874
        %v983 = vpop.f32.mrf.mxu0
        %v984 = vadd.f32 %v825, %v983
        %v985 = vpop.f32.mrf.mxu0
        %v986 = vadd.f32 %v825, %v985
        %987 = vmatmul.bf16.gmra.mxu0 %v877
        %v988 = vpop.f32.mrf.mxu0
        %v989 = vadd.f32 %v825, %v988
        %v990 = vpop.f32.mrf.mxu0
        %v991 = vadd.f32 %v825, %v990
        %992 = vmatmul.bf16.gmra.mxu0 %v880
        %v993 = vpop.f32.mrf.mxu0
        %v994 = vadd.f32 %v825, %v993
        %v995 = vpop.f32.mrf.mxu0
        %v996 = vadd.f32 %v825, %v995
        %997 = vdwg.mxu0
        %v998 = vpack.c.bf16 %v921, %v892
        %v999 = vpack.c.bf16 %v979, %v950
        %v1000 = vpack.c.bf16 %v923, %v894
        %v1001 = vpack.c.bf16 %v981, %v952
        %v1002 = vpack.c.bf16 %v926, %v897
        %v1003 = vpack.c.bf16 %v984, %v955
        %v1004 = vpack.c.bf16 %v928, %v899
        %v1005 = vpack.c.bf16 %v986, %v957
        %v1006 = vpack.c.bf16 %v931, %v902
        %v1007 = vpack.c.bf16 %v989, %v960
        %v1008 = vpack.c.bf16 %v933, %v904
        %v1009 = vpack.c.bf16 %v991, %v962
        %v1010 = vpack.c.bf16 %v936, %v907
        %v1011 = vpack.c.bf16 %v994, %v965
        %v1012 = vpack.c.bf16 %v938, %v909
        %v1013 = vpack.c.bf16 %v996, %v967
        %1014 = vst [vmem:[#allocation3] sm:$0xff] %v998
        %1015 = vst [vmem:[#allocation3 + $0x8] sm:$0xff] %v999
        %1016 = vst [vmem:[#allocation3 + $0x10] sm:$0xff] %v1000
        %1017 = vst [vmem:[#allocation3 + $0x18] sm:$0xff] %v1001
        %1018 = vst [vmem:[#allocation3 + $0x20] sm:$0xff] %v1002
        %1019 = vst [vmem:[#allocation3 + $0x28] sm:$0xff] %v1003
        %1020 = vst [vmem:[#allocation3 + $0x30] sm:$0xff] %v1004
        %1021 = vst [vmem:[#allocation3 + $0x38] sm:$0xff] %v1005
        %1022 = vst [vmem:[#allocation3 + $0x40] sm:$0xff] %v1006
        %1023 = vst [vmem:[#allocation3 + $0x48] sm:$0xff] %v1007
        %1024 = vst [vmem:[#allocation3 + $0x50] sm:$0xff] %v1008
        %1025 = vst [vmem:[#allocation3 + $0x58] sm:$0xff] %v1009
        %1026 = vst [vmem:[#allocation3 + $0x60] sm:$0xff] %v1010
        %1027 = vst [vmem:[#allocation3 + $0x68] sm:$0xff] %v1011
        %1028 = vst [vmem:[#allocation3 + $0x70] sm:$0xff] %v1012
        %1029 = vst [vmem:[#allocation3 + $0x78] sm:$0xff] %v1013
        %v1030 = vld [vmem:[%s0] sm:$0xff]
        %v1031 = vld [vmem:[%s0 + $0x8] sm:$0xff]
        %s1032 = smul.u32 %s29, 4
        %v1033 = vld [vmem:[#allocation4] sm:$0xff]
        %v1034 = vld [vmem:[#allocation4 + $0x8] sm:$0xff]
        %v1035 = vld [vmem:[#allocation5] sm:$0xff]
        %v1036 = vld [vmem:[#allocation5 + $0x8] sm:$0xff]
        %v1037 = vld [vmem:[#allocation6] sm:$0xff]
        %v1038 = vld [vmem:[#allocation6 + $0x8] sm:$0xff]
        %v1039 = vld [vmem:[#allocation7] sm:$0xff]
        %v1040 = vld [vmem:[#allocation7 + $0x8] sm:$0xff]
        loop: start=0, step=1, limit=4
        $region101: #{tpu_custom_call.1} parent=75 // loop_pre_header
          _
        $region102: #{tpu_custom_call.1} parent=75 // loop_header
          %s1042 = sphi 0, %s1046
          %p1043 = scmp.ge.s32.totalorder %s1042, 4
          %v1047 = vphi %v1033, %v1860
          %v1048 = vphi %v1034, %v1861
          %v1049 = vphi %v1035, %v1862
          %v1050 = vphi %v1036, %v1863
          %v1051 = vphi %v1037, %v1874
          %v1052 = vphi %v1038, %v1875
          %v1053 = vphi %v1039, %v1876
          %v1054 = vphi %v1040, %v1877
        $region103: #{tpu_custom_call.1} parent=75 // loop_header_branch
          %1045 = sbr.rel (%p1043) target = $region107
        $region104: #{tpu_custom_call.1} parent=75 // loop_body
          %s1055 = sadd.s32 %s1032, %s1042
          %v1056 = vpack.c.bf16 %v1048, %v1047
          %v1057 = vld [vmem:[#allocation15] sm:$0xff]
          %v1058 = vld [vmem:[#allocation15 + $0x8] sm:$0xff]
          %v1059 = vld [vmem:[#allocation15 + $0x10] sm:$0xff]
          %v1060 = vld [vmem:[#allocation15 + $0x18] sm:$0xff]
          %v1061 = vld [vmem:[#allocation15 + $0x20] sm:$0xff]
          %v1062 = vld [vmem:[#allocation15 + $0x28] sm:$0xff]
          %v1063 = vld [vmem:[#allocation15 + $0x30] sm:$0xff]
          %v1064 = vld [vmem:[#allocation15 + $0x38] sm:$0xff]
          %v1065 = vld [vmem:[#allocation15 + $0x40] sm:$0xff]
          %v1066 = vld [vmem:[#allocation15 + $0x48] sm:$0xff]
          %v1067 = vld [vmem:[#allocation15 + $0x50] sm:$0xff]
          %v1068 = vld [vmem:[#allocation15 + $0x58] sm:$0xff]
          %v1069 = vld [vmem:[#allocation15 + $0x60] sm:$0xff]
          %v1070 = vld [vmem:[#allocation15 + $0x68] sm:$0xff]
          %v1071 = vld [vmem:[#allocation15 + $0x70] sm:$0xff]
          %v1072 = vld [vmem:[#allocation15 + $0x78] sm:$0xff]
          %v1073 = vld [vmem:[#allocation15 + $0x80] sm:$0xff]
          %v1074 = vld [vmem:[#allocation15 + $0x88] sm:$0xff]
          %v1075 = vld [vmem:[#allocation15 + $0x90] sm:$0xff]
          %v1076 = vld [vmem:[#allocation15 + $0x98] sm:$0xff]
          %v1077 = vld [vmem:[#allocation15 + $0xa0] sm:$0xff]
          %v1078 = vld [vmem:[#allocation15 + $0xa8] sm:$0xff]
          %v1079 = vld [vmem:[#allocation15 + $0xb0] sm:$0xff]
          %v1080 = vld [vmem:[#allocation15 + $0xb8] sm:$0xff]
          %v1081 = vld [vmem:[#allocation15 + $0xc0] sm:$0xff]
          %v1082 = vld [vmem:[#allocation15 + $0xc8] sm:$0xff]
          %v1083 = vld [vmem:[#allocation15 + $0xd0] sm:$0xff]
          %v1084 = vld [vmem:[#allocation15 + $0xd8] sm:$0xff]
          %v1085 = vld [vmem:[#allocation15 + $0xe0] sm:$0xff]
          %v1086 = vld [vmem:[#allocation15 + $0xe8] sm:$0xff]
          %v1087 = vld [vmem:[#allocation15 + $0xf0] sm:$0xff]
          %v1088 = vld [vmem:[#allocation15 + $0xf8] sm:$0xff]
          %s1089 = smul.u32 %s1042, 16
          %s1090 = sshra.s32 %s1089, 3
          %s1091 = sand.u32 %s1089, 7
          %s1092 = smul.u32 %s1090, 4
          %s1093 = smul.addr %s1092, 4
          %s1094 = scalar_lea.vmem [#allocation2], %s1093
          %v1095 = vld [vmem:[%s1094] sm:$0xff]
          %v1096 = vld [vmem:[%s1094 + $0x8] sm:$0xff]
          %v1097 = vld [vmem:[%s1094 + $0x10] sm:$0xff]
          %v1098 = vld [vmem:[%s1094 + $0x18] sm:$0xff]
          %v1099 = vunpack.c.l.bf16 %v1095
          %v1100 = vunpack.c.h.bf16 %v1095
          %v1101 = vunpack.c.l.bf16 %v1096
          %v1102 = vunpack.c.h.bf16 %v1096
          %v1103 = vunpack.c.l.bf16 %v1097
          %v1104 = vunpack.c.h.bf16 %v1097
          %v1105 = vunpack.c.l.bf16 %v1098
          %v1106 = vunpack.c.h.bf16 %v1098
          %v1139 = vunpack.c.l.b16 %v1057
          %v1140 = vunpack.c.h.b16 %v1057
          %v1141 = vunpack.c.l.b16 %v1058
          %v1142 = vunpack.c.h.b16 %v1058
          %v1143 = vunpack.c.l.b16 %v1059
          %v1144 = vunpack.c.h.b16 %v1059
          %v1145 = vunpack.c.l.b16 %v1060
          %v1146 = vunpack.c.h.b16 %v1060
          %v1147 = vunpack.c.l.b16 %v1061
          %v1148 = vunpack.c.h.b16 %v1061
          %v1149 = vunpack.c.l.b16 %v1062
          %v1150 = vunpack.c.h.b16 %v1062
          %v1151 = vunpack.c.l.b16 %v1063
          %v1152 = vunpack.c.h.b16 %v1063
          %v1153 = vunpack.c.l.b16 %v1064
          %v1154 = vunpack.c.h.b16 %v1064
          %v1155 = vunpack.c.l.b16 %v1065
          %v1156 = vunpack.c.h.b16 %v1065
          %v1157 = vunpack.c.l.b16 %v1066
          %v1158 = vunpack.c.h.b16 %v1066
          %v1159 = vunpack.c.l.b16 %v1067
          %v1160 = vunpack.c.h.b16 %v1067
          %v1161 = vunpack.c.l.b16 %v1068
          %v1162 = vunpack.c.h.b16 %v1068
          %v1163 = vunpack.c.l.b16 %v1069
          %v1164 = vunpack.c.h.b16 %v1069
          %v1165 = vunpack.c.l.b16 %v1070
          %v1166 = vunpack.c.h.b16 %v1070
          %v1167 = vunpack.c.l.b16 %v1071
          %v1168 = vunpack.c.h.b16 %v1071
          %v1169 = vunpack.c.l.b16 %v1072
          %v1170 = vunpack.c.h.b16 %v1072
          %v1171 = vunpack.c.l.b16 %v1073
          %v1172 = vunpack.c.h.b16 %v1073
          %v1173 = vunpack.c.l.b16 %v1074
          %v1174 = vunpack.c.h.b16 %v1074
          %v1175 = vunpack.c.l.b16 %v1075
          %v1176 = vunpack.c.h.b16 %v1075
          %v1177 = vunpack.c.l.b16 %v1076
          %v1178 = vunpack.c.h.b16 %v1076
          %v1179 = vunpack.c.l.b16 %v1077
          %v1180 = vunpack.c.h.b16 %v1077
          %v1181 = vunpack.c.l.b16 %v1078
          %v1182 = vunpack.c.h.b16 %v1078
          %v1183 = vunpack.c.l.b16 %v1079
          %v1184 = vunpack.c.h.b16 %v1079
          %v1185 = vunpack.c.l.b16 %v1080
          %v1186 = vunpack.c.h.b16 %v1080
          %v1187 = vunpack.c.l.b16 %v1081
          %v1188 = vunpack.c.h.b16 %v1081
          %v1189 = vunpack.c.l.b16 %v1082
          %v1190 = vunpack.c.h.b16 %v1082
          %v1191 = vunpack.c.l.b16 %v1083
          %v1192 = vunpack.c.h.b16 %v1083
          %v1193 = vunpack.c.l.b16 %v1084
          %v1194 = vunpack.c.h.b16 %v1084
          %v1195 = vunpack.c.l.b16 %v1085
          %v1196 = vunpack.c.h.b16 %v1085
          %v1197 = vunpack.c.l.b16 %v1086
          %v1198 = vunpack.c.h.b16 %v1086
          %v1199 = vunpack.c.l.b16 %v1087
          %v1200 = vunpack.c.h.b16 %v1087
          %v1201 = vunpack.c.l.b16 %v1088
          %v1202 = vunpack.c.h.b16 %v1088
          %v1203 = vpack.c.b16 %v1143, %v1139
          %v1204 = vpack.c.b16 %v1144, %v1140
          %v1205 = vpack.c.b16 %v1145, %v1141
          %v1206 = vpack.c.b16 %v1146, %v1142
          %v1207 = vpack.c.b16 %v1151, %v1147
          %v1208 = vpack.c.b16 %v1152, %v1148
          %v1209 = vpack.c.b16 %v1153, %v1149
          %v1210 = vpack.c.b16 %v1154, %v1150
          %v1211 = vpack.c.b16 %v1159, %v1155
          %v1212 = vpack.c.b16 %v1160, %v1156
          %v1213 = vpack.c.b16 %v1161, %v1157
          %v1214 = vpack.c.b16 %v1162, %v1158
          %v1215 = vpack.c.b16 %v1167, %v1163
          %v1216 = vpack.c.b16 %v1168, %v1164
          %v1217 = vpack.c.b16 %v1169, %v1165
          %v1218 = vpack.c.b16 %v1170, %v1166
          %v1219 = vpack.c.b16 %v1175, %v1171
          %v1220 = vpack.c.b16 %v1176, %v1172
          %v1221 = vpack.c.b16 %v1177, %v1173
          %v1222 = vpack.c.b16 %v1178, %v1174
          %v1223 = vpack.c.b16 %v1183, %v1179
          %v1224 = vpack.c.b16 %v1184, %v1180
          %v1225 = vpack.c.b16 %v1185, %v1181
          %v1226 = vpack.c.b16 %v1186, %v1182
          %v1227 = vpack.c.b16 %v1191, %v1187
          %v1228 = vpack.c.b16 %v1192, %v1188
          %v1229 = vpack.c.b16 %v1193, %v1189
          %v1230 = vpack.c.b16 %v1194, %v1190
          %v1231 = vpack.c.b16 %v1199, %v1195
          %v1232 = vpack.c.b16 %v1200, %v1196
          %v1233 = vpack.c.b16 %v1201, %v1197
          %v1234 = vpack.c.b16 %v1202, %v1198
          %1267 = vmatpush.bf16.msra.mxu0 %v1231
          %1268 = vmatpush.bf16.msra.mxu0 %v1227
          %1269 = vmatpush.bf16.msra.mxu0 %v1223
          %1270 = vmatpush.bf16.msra.mxu0 %v1219
          %1271 = vmatpush.bf16.msra.mxu0 %v1215
          %1272 = vmatpush.bf16.msra.mxu0 %v1211
          %1273 = vmatpush.bf16.msra.mxu0 %v1207
          %1274 = vmatpush.bf16.msra.mxu0 %v1203
          %1275 = vmatmul.bf16.gmra.mxu0 %v1056
          %v1276 = vpop.f32.mrf.mxu0
          %v1277 = vadd.f32 %v1099, %v1276
          %v1278 = vpop.f32.mrf.mxu0
          %v1279 = vadd.f32 %v1103, %v1278
          %1280 = vdwg.mxu0
          %1281 = vmatpush.bf16.msra.mxu0 %v1232
          %1282 = vmatpush.bf16.msra.mxu0 %v1228
          %1283 = vmatpush.bf16.msra.mxu0 %v1224
          %1284 = vmatpush.bf16.msra.mxu0 %v1220
          %1285 = vmatpush.bf16.msra.mxu0 %v1216
          %1286 = vmatpush.bf16.msra.mxu0 %v1212
          %1287 = vmatpush.bf16.msra.mxu0 %v1208
          %1288 = vmatpush.bf16.msra.mxu0 %v1204
          %1289 = vmatmul.bf16.gmra.mxu0 %v1056
          %v1290 = vpop.f32.mrf.mxu0
          %v1291 = vadd.f32 %v1100, %v1290
          %v1292 = vpop.f32.mrf.mxu0
          %v1293 = vadd.f32 %v1104, %v1292
          %1294 = vdwg.mxu0
          %1295 = vmatpush.bf16.msra.mxu0 %v1233
          %1296 = vmatpush.bf16.msra.mxu0 %v1229
          %1297 = vmatpush.bf16.msra.mxu0 %v1225
          %1298 = vmatpush.bf16.msra.mxu0 %v1221
          %1299 = vmatpush.bf16.msra.mxu0 %v1217
          %1300 = vmatpush.bf16.msra.mxu0 %v1213
          %1301 = vmatpush.bf16.msra.mxu0 %v1209
          %1302 = vmatpush.bf16.msra.mxu0 %v1205
          %1303 = vmatmul.bf16.gmra.mxu0 %v1056
          %v1304 = vpop.f32.mrf.mxu0
          %v1305 = vadd.f32 %v1101, %v1304
          %v1306 = vpop.f32.mrf.mxu0
          %v1307 = vadd.f32 %v1105, %v1306
          %1308 = vdwg.mxu0
          %1309 = vmatpush.bf16.msra.mxu0 %v1234
          %1310 = vmatpush.bf16.msra.mxu0 %v1230
          %1311 = vmatpush.bf16.msra.mxu0 %v1226
          %1312 = vmatpush.bf16.msra.mxu0 %v1222
          %1313 = vmatpush.bf16.msra.mxu0 %v1218
          %1314 = vmatpush.bf16.msra.mxu0 %v1214
          %1315 = vmatpush.bf16.msra.mxu0 %v1210
          %1316 = vmatpush.bf16.msra.mxu0 %v1206
          %1317 = vmatmul.bf16.gmra.mxu0 %v1056
          %v1318 = vpop.f32.mrf.mxu0
          %v1319 = vadd.f32 %v1102, %v1318
          %v1320 = vpop.f32.mrf.mxu0
          %v1321 = vadd.f32 %v1106, %v1320
          %1322 = vdwg.mxu0
          %v1323 = vpack.c.bf16 %v1052, %v1051
          %v1324 = vld [vmem:[#allocation16] sm:$0xff]
          %v1325 = vld [vmem:[#allocation16 + $0x8] sm:$0xff]
          %v1326 = vld [vmem:[#allocation16 + $0x10] sm:$0xff]
          %v1327 = vld [vmem:[#allocation16 + $0x18] sm:$0xff]
          %v1328 = vld [vmem:[#allocation16 + $0x20] sm:$0xff]
          %v1329 = vld [vmem:[#allocation16 + $0x28] sm:$0xff]
          %v1330 = vld [vmem:[#allocation16 + $0x30] sm:$0xff]
          %v1331 = vld [vmem:[#allocation16 + $0x38] sm:$0xff]
          %v1332 = vld [vmem:[#allocation16 + $0x40] sm:$0xff]
          %v1333 = vld [vmem:[#allocation16 + $0x48] sm:$0xff]
          %v1334 = vld [vmem:[#allocation16 + $0x50] sm:$0xff]
          %v1335 = vld [vmem:[#allocation16 + $0x58] sm:$0xff]
          %v1336 = vld [vmem:[#allocation16 + $0x60] sm:$0xff]
          %v1337 = vld [vmem:[#allocation16 + $0x68] sm:$0xff]
          %v1338 = vld [vmem:[#allocation16 + $0x70] sm:$0xff]
          %v1339 = vld [vmem:[#allocation16 + $0x78] sm:$0xff]
          %v1340 = vld [vmem:[#allocation16 + $0x80] sm:$0xff]
          %v1341 = vld [vmem:[#allocation16 + $0x88] sm:$0xff]
          %v1342 = vld [vmem:[#allocation16 + $0x90] sm:$0xff]
          %v1343 = vld [vmem:[#allocation16 + $0x98] sm:$0xff]
          %v1344 = vld [vmem:[#allocation16 + $0xa0] sm:$0xff]
          %v1345 = vld [vmem:[#allocation16 + $0xa8] sm:$0xff]
          %v1346 = vld [vmem:[#allocation16 + $0xb0] sm:$0xff]
          %v1347 = vld [vmem:[#allocation16 + $0xb8] sm:$0xff]
          %v1348 = vld [vmem:[#allocation16 + $0xc0] sm:$0xff]
          %v1349 = vld [vmem:[#allocation16 + $0xc8] sm:$0xff]
          %v1350 = vld [vmem:[#allocation16 + $0xd0] sm:$0xff]
          %v1351 = vld [vmem:[#allocation16 + $0xd8] sm:$0xff]
          %v1352 = vld [vmem:[#allocation16 + $0xe0] sm:$0xff]
          %v1353 = vld [vmem:[#allocation16 + $0xe8] sm:$0xff]
          %v1354 = vld [vmem:[#allocation16 + $0xf0] sm:$0xff]
          %v1355 = vld [vmem:[#allocation16 + $0xf8] sm:$0xff]
          %s1356 = ssub.s32 3, %s1042
          %s1357 = smul.u32 %s1356, 16
          %s1358 = sshra.s32 %s1357, 3
          %s1359 = sand.u32 %s1357, 7
          %s1360 = smul.u32 %s1358, 4
          %s1361 = smul.addr %s1360, 4
          %s1362 = scalar_lea.vmem [#allocation3], %s1361
          %v1363 = vld [vmem:[%s1362] sm:$0xff]
          %v1364 = vld [vmem:[%s1362 + $0x8] sm:$0xff]
          %v1365 = vld [vmem:[%s1362 + $0x10] sm:$0xff]
          %v1366 = vld [vmem:[%s1362 + $0x18] sm:$0xff]
          %v1367 = vunpack.c.l.bf16 %v1363
          %v1368 = vunpack.c.h.bf16 %v1363
          %v1369 = vunpack.c.l.bf16 %v1364
          %v1370 = vunpack.c.h.bf16 %v1364
          %v1371 = vunpack.c.l.bf16 %v1365
          %v1372 = vunpack.c.h.bf16 %v1365
          %v1373 = vunpack.c.l.bf16 %v1366
          %v1374 = vunpack.c.h.bf16 %v1366
          %v1407 = vunpack.c.l.b16 %v1324
          %v1408 = vunpack.c.h.b16 %v1324
          %v1409 = vunpack.c.l.b16 %v1325
          %v1410 = vunpack.c.h.b16 %v1325
          %v1411 = vunpack.c.l.b16 %v1326
          %v1412 = vunpack.c.h.b16 %v1326
          %v1413 = vunpack.c.l.b16 %v1327
          %v1414 = vunpack.c.h.b16 %v1327
          %v1415 = vunpack.c.l.b16 %v1328
          %v1416 = vunpack.c.h.b16 %v1328
          %v1417 = vunpack.c.l.b16 %v1329
          %v1418 = vunpack.c.h.b16 %v1329
          %v1419 = vunpack.c.l.b16 %v1330
          %v1420 = vunpack.c.h.b16 %v1330
          %v1421 = vunpack.c.l.b16 %v1331
          %v1422 = vunpack.c.h.b16 %v1331
          %v1423 = vunpack.c.l.b16 %v1332
          %v1424 = vunpack.c.h.b16 %v1332
          %v1425 = vunpack.c.l.b16 %v1333
          %v1426 = vunpack.c.h.b16 %v1333
          %v1427 = vunpack.c.l.b16 %v1334
          %v1428 = vunpack.c.h.b16 %v1334
          %v1429 = vunpack.c.l.b16 %v1335
          %v1430 = vunpack.c.h.b16 %v1335
          %v1431 = vunpack.c.l.b16 %v1336
          %v1432 = vunpack.c.h.b16 %v1336
          %v1433 = vunpack.c.l.b16 %v1337
          %v1434 = vunpack.c.h.b16 %v1337
          %v1435 = vunpack.c.l.b16 %v1338
          %v1436 = vunpack.c.h.b16 %v1338
          %v1437 = vunpack.c.l.b16 %v1339
          %v1438 = vunpack.c.h.b16 %v1339
          %v1439 = vunpack.c.l.b16 %v1340
          %v1440 = vunpack.c.h.b16 %v1340
          %v1441 = vunpack.c.l.b16 %v1341
          %v1442 = vunpack.c.h.b16 %v1341
          %v1443 = vunpack.c.l.b16 %v1342
          %v1444 = vunpack.c.h.b16 %v1342
          %v1445 = vunpack.c.l.b16 %v1343
          %v1446 = vunpack.c.h.b16 %v1343
          %v1447 = vunpack.c.l.b16 %v1344
          %v1448 = vunpack.c.h.b16 %v1344
          %v1449 = vunpack.c.l.b16 %v1345
          %v1450 = vunpack.c.h.b16 %v1345
          %v1451 = vunpack.c.l.b16 %v1346
          %v1452 = vunpack.c.h.b16 %v1346
          %v1453 = vunpack.c.l.b16 %v1347
          %v1454 = vunpack.c.h.b16 %v1347
          %v1455 = vunpack.c.l.b16 %v1348
          %v1456 = vunpack.c.h.b16 %v1348
          %v1457 = vunpack.c.l.b16 %v1349
          %v1458 = vunpack.c.h.b16 %v1349
          %v1459 = vunpack.c.l.b16 %v1350
          %v1460 = vunpack.c.h.b16 %v1350
          %v1461 = vunpack.c.l.b16 %v1351
          %v1462 = vunpack.c.h.b16 %v1351
          %v1463 = vunpack.c.l.b16 %v1352
          %v1464 = vunpack.c.h.b16 %v1352
          %v1465 = vunpack.c.l.b16 %v1353
          %v1466 = vunpack.c.h.b16 %v1353
          %v1467 = vunpack.c.l.b16 %v1354
          %v1468 = vunpack.c.h.b16 %v1354
          %v1469 = vunpack.c.l.b16 %v1355
          %v1470 = vunpack.c.h.b16 %v1355
          %v1471 = vpack.c.b16 %v1411, %v1407
          %v1472 = vpack.c.b16 %v1412, %v1408
          %v1473 = vpack.c.b16 %v1413, %v1409
          %v1474 = vpack.c.b16 %v1414, %v1410
          %v1475 = vpack.c.b16 %v1419, %v1415
          %v1476 = vpack.c.b16 %v1420, %v1416
          %v1477 = vpack.c.b16 %v1421, %v1417
          %v1478 = vpack.c.b16 %v1422, %v1418
          %v1479 = vpack.c.b16 %v1427, %v1423
          %v1480 = vpack.c.b16 %v1428, %v1424
          %v1481 = vpack.c.b16 %v1429, %v1425
          %v1482 = vpack.c.b16 %v1430, %v1426
          %v1483 = vpack.c.b16 %v1435, %v1431
          %v1484 = vpack.c.b16 %v1436, %v1432
          %v1485 = vpack.c.b16 %v1437, %v1433
          %v1486 = vpack.c.b16 %v1438, %v1434
          %v1487 = vpack.c.b16 %v1443, %v1439
          %v1488 = vpack.c.b16 %v1444, %v1440
          %v1489 = vpack.c.b16 %v1445, %v1441
          %v1490 = vpack.c.b16 %v1446, %v1442
          %v1491 = vpack.c.b16 %v1451, %v1447
          %v1492 = vpack.c.b16 %v1452, %v1448
          %v1493 = vpack.c.b16 %v1453, %v1449
          %v1494 = vpack.c.b16 %v1454, %v1450
          %v1495 = vpack.c.b16 %v1459, %v1455
          %v1496 = vpack.c.b16 %v1460, %v1456
          %v1497 = vpack.c.b16 %v1461, %v1457
          %v1498 = vpack.c.b16 %v1462, %v1458
          %v1499 = vpack.c.b16 %v1467, %v1463
          %v1500 = vpack.c.b16 %v1468, %v1464
          %v1501 = vpack.c.b16 %v1469, %v1465
          %v1502 = vpack.c.b16 %v1470, %v1466
          %1535 = vmatpush.bf16.msra.mxu0 %v1499
          %1536 = vmatpush.bf16.msra.mxu0 %v1495
          %1537 = vmatpush.bf16.msra.mxu0 %v1491
          %1538 = vmatpush.bf16.msra.mxu0 %v1487
          %1539 = vmatpush.bf16.msra.mxu0 %v1483
          %1540 = vmatpush.bf16.msra.mxu0 %v1479
          %1541 = vmatpush.bf16.msra.mxu0 %v1475
          %1542 = vmatpush.bf16.msra.mxu0 %v1471
          %1543 = vmatmul.bf16.gmra.mxu0 %v1323
          %v1544 = vpop.f32.mrf.mxu0
          %v1545 = vadd.f32 %v1367, %v1544
          %v1546 = vpop.f32.mrf.mxu0
          %v1547 = vadd.f32 %v1371, %v1546
          %1548 = vdwg.mxu0
          %1549 = vmatpush.bf16.msra.mxu0 %v1500
          %1550 = vmatpush.bf16.msra.mxu0 %v1496
          %1551 = vmatpush.bf16.msra.mxu0 %v1492
          %1552 = vmatpush.bf16.msra.mxu0 %v1488
          %1553 = vmatpush.bf16.msra.mxu0 %v1484
          %1554 = vmatpush.bf16.msra.mxu0 %v1480
          %1555 = vmatpush.bf16.msra.mxu0 %v1476
          %1556 = vmatpush.bf16.msra.mxu0 %v1472
          %1557 = vmatmul.bf16.gmra.mxu0 %v1323
          %v1558 = vpop.f32.mrf.mxu0
          %v1559 = vadd.f32 %v1368, %v1558
          %v1560 = vpop.f32.mrf.mxu0
          %v1561 = vadd.f32 %v1372, %v1560
          %1562 = vdwg.mxu0
          %1563 = vmatpush.bf16.msra.mxu0 %v1501
          %1564 = vmatpush.bf16.msra.mxu0 %v1497
          %1565 = vmatpush.bf16.msra.mxu0 %v1493
          %1566 = vmatpush.bf16.msra.mxu0 %v1489
          %1567 = vmatpush.bf16.msra.mxu0 %v1485
          %1568 = vmatpush.bf16.msra.mxu0 %v1481
          %1569 = vmatpush.bf16.msra.mxu0 %v1477
          %1570 = vmatpush.bf16.msra.mxu0 %v1473
          %1571 = vmatmul.bf16.gmra.mxu0 %v1323
          %v1572 = vpop.f32.mrf.mxu0
          %v1573 = vadd.f32 %v1369, %v1572
          %v1574 = vpop.f32.mrf.mxu0
          %v1575 = vadd.f32 %v1373, %v1574
          %1576 = vdwg.mxu0
          %1577 = vmatpush.bf16.msra.mxu0 %v1502
          %1578 = vmatpush.bf16.msra.mxu0 %v1498
          %1579 = vmatpush.bf16.msra.mxu0 %v1494
          %1580 = vmatpush.bf16.msra.mxu0 %v1490
          %1581 = vmatpush.bf16.msra.mxu0 %v1486
          %1582 = vmatpush.bf16.msra.mxu0 %v1482
          %1583 = vmatpush.bf16.msra.mxu0 %v1478
          %1584 = vmatpush.bf16.msra.mxu0 %v1474
          %1585 = vmatmul.bf16.gmra.mxu0 %v1323
          %v1586 = vpop.f32.mrf.mxu0
          %v1587 = vadd.f32 %v1370, %v1586
          %v1588 = vpop.f32.mrf.mxu0
          %v1589 = vadd.f32 %v1374, %v1588
          %1590 = vdwg.mxu0
          %v1591 = vxor.u32 %v1277, 2147483648
          %v1592 = vxor.u32 %v1279, 2147483648
          %v1593 = vmul.f32 %v1591, 1.442695
          %v1594 = vpow.pop %v1593
          %v1595 = vmul.f32 %v1592, 1.442695
          %v1596 = vpow.pop %v1595
          %v1597 = vadd.f32 %v1594, 1.0
          %v1598 = vadd.f32 %v1596, 1.0
          %v1599 = vrcp.pop %v1597
          %v1600 = vmul.f32 %v1597, %v1599
          %v1601 = vsub.f32 1.0, %v1600
          %v1602 = vmul.f32 %v1599, %v1601
          %v1603 = vadd.f32 %v1599, %v1602
          %vm1604 = vweird.f32 %v1597
          %vm1605 = vweird.f32 %v1599
          %vm1606 = vmor %vm1604, %vm1605
          %v1607 = vsel %vm1606, %v1599, %v1603
          %v1608 = vand.u32 2147483647, %v1597
          %vm1609 = vcmp.eq.f32.partialorder %v1608, 8.507059e+37
          %v1610 = vand.u32 %v1597, 2147483648
          %v1611 = vor.u32 1.1754944e-38, %v1610
          %v1612 = vsel %vm1609, %v1611, %v1607
          %v1613 = vmul.f32 1.0, %v1612
          %v1614 = vrcp.pop %v1598
          %v1615 = vmul.f32 %v1598, %v1614
          %v1616 = vsub.f32 1.0, %v1615
          %v1617 = vmul.f32 %v1614, %v1616
          %v1618 = vadd.f32 %v1614, %v1617
          %vm1619 = vweird.f32 %v1598
          %vm1620 = vweird.f32 %v1614
          %vm1621 = vmor %vm1619, %vm1620
          %v1622 = vsel %vm1621, %v1614, %v1618
          %v1623 = vand.u32 2147483647, %v1598
          %vm1624 = vcmp.eq.f32.partialorder %v1623, 8.507059e+37
          %v1625 = vand.u32 %v1598, 2147483648
          %v1626 = vor.u32 1.1754944e-38, %v1625
          %v1627 = vsel %vm1624, %v1626, %v1622
          %v1628 = vmul.f32 1.0, %v1627
          %v1629 = vxor.u32 %v1291, 2147483648
          %v1630 = vxor.u32 %v1293, 2147483648
          %v1631 = vmul.f32 %v1629, 1.442695
          %v1632 = vpow.pop %v1631
          %v1633 = vmul.f32 %v1630, 1.442695
          %v1634 = vpow.pop %v1633
          %v1635 = vadd.f32 %v1632, 1.0
          %v1636 = vadd.f32 %v1634, 1.0
          %v1637 = vrcp.pop %v1635
          %v1638 = vmul.f32 %v1635, %v1637
          %v1639 = vsub.f32 1.0, %v1638
          %v1640 = vmul.f32 %v1637, %v1639
          %v1641 = vadd.f32 %v1637, %v1640
          %vm1642 = vweird.f32 %v1635
          %vm1643 = vweird.f32 %v1637
          %vm1644 = vmor %vm1642, %vm1643
          %v1645 = vsel %vm1644, %v1637, %v1641
          %v1646 = vand.u32 2147483647, %v1635
          %vm1647 = vcmp.eq.f32.partialorder %v1646, 8.507059e+37
          %v1648 = vand.u32 %v1635, 2147483648
          %v1649 = vor.u32 1.1754944e-38, %v1648
          %v1650 = vsel %vm1647, %v1649, %v1645
          %v1651 = vmul.f32 1.0, %v1650
          %v1652 = vrcp.pop %v1636
          %v1653 = vmul.f32 %v1636, %v1652
          %v1654 = vsub.f32 1.0, %v1653
          %v1655 = vmul.f32 %v1652, %v1654
          %v1656 = vadd.f32 %v1652, %v1655
          %vm1657 = vweird.f32 %v1636
          %vm1658 = vweird.f32 %v1652
          %vm1659 = vmor %vm1657, %vm1658
          %v1660 = vsel %vm1659, %v1652, %v1656
          %v1661 = vand.u32 2147483647, %v1636
          %vm1662 = vcmp.eq.f32.partialorder %v1661, 8.507059e+37
          %v1663 = vand.u32 %v1636, 2147483648
          %v1664 = vor.u32 1.1754944e-38, %v1663
          %v1665 = vsel %vm1662, %v1664, %v1660
          %v1666 = vmul.f32 1.0, %v1665
          %v1667 = vtanh.pop %v1305
          %v1668 = vtanh.pop %v1307
          %v1669 = vxor.u32 %v1319, 2147483648
          %v1670 = vxor.u32 %v1321, 2147483648
          %v1671 = vmul.f32 %v1669, 1.442695
          %v1672 = vpow.pop %v1671
          %v1673 = vmul.f32 %v1670, 1.442695
          %v1674 = vpow.pop %v1673
          %v1675 = vadd.f32 %v1672, 1.0
          %v1676 = vadd.f32 %v1674, 1.0
          %v1677 = vrcp.pop %v1675
          %v1678 = vmul.f32 %v1675, %v1677
          %v1679 = vsub.f32 1.0, %v1678
          %v1680 = vmul.f32 %v1677, %v1679
          %v1681 = vadd.f32 %v1677, %v1680
          %vm1682 = vweird.f32 %v1675
          %vm1683 = vweird.f32 %v1677
          %vm1684 = vmor %vm1682, %vm1683
          %v1685 = vsel %vm1684, %v1677, %v1681
          %v1686 = vand.u32 2147483647, %v1675
          %vm1687 = vcmp.eq.f32.partialorder %v1686, 8.507059e+37
          %v1688 = vand.u32 %v1675, 2147483648
          %v1689 = vor.u32 1.1754944e-38, %v1688
          %v1690 = vsel %vm1687, %v1689, %v1685
          %v1691 = vmul.f32 1.0, %v1690
          %v1692 = vrcp.pop %v1676
          %v1693 = vmul.f32 %v1676, %v1692
          %v1694 = vsub.f32 1.0, %v1693
          %v1695 = vmul.f32 %v1692, %v1694
          %v1696 = vadd.f32 %v1692, %v1695
          %vm1697 = vweird.f32 %v1676
          %vm1698 = vweird.f32 %v1692
          %vm1699 = vmor %vm1697, %vm1698
          %v1700 = vsel %vm1699, %v1692, %v1696
          %v1701 = vand.u32 2147483647, %v1676
          %vm1702 = vcmp.eq.f32.partialorder %v1701, 8.507059e+37
          %v1703 = vand.u32 %v1676, 2147483648
          %v1704 = vor.u32 1.1754944e-38, %v1703
          %v1705 = vsel %vm1702, %v1704, %v1700
          %v1706 = vmul.f32 1.0, %v1705
          %v1707 = vmul.f32 %v1651, %v1049
          %v1708 = vmul.f32 %v1666, %v1050
          %v1709 = vmul.f32 %v1613, %v1667
          %v1710 = vmul.f32 %v1628, %v1668
          %v1711 = vadd.f32 %v1707, %v1709
          %v1712 = vadd.f32 %v1708, %v1710
          %v1713 = vtanh.pop %v1711
          %v1714 = vtanh.pop %v1712
          %v1715 = vmul.f32 %v1691, %v1713
          %v1716 = vmul.f32 %v1706, %v1714
          %v1717 = vxor.u32 %v1545, 2147483648
          %v1718 = vxor.u32 %v1547, 2147483648
          %v1719 = vmul.f32 %v1717, 1.442695
          %v1720 = vpow.pop %v1719
          %v1721 = vmul.f32 %v1718, 1.442695
          %v1722 = vpow.pop %v1721
          %v1723 = vadd.f32 %v1720, 1.0
          %v1724 = vadd.f32 %v1722, 1.0
          %v1725 = vrcp.pop %v1723
          %v1726 = vmul.f32 %v1723, %v1725
          %v1727 = vsub.f32 1.0, %v1726
          %v1728 = vmul.f32 %v1725, %v1727
          %v1729 = vadd.f32 %v1725, %v1728
          %vm1730 = vweird.f32 %v1723
          %vm1731 = vweird.f32 %v1725
          %vm1732 = vmor %vm1730, %vm1731
          %v1733 = vsel %vm1732, %v1725, %v1729
          %v1734 = vand.u32 2147483647, %v1723
          %vm1735 = vcmp.eq.f32.partialorder %v1734, 8.507059e+37
          %v1736 = vand.u32 %v1723, 2147483648
          %v1737 = vor.u32 1.1754944e-38, %v1736
          %v1738 = vsel %vm1735, %v1737, %v1733
          %v1739 = vmul.f32 1.0, %v1738
          %v1740 = vrcp.pop %v1724
          %v1741 = vmul.f32 %v1724, %v1740
          %v1742 = vsub.f32 1.0, %v1741
          %v1743 = vmul.f32 %v1740, %v1742
          %v1744 = vadd.f32 %v1740, %v1743
          %vm1745 = vweird.f32 %v1724
          %vm1746 = vweird.f32 %v1740
          %vm1747 = vmor %vm1745, %vm1746
          %v1748 = vsel %vm1747, %v1740, %v1744
          %v1749 = vand.u32 2147483647, %v1724
          %vm1750 = vcmp.eq.f32.partialorder %v1749, 8.507059e+37
          %v1751 = vand.u32 %v1724, 2147483648
          %v1752 = vor.u32 1.1754944e-38, %v1751
          %v1753 = vsel %vm1750, %v1752, %v1748
          %v1754 = vmul.f32 1.0, %v1753
          %v1755 = vxor.u32 %v1559, 2147483648
          %v1756 = vxor.u32 %v1561, 2147483648
          %v1757 = vmul.f32 %v1755, 1.442695
          %v1758 = vpow.pop %v1757
          %v1759 = vmul.f32 %v1756, 1.442695
          %v1760 = vpow.pop %v1759
          %v1761 = vadd.f32 %v1758, 1.0
          %v1762 = vadd.f32 %v1760, 1.0
          %v1763 = vrcp.pop %v1761
          %v1764 = vmul.f32 %v1761, %v1763
          %v1765 = vsub.f32 1.0, %v1764
          %v1766 = vmul.f32 %v1763, %v1765
          %v1767 = vadd.f32 %v1763, %v1766
          %vm1768 = vweird.f32 %v1761
          %vm1769 = vweird.f32 %v1763
          %vm1770 = vmor %vm1768, %vm1769
          %v1771 = vsel %vm1770, %v1763, %v1767
          %v1772 = vand.u32 2147483647, %v1761
          %vm1773 = vcmp.eq.f32.partialorder %v1772, 8.507059e+37
          %v1774 = vand.u32 %v1761, 2147483648
          %v1775 = vor.u32 1.1754944e-38, %v1774
          %v1776 = vsel %vm1773, %v1775, %v1771
          %v1777 = vmul.f32 1.0, %v1776
          %v1778 = vrcp.pop %v1762
          %v1779 = vmul.f32 %v1762, %v1778
          %v1780 = vsub.f32 1.0, %v1779
          %v1781 = vmul.f32 %v1778, %v1780
          %v1782 = vadd.f32 %v1778, %v1781
          %vm1783 = vweird.f32 %v1762
          %vm1784 = vweird.f32 %v1778
          %vm1785 = vmor %vm1783, %vm1784
          %v1786 = vsel %vm1785, %v1778, %v1782
          %v1787 = vand.u32 2147483647, %v1762
          %vm1788 = vcmp.eq.f32.partialorder %v1787, 8.507059e+37
          %v1789 = vand.u32 %v1762, 2147483648
          %v1790 = vor.u32 1.1754944e-38, %v1789
          %v1791 = vsel %vm1788, %v1790, %v1786
          %v1792 = vmul.f32 1.0, %v1791
          %v1793 = vtanh.pop %v1573
          %v1794 = vtanh.pop %v1575
          %v1795 = vxor.u32 %v1587, 2147483648
          %v1796 = vxor.u32 %v1589, 2147483648
          %v1797 = vmul.f32 %v1795, 1.442695
          %v1798 = vpow.pop %v1797
          %v1799 = vmul.f32 %v1796, 1.442695
          %v1800 = vpow.pop %v1799
          %v1801 = vadd.f32 %v1798, 1.0
          %v1802 = vadd.f32 %v1800, 1.0
          %v1803 = vrcp.pop %v1801
          %v1804 = vmul.f32 %v1801, %v1803
          %v1805 = vsub.f32 1.0, %v1804
          %v1806 = vmul.f32 %v1803, %v1805
          %v1807 = vadd.f32 %v1803, %v1806
          %vm1808 = vweird.f32 %v1801
          %vm1809 = vweird.f32 %v1803
          %vm1810 = vmor %vm1808, %vm1809
          %v1811 = vsel %vm1810, %v1803, %v1807
          %v1812 = vand.u32 2147483647, %v1801
          %vm1813 = vcmp.eq.f32.partialorder %v1812, 8.507059e+37
          %v1814 = vand.u32 %v1801, 2147483648
          %v1815 = vor.u32 1.1754944e-38, %v1814
          %v1816 = vsel %vm1813, %v1815, %v1811
          %v1817 = vmul.f32 1.0, %v1816
          %v1818 = vrcp.pop %v1802
          %v1819 = vmul.f32 %v1802, %v1818
          %v1820 = vsub.f32 1.0, %v1819
          %v1821 = vmul.f32 %v1818, %v1820
          %v1822 = vadd.f32 %v1818, %v1821
          %vm1823 = vweird.f32 %v1802
          %vm1824 = vweird.f32 %v1818
          %vm1825 = vmor %vm1823, %vm1824
          %v1826 = vsel %vm1825, %v1818, %v1822
          %v1827 = vand.u32 2147483647, %v1802
          %vm1828 = vcmp.eq.f32.partialorder %v1827, 8.507059e+37
          %v1829 = vand.u32 %v1802, 2147483648
          %v1830 = vor.u32 1.1754944e-38, %v1829
          %v1831 = vsel %vm1828, %v1830, %v1826
          %v1832 = vmul.f32 1.0, %v1831
          %v1833 = vmul.f32 %v1777, %v1053
          %v1834 = vmul.f32 %v1792, %v1054
          %v1835 = vmul.f32 %v1739, %v1793
          %v1836 = vmul.f32 %v1754, %v1794
          %v1837 = vadd.f32 %v1833, %v1835
          %v1838 = vadd.f32 %v1834, %v1836
          %v1839 = vtanh.pop %v1837
          %v1840 = vtanh.pop %v1838
          %v1841 = vmul.f32 %v1817, %v1839
          %v1842 = vmul.f32 %v1832, %v1840
          %v1843 = vstv %s1055
          %vm1844 = vcmp.gt.s32.totalorder %v1030, %v1843
          %vm1845 = vcmp.gt.s32.totalorder %v1031, %v1843
          %s1846 = ssub.s32 7, %s1055
          %v1847 = vstv %s1846
          %vm1848 = vcmp.gt.s32.totalorder %v1030, %v1847
          %vm1849 = vcmp.gt.s32.totalorder %v1031, %v1847
          %v1850 = vsel %vm1844, 1, 0
          %v1851 = vsel %vm1845, 1, 0
          %1852 = vset.pattern.permute.xlu0 0
          %1853 = vperm.xlu0 %1852, %v1850
          %v1854 = vpop.permute.xlu0 %1853
          %1855 = vset.pattern.permute.xlu0 0
          %1856 = vperm.xlu0 %1855, %v1851
          %v1857 = vpop.permute.xlu0 %1856
          %vm1858 = vcmp.eq.s32.totalorder %v1854, 1
          %vm1859 = vcmp.eq.s32.totalorder %v1857, 1
          %v1860 = vsel %vm1858, %v1715, %v1047
          %v1861 = vsel %vm1859, %v1716, %v1048
          %v1862 = vsel %vm1858, %v1711, %v1049
          %v1863 = vsel %vm1859, %v1712, %v1050
          %v1864 = vsel %vm1848, 1, 0
          %v1865 = vsel %vm1849, 1, 0
          %1866 = vset.pattern.permute.xlu0 0
          %1867 = vperm.xlu0 %1866, %v1864
          %v1868 = vpop.permute.xlu0 %1867
          %1869 = vset.pattern.permute.xlu0 0
          %1870 = vperm.xlu0 %1869, %v1865
          %v1871 = vpop.permute.xlu0 %1870
          %vm1872 = vcmp.eq.s32.totalorder %v1868, 1
          %vm1873 = vcmp.eq.s32.totalorder %v1871, 1
          %v1874 = vsel %vm1872, %v1841, %v1051
          %v1875 = vsel %vm1873, %v1842, %v1052
          %v1876 = vsel %vm1872, %v1837, %v1053
          %v1877 = vsel %vm1873, %v1838, %v1054
          %v1878 = vld [vmem:[#allocation8] sm:$0xff]
          %v1879 = vld [vmem:[#allocation8 + $0x8] sm:$0xff]
          %v1880 = vsel %vm1858, %v1715, 0.0
          %v1881 = vsel %vm1859, %v1716, 0.0
          %v1882 = vadd.f32 %v1878, %v1880
          %v1883 = vadd.f32 %v1879, %v1881
          %1884 = vst [vmem:[#allocation8] sm:$0xff] %v1882
          %1885 = vst [vmem:[#allocation8 + $0x8] sm:$0xff] %v1883
          %v1886 = vld [vmem:[#allocation9] sm:$0xff]
          %v1887 = vld [vmem:[#allocation9 + $0x8] sm:$0xff]
          %v1888 = vsel %vm1872, %v1841, 0.0
          %v1889 = vsel %vm1873, %v1842, 0.0
          %v1890 = vadd.f32 %v1886, %v1888
          %v1891 = vadd.f32 %v1887, %v1889
          %1892 = vst [vmem:[#allocation9] sm:$0xff] %v1890
          %1893 = vst [vmem:[#allocation9 + $0x8] sm:$0xff] %v1891
        $region105: #{tpu_custom_call.1} parent=75 // loop_footer
          %s1046 = sadd.s32 1, %s1042
        $region106: #{tpu_custom_call.1} parent=75 // loop_footer_branch
          %1041 = sbr.rel target = $region102
        $region107: #{tpu_custom_call.1} parent=75 // loop_exit
          _
        %1894 = vst [vmem:[#allocation4] sm:$0xff] %v1047
        %1895 = vst [vmem:[#allocation4 + $0x8] sm:$0xff] %v1048
        %1896 = vst [vmem:[#allocation5] sm:$0xff] %v1049
        %1897 = vst [vmem:[#allocation5 + $0x8] sm:$0xff] %v1050
        %1898 = vst [vmem:[#allocation6] sm:$0xff] %v1051
        %1899 = vst [vmem:[#allocation6 + $0x8] sm:$0xff] %v1052
        %1900 = vst [vmem:[#allocation7] sm:$0xff] %v1053
        %1901 = vst [vmem:[#allocation7 + $0x8] sm:$0xff] %v1054
        %p1902 = scmp.eq.s32.totalorder %s29, 1
        // Predicated region
        $region108: #{tpu_custom_call.1} parent=75 // pred_check
          %p1903 = pneg %p1902
        $region109: #{tpu_custom_call.1} parent=75 // pred_check_branch
          %1905 = sbr.rel (%p1903) target = $region111
        $region110: #{tpu_custom_call.1} parent=75 // pred_region
          %vm1906 = vcmp.gt.s32.totalorder %v1030, 1
          %v1907 = vsel %vm1906, %v1030, 1
          %vm1908 = vcmp.gt.s32.totalorder %v1031, 1
          %v1909 = vsel %vm1908, %v1031, 1
          %v1910 = vcvt.s32.f32 %v1907
          %v1911 = vcvt.s32.f32 %v1909
          %v1912 = vrcp.pop %v1910
          %v1913 = vmul.f32 %v1910, %v1912
          %v1914 = vsub.f32 1.0, %v1913
          %v1915 = vmul.f32 %v1912, %v1914
          %v1916 = vadd.f32 %v1912, %v1915
          %vm1917 = vweird.f32 %v1910
          %vm1918 = vweird.f32 %v1912
          %vm1919 = vmor %vm1917, %vm1918
          %v1920 = vsel %vm1919, %v1912, %v1916
          %v1921 = vand.u32 2147483647, %v1910
          %vm1922 = vcmp.eq.f32.partialorder %v1921, 8.507059e+37
          %v1923 = vand.u32 %v1910, 2147483648
          %v1924 = vor.u32 1.1754944e-38, %v1923
          %v1925 = vsel %vm1922, %v1924, %v1920
          %v1926 = vmul.f32 1.0, %v1925
          %v1927 = vrcp.pop %v1911
          %v1928 = vmul.f32 %v1911, %v1927
          %v1929 = vsub.f32 1.0, %v1928
          %v1930 = vmul.f32 %v1927, %v1929
          %v1931 = vadd.f32 %v1927, %v1930
          %vm1932 = vweird.f32 %v1911
          %vm1933 = vweird.f32 %v1927
          %vm1934 = vmor %vm1932, %vm1933
          %v1935 = vsel %vm1934, %v1927, %v1931
          %v1936 = vand.u32 2147483647, %v1911
          %vm1937 = vcmp.eq.f32.partialorder %v1936, 8.507059e+37
          %v1938 = vand.u32 %v1911, 2147483648
          %v1939 = vor.u32 1.1754944e-38, %v1938
          %v1940 = vsel %vm1937, %v1939, %v1935
          %v1941 = vmul.f32 1.0, %v1940
          %v1942 = vld [vmem:[#allocation8] sm:$0xff]
          %v1943 = vld [vmem:[#allocation8 + $0x8] sm:$0xff]
          %1945 = vset.pattern.permute.xlu0 0
          %1946 = vperm.xlu0 %1945, %v1926
          %v1947 = vpop.permute.xlu0 %1946
          %1950 = vset.pattern.permute.xlu0 0
          %1951 = vperm.xlu0 %1950, %v1941
          %v1952 = vpop.permute.xlu0 %1951
          %v1954 = vmul.f32 %v1942, %v1947
          %v1955 = vmul.f32 %v1943, %v1952
          %v1956 = vpack.c.bf16 %v1955, %v1954
          %v1957 = vld [vmem:[#allocation9] sm:$0xff]
          %v1958 = vld [vmem:[#allocation9 + $0x8] sm:$0xff]
          %v1959 = vmul.f32 %v1957, %v1947
          %v1960 = vmul.f32 %v1958, %v1952
          %v1961 = vpack.c.bf16 %v1960, %v1959
          %v1962 = vld [vmem:[%s9] sm:$0xf]
          %v1963 = vld [vmem:[%s9 + $0x4] sm:$0xf]
          %v1964 = vld [vmem:[%s9 + $0x8] sm:$0xf]
          %v1965 = vld [vmem:[%s9 + $0xc] sm:$0xf]
          %v1966 = vld [vmem:[%s9 + $0x10] sm:$0xf]
          %v1967 = vld [vmem:[%s9 + $0x14] sm:$0xf]
          %v1968 = vld [vmem:[%s9 + $0x18] sm:$0xf]
          %v1969 = vld [vmem:[%s9 + $0x1c] sm:$0xf]
          %v1970 = vld [vmem:[%s9 + $0x20] sm:$0xf]
          %v1971 = vld [vmem:[%s9 + $0x24] sm:$0xf]
          %v1972 = vld [vmem:[%s9 + $0x28] sm:$0xf]
          %v1973 = vld [vmem:[%s9 + $0x2c] sm:$0xf]
          %v1974 = vld [vmem:[%s9 + $0x30] sm:$0xf]
          %v1975 = vld [vmem:[%s9 + $0x34] sm:$0xf]
          %v1976 = vld [vmem:[%s9 + $0x38] sm:$0xf]
          %v1977 = vld [vmem:[%s9 + $0x3c] sm:$0xf]
          %v1978 = vld [vmem:[%s10] sm:$0xf]
          %v1979 = vld [vmem:[%s10 + $0x4] sm:$0xf]
          %v1980 = vld [vmem:[%s10 + $0x8] sm:$0xf]
          %v1981 = vld [vmem:[%s10 + $0xc] sm:$0xf]
          %v1982 = vld [vmem:[%s10 + $0x10] sm:$0xf]
          %v1983 = vld [vmem:[%s10 + $0x14] sm:$0xf]
          %v1984 = vld [vmem:[%s10 + $0x18] sm:$0xf]
          %v1985 = vld [vmem:[%s10 + $0x1c] sm:$0xf]
          %v1986 = vld [vmem:[%s10 + $0x20] sm:$0xf]
          %v1987 = vld [vmem:[%s10 + $0x24] sm:$0xf]
          %v1988 = vld [vmem:[%s10 + $0x28] sm:$0xf]
          %v1989 = vld [vmem:[%s10 + $0x2c] sm:$0xf]
          %v1990 = vld [vmem:[%s10 + $0x30] sm:$0xf]
          %v1991 = vld [vmem:[%s10 + $0x34] sm:$0xf]
          %v1992 = vld [vmem:[%s10 + $0x38] sm:$0xf]
          %v1993 = vld [vmem:[%s10 + $0x3c] sm:$0xf]
          %v2010 = vunpack.c.l.b16 %v1978
          %v2011 = vunpack.c.l.b16 %v1979
          %v2012 = vunpack.c.l.b16 %v1980
          %v2013 = vunpack.c.l.b16 %v1981
          %v2014 = vunpack.c.l.b16 %v1982
          %v2015 = vunpack.c.l.b16 %v1983
          %v2016 = vunpack.c.l.b16 %v1984
          %v2017 = vunpack.c.l.b16 %v1985
          %v2018 = vunpack.c.l.b16 %v1986
          %v2019 = vunpack.c.l.b16 %v1987
          %v2020 = vunpack.c.l.b16 %v1988
          %v2021 = vunpack.c.l.b16 %v1989
          %v2022 = vunpack.c.l.b16 %v1990
          %v2023 = vunpack.c.l.b16 %v1991
          %v2024 = vunpack.c.l.b16 %v1992
          %v2025 = vunpack.c.l.b16 %v1993
          %v2026 = vpack.c.b16 %v2011, %v2010
          %v2027 = vpack.c.b16 %v2013, %v2012
          %v2028 = vpack.c.b16 %v2015, %v2014
          %v2029 = vpack.c.b16 %v2017, %v2016
          %v2030 = vpack.c.b16 %v2019, %v2018
          %v2031 = vpack.c.b16 %v2021, %v2020
          %v2032 = vpack.c.b16 %v2023, %v2022
          %v2033 = vpack.c.b16 %v2025, %v2024
          %2042 = vmatpush.bf16.msra.mxu0 %v2033
          %2043 = vmatpush.bf16.msra.mxu0 %v2032
          %2044 = vmatpush.bf16.msra.mxu0 %v2031
          %2045 = vmatpush.bf16.msra.mxu0 %v2030
          %2046 = vmatpush.bf16.msra.mxu0 %v2029
          %2047 = vmatpush.bf16.msra.mxu0 %v2028
          %2048 = vmatpush.bf16.msra.mxu0 %v2027
          %2049 = vmatpush.bf16.msra.mxu0 %v2026
          %2050 = vmatmul.bf16.gmra.mxu0 %v1961
          %v2051 = vpop.f32.mrf.mxu0
          %v2052 = vadd.f32 0.0, %v2051
          %v2053 = vpop.f32.mrf.mxu0
          %v2054 = vadd.f32 0.0, %v2053
          %2055 = vdwg.mxu0
          %v2072 = vunpack.c.l.b16 %v1962
          %v2073 = vunpack.c.l.b16 %v1963
          %v2074 = vunpack.c.l.b16 %v1964
          %v2075 = vunpack.c.l.b16 %v1965
          %v2076 = vunpack.c.l.b16 %v1966
          %v2077 = vunpack.c.l.b16 %v1967
          %v2078 = vunpack.c.l.b16 %v1968
          %v2079 = vunpack.c.l.b16 %v1969
          %v2080 = vunpack.c.l.b16 %v1970
          %v2081 = vunpack.c.l.b16 %v1971
          %v2082 = vunpack.c.l.b16 %v1972
          %v2083 = vunpack.c.l.b16 %v1973
          %v2084 = vunpack.c.l.b16 %v1974
          %v2085 = vunpack.c.l.b16 %v1975
          %v2086 = vunpack.c.l.b16 %v1976
          %v2087 = vunpack.c.l.b16 %v1977
          %v2088 = vpack.c.b16 %v2073, %v2072
          %v2089 = vpack.c.b16 %v2075, %v2074
          %v2090 = vpack.c.b16 %v2077, %v2076
          %v2091 = vpack.c.b16 %v2079, %v2078
          %v2092 = vpack.c.b16 %v2081, %v2080
          %v2093 = vpack.c.b16 %v2083, %v2082
          %v2094 = vpack.c.b16 %v2085, %v2084
          %v2095 = vpack.c.b16 %v2087, %v2086
          %2104 = vmatpush.bf16.msra.mxu0 %v2095
          %2105 = vmatpush.bf16.msra.mxu0 %v2094
          %2106 = vmatpush.bf16.msra.mxu0 %v2093
          %2107 = vmatpush.bf16.msra.mxu0 %v2092
          %2108 = vmatpush.bf16.msra.mxu0 %v2091
          %2109 = vmatpush.bf16.msra.mxu0 %v2090
          %2110 = vmatpush.bf16.msra.mxu0 %v2089
          %2111 = vmatpush.bf16.msra.mxu0 %v2088
          %2112 = vmatmul.bf16.gmra.mxu0 %v1956
          %v2113 = vpop.f32.mrf.mxu0
          %v2114 = vadd.f32 %v2052, %v2113
          %v2115 = vpop.f32.mrf.mxu0
          %v2116 = vadd.f32 %v2054, %v2115
          %2117 = vdwg.mxu0
          %v2118 = vld [vmem:[%s11] sm:$0x1]
          %v2120 = vperm.slane %v2118, 0
          %v2122 = vadd.f32 %v2114, %v2120
          %v2123 = vadd.f32 %v2116, %v2120
          %v2124 = vpack.c.bf16 %v2123, %v2122
          %v2125 = vld [vmem:[#allocation18] sm:$0xf]
          %v2126 = vld [vmem:[#allocation18 + $0x4] sm:$0xf]
          %v2127 = vld [vmem:[#allocation18 + $0x8] sm:$0xf]
          %v2128 = vld [vmem:[#allocation18 + $0xc] sm:$0xf]
          %v2129 = vld [vmem:[#allocation18 + $0x10] sm:$0xf]
          %v2130 = vld [vmem:[#allocation18 + $0x14] sm:$0xf]
          %v2131 = vld [vmem:[#allocation18 + $0x18] sm:$0xf]
          %v2132 = vld [vmem:[#allocation18 + $0x1c] sm:$0xf]
          %v2133 = vld [vmem:[#allocation18 + $0x20] sm:$0xf]
          %v2134 = vld [vmem:[#allocation18 + $0x24] sm:$0xf]
          %v2135 = vld [vmem:[#allocation18 + $0x28] sm:$0xf]
          %v2136 = vld [vmem:[#allocation18 + $0x2c] sm:$0xf]
          %v2137 = vld [vmem:[#allocation18 + $0x30] sm:$0xf]
          %v2138 = vld [vmem:[#allocation18 + $0x34] sm:$0xf]
          %v2139 = vld [vmem:[#allocation18 + $0x38] sm:$0xf]
          %v2140 = vld [vmem:[#allocation18 + $0x3c] sm:$0xf]
          %v2141 = vld [vmem:[%s13] sm:$0x1]
          %v2143 = vperm.slane %v2141, 0
          %v2161 = vunpack.c.l.b16 %v2125
          %v2162 = vunpack.c.l.b16 %v2126
          %v2163 = vunpack.c.l.b16 %v2127
          %v2164 = vunpack.c.l.b16 %v2128
          %v2165 = vunpack.c.l.b16 %v2129
          %v2166 = vunpack.c.l.b16 %v2130
          %v2167 = vunpack.c.l.b16 %v2131
          %v2168 = vunpack.c.l.b16 %v2132
          %v2169 = vunpack.c.l.b16 %v2133
          %v2170 = vunpack.c.l.b16 %v2134
          %v2171 = vunpack.c.l.b16 %v2135
          %v2172 = vunpack.c.l.b16 %v2136
          %v2173 = vunpack.c.l.b16 %v2137
          %v2174 = vunpack.c.l.b16 %v2138
          %v2175 = vunpack.c.l.b16 %v2139
          %v2176 = vunpack.c.l.b16 %v2140
          %v2177 = vpack.c.b16 %v2162, %v2161
          %v2178 = vpack.c.b16 %v2164, %v2163
          %v2179 = vpack.c.b16 %v2166, %v2165
          %v2180 = vpack.c.b16 %v2168, %v2167
          %v2181 = vpack.c.b16 %v2170, %v2169
          %v2182 = vpack.c.b16 %v2172, %v2171
          %v2183 = vpack.c.b16 %v2174, %v2173
          %v2184 = vpack.c.b16 %v2176, %v2175
          %2193 = vmatpush.bf16.msra.mxu0 %v2184
          %2194 = vmatpush.bf16.msra.mxu0 %v2183
          %2195 = vmatpush.bf16.msra.mxu0 %v2182
          %2196 = vmatpush.bf16.msra.mxu0 %v2181
          %2197 = vmatpush.bf16.msra.mxu0 %v2180
          %2198 = vmatpush.bf16.msra.mxu0 %v2179
          %2199 = vmatpush.bf16.msra.mxu0 %v2178
          %2200 = vmatpush.bf16.msra.mxu0 %v2177
          %2201 = vmatmul.bf16.gmra.mxu0 %v2124
          %v2202 = vpop.f32.mrf.mxu0
          %v2203 = vadd.f32 %v2143, %v2202
          %v2204 = vpop.f32.mrf.mxu0
          %v2205 = vadd.f32 %v2143, %v2204
          %2206 = vdwg.mxu0
          %2207 = vst [vmem:[#allocation19] sm:$0xff] %v2203
          %2208 = vst [vmem:[#allocation19 + $0x8] sm:$0xff] %v2205
        $region111: #{tpu_custom_call.1} parent=75 // pred_fallthru
          _
        // Predicated region
        $region112: #{tpu_custom_call.1} parent=75 // pred_check
          %p2209 = pneg %p348
        $region113: #{tpu_custom_call.1} parent=75 // pred_check_branch
          %2211 = sbr.rel (%p2209) target = $region115
        $region114: #{tpu_custom_call.1} parent=75 // pred_region
          %2213 = vsyncadd [#allocation12], 0
          %s2214 = sshll.u32 [#allocation19], 4
          %s2215 = int_to_ptr.vmem [resolvable:$true] %s2214
          %s2216 = sshll.u32 %s14, 4
          %s2217 = int_to_ptr.hbm [resolvable:$true] %s2216
          %2222 = dma.vmem_to_hbm [thread:$0]  %s2215, 256, %s2217, [#allocation12], 128, 128, 8
        $region115: #{tpu_custom_call.1} parent=75 // pred_fallthru
          _
        // Predicated region
        $region116: #{tpu_custom_call.1} parent=75 // pred_check
          %p2223 = pneg %p348
        $region117: #{tpu_custom_call.1} parent=75 // pred_check_branch
          %2225 = sbr.rel (%p2223) target = $region119
        $region118: #{tpu_custom_call.1} parent=75 // pred_region
          %2227 = dma.done [#allocation12], 256
        $region119: #{tpu_custom_call.1} parent=75 // pred_fallthru
          _
      $region76: #{tpu_custom_call.1} parent=5 // pred_fallthru
        _
      %p2228 = scmp.le.s32.totalorder 2, %s24
      // Predicated region
      $region120: #{tpu_custom_call.1} parent=5 // pred_check
        %p2229 = pneg %p2228
      $region121: #{tpu_custom_call.1} parent=5 // pred_check_branch
        %2231 = sbr.rel (%p2229) target = $region123
      $region122: #{tpu_custom_call.1} parent=5 // pred_region
        %s2232 = ssub.s32 %s24, 2
      $region123: #{tpu_custom_call.1} parent=5 // pred_fallthru
        _
    $region6: #{tpu_custom_call.1} parent=1 // loop_footer
      %s28 = sadd.s32 1, %s24
    $region7: #{tpu_custom_call.1} parent=1 // loop_footer_branch
      %23 = sbr.rel target = $region3
    $region8: #{tpu_custom_call.1} parent=1 // loop_exit
      _
    %2233 = vsyncpa [#allocation11], 1
    %s2234 = scalar_lea.sflag [#allocation11], 1
    %2235 = vsyncpa %s2234, 1
    %2236 = vsyncpa [#allocation14], 1
    %2237 = vsyncpa [#allocation17], 1
    %2238 = vsyncpa [#allocation12], 1
    %s2239 = scalar_lea.sflag [#allocation12], 1
    %2240 = vsyncpa %s2239, 1

// kernel: tpu_custom_call.1
$region0: #{tpu_custom_call.1}
  #allocation0 [shape = 'u32[]', space=smem, size = 0x4, offset = 0x4, fixed_abs, tag = 'smem constant byte address 0x4 - core index']
  #allocation1 [shape = 'u32[72,128]{1,0:T(1,128)}', space=vmem, size = 0x9000, scoped, tag = 'internal scratch']
  #allocation2 [shape = 'bf16[64,512]{1,0:T(8,128)(2,1)}', space=vmem, size = 0x10000, scoped, tag = 'scratch operand']
  #allocation3 [shape = 'bf16[64,512]{1,0:T(8,128)(2,1)}', space=vmem, size = 0x10000, scoped, tag = 'scratch operand']
  #allocation4 [shape = 'f32[16,128]{1,0:T(8,128)}', space=vmem, size = 0x2000, scoped, tag = 'scratch operand']
  #allocation5 [shape = 'f32[16,128]{1,0:T(8,128)}', space=vmem, size = 0x2000, scoped, tag = 'scratch operand']
  #allocation6 [shape = 'f32[16,128]{1,0:T(8,128)}', space=vmem, size = 0x2000, scoped, tag = 'scratch operand']
  #allocation7 [shape = 'f32[16,128]{1,0:T(8,128)}', space=vmem, size = 0x2000, scoped, tag = 'scratch operand']
  #allocation8 [shape = 'f32[16,128]{1,0:T(8,128)}', space=vmem, size = 0x2000, scoped, tag = 'scratch operand']
  #allocation9 [shape = 'f32[16,128]{1,0:T(8,128)}', space=vmem, size = 0x2000, scoped, tag = 'scratch operand']
  %s0 = inlined_call_operand.vmem [shape: s32[16,1], index: 0, kind: input, shape index: {}]
  %s1 = inlined_call_operand.vmem [shape: bf16[128,16], index: 1, kind: input, shape index: {}]
  %s2 = inlined_call_operand.vmem [shape: bf16[128,16], index: 2, kind: input, shape index: {}]
  %s3 = inlined_call_operand.hbm [shape: bf16[16,512], index: 3, kind: input, shape index: {}]
  %s4 = inlined_call_operand.hbm [shape: bf16[16,512], index: 4, kind: input, shape index: {}]
  %s5 = inlined_call_operand.vmem [shape: f32[1,512], index: 5, kind: input, shape index: {}]
  %s6 = inlined_call_operand.vmem [shape: f32[1,512], index: 6, kind: input, shape index: {}]
  %s7 = inlined_call_operand.hbm [shape: bf16[128,512], index: 7, kind: input, shape index: {}]
  %s8 = inlined_call_operand.hbm [shape: bf16[128,512], index: 8, kind: input, shape index: {}]
  %s9 = inlined_call_operand.vmem [shape: bf16[128,128], index: 9, kind: input, shape index: {}]
  %s10 = inlined_call_operand.vmem [shape: bf16[128,128], index: 10, kind: input, shape index: {}]
  %s11 = inlined_call_operand.vmem [shape: f32[1,128], index: 11, kind: input, shape index: {}]
  %s12 = inlined_call_operand.hbm [shape: bf16[128,128], index: 12, kind: input, shape index: {}]
  %s13 = inlined_call_operand.vmem [shape: f32[1,128], index: 13, kind: input, shape index: {}]
  %s14 = inlined_call_operand.hbm [shape: f32[16,128], index: 14, kind: output, shape index: {}]
  %s15 = sld [smem:[#allocation0]]
  $region124: #{tpu_custom_call.1} parent=0
    _
  %s17 = ssub.s32 1, %s15
  %s18 = scalar_select 0, %s17, %s15
  $region1: #{tpu_custom_call.1} parent=0
    #allocation10 [shape = 'u8[16384]{0}', space=vmem, size = 0x4000, scoped, tag = 'input window, operand 3, single buffered']
    #allocation11 [shape = 's32[2]{0}', space=sflag, size = 0x8, scoped, tag = 'scoped memory for tpu_custom_call.1']
    #allocation12 [shape = 's32[2]{0}', space=sflag, size = 0x8, scoped, tag = 'scoped memory for tpu_custom_call.1']
    #allocation13 [shape = 'u8[16384]{0}', space=vmem, size = 0x4000, scoped, tag = 'input window, operand 4, single buffered']
    #allocation14 [shape = 's32[1]{0}', space=sflag, size = 0x4, scoped, tag = 'scoped memory for tpu_custom_call.1']
    #allocation15 [shape = 'u8[131072]{0}', space=vmem, size = 0x20000, scoped, tag = 'input window, operand 7, single buffered']
    #allocation16 [shape = 'u8[131072]{0}', space=vmem, size = 0x20000, scoped, tag = 'input window, operand 8, single buffered']
    #allocation17 [shape = 's32[1]{0}', space=sflag, size = 0x4, scoped, tag = 'scoped memory for tpu_custom_call.1']
    #allocation18 [shape = 'u8[32768]{0}', space=vmem, size = 0x8000, scoped, tag = 'input window, operand 12, single buffered']
    #allocation19 [shape = 'u8[8192]{0}', space=vmem, size = 0x2000, scoped, tag = 'output window, operand 0, single buffered']
    %19 = vsyncpa [#allocation11], 0
    %20 = vsyncpa [#allocation14], 0
    %21 = vsyncpa [#allocation17], 0
    %22 = vsyncpa [#allocation12], 0
    loop: start=0, step=1, limit=4
    $region2: #{tpu_custom_call.1} parent=1 // loop_pre_header
      _
    $region3: #{tpu_custom_call.1} parent=1 // loop_header
      %s24 = sphi 0, %s28
      %p25 = scmp.ge.s32.totalorder %s24, 4
      %s32 = sphi 0, %s32
      %s34 = sphi 0, %s32
      %s35 = sphi 0, %s34
      %s49 = sphi 0, %s35
      %s55 = sphi 0, %s57
      %s58 = sphi 0, %s55
      %s59 = sphi 0, %s58
      %s75 = sphi 0, %s59
      %s83 = sphi 0, %s85
      %s86 = sphi 0, %s83
      %s87 = sphi 0, %s86
      %s103 = sphi 0, %s87
      %s107 = sphi 0, %s107
      %s109 = sphi 0, %s107
      %s110 = sphi 0, %s109
      %s124 = sphi 0, %s110
      %s128 = sphi 0, %s128
      %s130 = sphi 0, %s128
      %s131 = sphi 0, %s130
      %s145 = sphi 0, %s131
      %s149 = sphi 0, %s149
      %s151 = sphi 0, %s149
      %s152 = sphi 0, %s151
      %s166 = sphi 0, %s152
      %s170 = sphi 0, %s170
      %s172 = sphi 0, %s170
      %s173 = sphi 0, %s172
      %s187 = sphi 0, %s173
      %s191 = sphi 0, %s191
      %s193 = sphi 0, %s191
      %s194 = sphi 0, %s193
      %s208 = sphi 0, %s194
      %s212 = sphi 0, %s212
      %s214 = sphi 0, %s212
      %s215 = sphi 0, %s214
      %s229 = sphi 0, %s215
      %s233 = sphi 0, %s233
      %s235 = sphi 0, %s233
      %s236 = sphi 0, %s235
      %s250 = sphi 0, %s236
      %s254 = sphi 0, %s254
      %s256 = sphi 0, %s254
      %s257 = sphi 0, %s256
      %s271 = sphi 0, %s257
      %s275 = sphi 0, %s275
      %s277 = sphi 0, %s275
      %s278 = sphi 0, %s277
      %s292 = sphi 0, %s278
      %s296 = sphi 0, %s296
      %s298 = sphi 0, %s296
      %s299 = sphi 0, %s298
      %s313 = sphi 0, %s299
      %s317 = sphi 0, %s317
      %s319 = sphi 0, %s317
      %s320 = sphi 0, %s319
      %s334 = sphi 0, %s320
      %s338 = sphi 0, %s338
      %s340 = sphi 0, %s338
      %s341 = sphi 0, %s340
      %s355 = sphi 0, %s341
    $region4: #{tpu_custom_call.1} parent=1 // loop_header_branch
      %27 = sbr.rel (%p25) target = $region8
    $region5: #{tpu_custom_call.1} parent=1 // loop_body
      %s29 = ssub.s32 %s24, 1
      %s30 = ssub.s32 %s24, 2
      %s31 = sadd.s32 %s24, 1
      %s33 = sadd.s32 %s32, 1
      %p36 = scmp.eq.s32.totalorder %s24, 1
      %p37 = scmp.ne.s32.totalorder %s32, %s34
      %p38 = scmp.eq.s32.totalorder %s24, 0
      %p39 = por %p37, %p38
      %p40 = scmp.ne.s32.totalorder %s32, %s34
      %p41 = scmp.eq.s32.totalorder %s29, 1
      %p42 = por %p40, %p41
      %p43 = scmp.ne.s32.totalorder %s34, %s35
      %p44 = scmp.eq.s32.totalorder %s29, 0
      %p45 = por %p43, %p44
      %p46 = scmp.ne.s32.totalorder %s34, %s35
      %p47 = scmp.eq.s32.totalorder %s30, 1
      %p48 = por %p46, %p47
      %p50 = scmp.ne.s32.totalorder %s35, %s49
      %p51 = scmp.eq.s32.totalorder %s30, 0
      %p52 = por %p50, %p51
      %s53 = ssub.s32 %s24, %s31
      %p54 = scmp.eq.s32.totalorder %s53, 0
      %s56 = sadd.s32 %s55, 1
      %s57 = scalar_select %p54, %s55, %s56
      %p60 = pneg %p54
      %p61 = scmp.eq.s32.totalorder %s24, 1
      %p62 = por %p60, %p61
      %p63 = scmp.ne.s32.totalorder %s55, %s58
      %p64 = scmp.eq.s32.totalorder %s24, 0
      %p65 = por %p63, %p64
      %p66 = scmp.ne.s32.totalorder %s55, %s58
      %p67 = scmp.eq.s32.totalorder %s29, 1
      %p68 = por %p66, %p67
      %p69 = scmp.ne.s32.totalorder %s58, %s59
      %p70 = scmp.eq.s32.totalorder %s29, 0
      %p71 = por %p69, %p70
      %p72 = scmp.ne.s32.totalorder %s58, %s59
      %p73 = scmp.eq.s32.totalorder %s30, 1
      %p74 = por %p72, %p73
      %p76 = scmp.ne.s32.totalorder %s59, %s75
      %p77 = scmp.eq.s32.totalorder %s30, 0
      %p78 = por %p76, %p77
      %s79 = ssub.s32 1, %s24
      %s80 = ssub.s32 1, %s31
      %s81 = ssub.s32 %s79, %s80
      %p82 = scmp.eq.s32.totalorder %s81, 0
      %s84 = sadd.s32 %s83, 1
      %s85 = scalar_select %p82, %s83, %s84
      %p88 = pneg %p82
      %p89 = scmp.eq.s32.totalorder %s24, 1
      %p90 = por %p88, %p89
      %p91 = scmp.ne.s32.totalorder %s83, %s86
      %p92 = scmp.eq.s32.totalorder %s24, 0
      %p93 = por %p91, %p92
      %p94 = scmp.ne.s32.totalorder %s83, %s86
      %p95 = scmp.eq.s32.totalorder %s29, 1
      %p96 = por %p94, %p95
      %p97 = scmp.ne.s32.totalorder %s86, %s87
      %p98 = scmp.eq.s32.totalorder %s29, 0
      %p99 = por %p97, %p98
      %p100 = scmp.ne.s32.totalorder %s86, %s87
      %p101 = scmp.eq.s32.totalorder %s30, 1
      %p102 = por %p100, %p101
      %p104 = scmp.ne.s32.totalorder %s87, %s103
      %p105 = scmp.eq.s32.totalorder %s30, 0
      %p106 = por %p104, %p105
      %s108 = sadd.s32 %s107, 1
      %p111 = scmp.eq.s32.totalorder %s24, 1
      %p112 = scmp.ne.s32.totalorder %s107, %s109
      %p113 = scmp.eq.s32.totalorder %s24, 0
      %p114 = por %p112, %p113
      %p115 = scmp.ne.s32.totalorder %s107, %s109
      %p116 = scmp.eq.s32.totalorder %s29, 1
      %p117 = por %p115, %p116
      %p118 = scmp.ne.s32.totalorder %s109, %s110
      %p119 = scmp.eq.s32.totalorder %s29, 0
      %p120 = por %p118, %p119
      %p121 = scmp.ne.s32.totalorder %s109, %s110
      %p122 = scmp.eq.s32.totalorder %s30, 1
      %p123 = por %p121, %p122
      %p125 = scmp.ne.s32.totalorder %s110, %s124
      %p126 = scmp.eq.s32.totalorder %s30, 0
      %p127 = por %p125, %p126
      %s129 = sadd.s32 %s128, 1
      %p132 = scmp.eq.s32.totalorder %s24, 1
      %p133 = scmp.ne.s32.totalorder %s128, %s130
      %p134 = scmp.eq.s32.totalorder %s24, 0
      %p135 = por %p133, %p134
      %p136 = scmp.ne.s32.totalorder %s128, %s130
      %p137 = scmp.eq.s32.totalorder %s29, 1
      %p138 = por %p136, %p137
      %p139 = scmp.ne.s32.totalorder %s130, %s131
      %p140 = scmp.eq.s32.totalorder %s29, 0
      %p141 = por %p139, %p140
      %p142 = scmp.ne.s32.totalorder %s130, %s131
      %p143 = scmp.eq.s32.totalorder %s30, 1
      %p144 = por %p142, %p143
      %p146 = scmp.ne.s32.totalorder %s131, %s145
      %p147 = scmp.eq.s32.totalorder %s30, 0
      %p148 = por %p146, %p147
      %s150 = sadd.s32 %s149, 1
      %p153 = scmp.eq.s32.totalorder %s24, 1
      %p154 = scmp.ne.s32.totalorder %s149, %s151
      %p155 = scmp.eq.s32.totalorder %s24, 0
      %p156 = por %p154, %p155
      %p157 = scmp.ne.s32.totalorder %s149, %s151
      %p158 = scmp.eq.s32.totalorder %s29, 1
      %p159 = por %p157, %p158
      %p160 = scmp.ne.s32.totalorder %s151, %s152
      %p161 = scmp.eq.s32.totalorder %s29, 0
      %p162 = por %p160, %p161
      %p163 = scmp.ne.s32.totalorder %s151, %s152
      %p164 = scmp.eq.s32.totalorder %s30, 1
      %p165 = por %p163, %p164
      %p167 = scmp.ne.s32.totalorder %s152, %s166
      %p168 = scmp.eq.s32.totalorder %s30, 0
      %p169 = por %p167, %p168
      %s171 = sadd.s32 %s170, 1
      %p174 = scmp.eq.s32.totalorder %s24, 1
      %p175 = scmp.ne.s32.totalorder %s170, %s172
      %p176 = scmp.eq.s32.totalorder %s24, 0
      %p177 = por %p175, %p176
      %p178 = scmp.ne.s32.totalorder %s170, %s172
      %p179 = scmp.eq.s32.totalorder %s29, 1
      %p180 = por %p178, %p179
      %p181 = scmp.ne.s32.totalorder %s172, %s173
      %p182 = scmp.eq.s32.totalorder %s29, 0
      %p183 = por %p181, %p182
      %p184 = scmp.ne.s32.totalorder %s172, %s173
      %p185 = scmp.eq.s32.totalorder %s30, 1
      %p186 = por %p184, %p185
      %p188 = scmp.ne.s32.totalorder %s173, %s187
      %p189 = scmp.eq.s32.totalorder %s30, 0
      %p190 = por %p188, %p189
      %s192 = sadd.s32 %s191, 1
      %p195 = scmp.eq.s32.totalorder %s24, 1
      %p196 = scmp.ne.s32.totalorder %s191, %s193
      %p197 = scmp.eq.s32.totalorder %s24, 0
      %p198 = por %p196, %p197
      %p199 = scmp.ne.s32.totalorder %s191, %s193
      %p200 = scmp.eq.s32.totalorder %s29, 1
      %p201 = por %p199, %p200
      %p202 = scmp.ne.s32.totalorder %s193, %s194
      %p203 = scmp.eq.s32.totalorder %s29, 0
      %p204 = por %p202, %p203
      %p205 = scmp.ne.s32.totalorder %s193, %s194
      %p206 = scmp.eq.s32.totalorder %s30, 1
      %p207 = por %p205, %p206
      %p209 = scmp.ne.s32.totalorder %s194, %s208
      %p210 = scmp.eq.s32.totalorder %s30, 0
      %p211 = por %p209, %p210
      %s213 = sadd.s32 %s212, 1
      %p216 = scmp.eq.s32.totalorder %s24, 1
      %p217 = scmp.ne.s32.totalorder %s212, %s214
      %p218 = scmp.eq.s32.totalorder %s24, 0
      %p219 = por %p217, %p218
      %p220 = scmp.ne.s32.totalorder %s212, %s214
      %p221 = scmp.eq.s32.totalorder %s29, 1
      %p222 = por %p220, %p221
      %p223 = scmp.ne.s32.totalorder %s214, %s215
      %p224 = scmp.eq.s32.totalorder %s29, 0
      %p225 = por %p223, %p224
      %p226 = scmp.ne.s32.totalorder %s214, %s215
      %p227 = scmp.eq.s32.totalorder %s30, 1
      %p228 = por %p226, %p227
      %p230 = scmp.ne.s32.totalorder %s215, %s229
      %p231 = scmp.eq.s32.totalorder %s30, 0
      %p232 = por %p230, %p231
      %s234 = sadd.s32 %s233, 1
      %p237 = scmp.eq.s32.totalorder %s24, 1
      %p238 = scmp.ne.s32.totalorder %s233, %s235
      %p239 = scmp.eq.s32.totalorder %s24, 0
      %p240 = por %p238, %p239
      %p241 = scmp.ne.s32.totalorder %s233, %s235
      %p242 = scmp.eq.s32.totalorder %s29, 1
      %p243 = por %p241, %p242
      %p244 = scmp.ne.s32.totalorder %s235, %s236
      %p245 = scmp.eq.s32.totalorder %s29, 0
      %p246 = por %p244, %p245
      %p247 = scmp.ne.s32.totalorder %s235, %s236
      %p248 = scmp.eq.s32.totalorder %s30, 1
      %p249 = por %p247, %p248
      %p251 = scmp.ne.s32.totalorder %s236, %s250
      %p252 = scmp.eq.s32.totalorder %s30, 0
      %p253 = por %p251, %p252
      %s255 = sadd.s32 %s254, 1
      %p258 = scmp.eq.s32.totalorder %s24, 1
      %p259 = scmp.ne.s32.totalorder %s254, %s256
      %p260 = scmp.eq.s32.totalorder %s24, 0
      %p261 = por %p259, %p260
      %p262 = scmp.ne.s32.totalorder %s254, %s256
      %p263 = scmp.eq.s32.totalorder %s29, 1
      %p264 = por %p262, %p263
      %p265 = scmp.ne.s32.totalorder %s256, %s257
      %p266 = scmp.eq.s32.totalorder %s29, 0
      %p267 = por %p265, %p266
      %p268 = scmp.ne.s32.totalorder %s256, %s257
      %p269 = scmp.eq.s32.totalorder %s30, 1
      %p270 = por %p268, %p269
      %p272 = scmp.ne.s32.totalorder %s257, %s271
      %p273 = scmp.eq.s32.totalorder %s30, 0
      %p274 = por %p272, %p273
      %s276 = sadd.s32 %s275, 1
      %p279 = scmp.eq.s32.totalorder %s24, 1
      %p280 = scmp.ne.s32.totalorder %s275, %s277
      %p281 = scmp.eq.s32.totalorder %s24, 0
      %p282 = por %p280, %p281
      %p283 = scmp.ne.s32.totalorder %s275, %s277
      %p284 = scmp.eq.s32.totalorder %s29, 1
      %p285 = por %p283, %p284
      %p286 = scmp.ne.s32.totalorder %s277, %s278
      %p287 = scmp.eq.s32.totalorder %s29, 0
      %p288 = por %p286, %p287
      %p289 = scmp.ne.s32.totalorder %s277, %s278
      %p290 = scmp.eq.s32.totalorder %s30, 1
      %p291 = por %p289, %p290
      %p293 = scmp.ne.s32.totalorder %s278, %s292
      %p294 = scmp.eq.s32.totalorder %s30, 0
      %p295 = por %p293, %p294
      %s297 = sadd.s32 %s296, 1
      %p300 = scmp.eq.s32.totalorder %s24, 1
      %p301 = scmp.ne.s32.totalorder %s296, %s298
      %p302 = scmp.eq.s32.totalorder %s24, 0
      %p303 = por %p301, %p302
      %p304 = scmp.ne.s32.totalorder %s296, %s298
      %p305 = scmp.eq.s32.totalorder %s29, 1
      %p306 = por %p304, %p305
      %p307 = scmp.ne.s32.totalorder %s298, %s299
      %p308 = scmp.eq.s32.totalorder %s29, 0
      %p309 = por %p307, %p308
      %p310 = scmp.ne.s32.totalorder %s298, %s299
      %p311 = scmp.eq.s32.totalorder %s30, 1
      %p312 = por %p310, %p311
      %p314 = scmp.ne.s32.totalorder %s299, %s313
      %p315 = scmp.eq.s32.totalorder %s30, 0
      %p316 = por %p314, %p315
      %s318 = sadd.s32 %s317, 1
      %p321 = scmp.eq.s32.totalorder %s24, 1
      %p322 = scmp.ne.s32.totalorder %s317, %s319
      %p323 = scmp.eq.s32.totalorder %s24, 0
      %p324 = por %p322, %p323
      %p325 = scmp.ne.s32.totalorder %s317, %s319
      %p326 = scmp.eq.s32.totalorder %s29, 1
      %p327 = por %p325, %p326
      %p328 = scmp.ne.s32.totalorder %s319, %s320
      %p329 = scmp.eq.s32.totalorder %s29, 0
      %p330 = por %p328, %p329
      %p331 = scmp.ne.s32.totalorder %s319, %s320
      %p332 = scmp.eq.s32.totalorder %s30, 1
      %p333 = por %p331, %p332
      %p335 = scmp.ne.s32.totalorder %s320, %s334
      %p336 = scmp.eq.s32.totalorder %s30, 0
      %p337 = por %p335, %p336
      %s339 = sadd.s32 %s338, 1
      %p342 = scmp.eq.s32.totalorder %s24, 1
      %p343 = scmp.ne.s32.totalorder %s338, %s340
      %p344 = scmp.eq.s32.totalorder %s24, 0
      %p345 = por %p343, %p344
      %p346 = scmp.ne.s32.totalorder %s338, %s340
      %p347 = scmp.eq.s32.totalorder %s29, 1
      %p348 = por %p346, %p347
      %p349 = scmp.ne.s32.totalorder %s340, %s341
      %p350 = scmp.eq.s32.totalorder %s29, 0
      %p351 = por %p349, %p350
      %p352 = scmp.ne.s32.totalorder %s340, %s341
      %p353 = scmp.eq.s32.totalorder %s30, 1
      %p354 = por %p352, %p353
      %p356 = scmp.ne.s32.totalorder %s341, %s355
      %p357 = scmp.eq.s32.totalorder %s30, 0
      %p358 = por %p356, %p357
      %p359 = scmp.le.s32.totalorder 1, %s24
      %p360 = scmp.lt.s32.totalorder %s24, 3
      %p361 = pnand %p359, %p360
      %p362 = pneg %p361
      // Predicated region
      $region9: #{tpu_custom_call.1} parent=5 // pred_check
        _
      $region10: #{tpu_custom_call.1} parent=5 // pred_check_branch
        %364 = sbr.rel (%p361) target = $region12
      $region11: #{tpu_custom_call.1} parent=5 // pred_region
        %s365 = ssub.s32 %s24, 1
        // Predicated region
        $region13: #{tpu_custom_call.1} parent=11 // pred_check
          %p366 = pneg %p45
        $region14: #{tpu_custom_call.1} parent=11 // pred_check_branch
          %368 = sbr.rel (%p366) target = $region16
        $region15: #{tpu_custom_call.1} parent=11 // pred_region
          _
        $region16: #{tpu_custom_call.1} parent=11 // pred_fallthru
          _
        // Predicated region
        $region17: #{tpu_custom_call.1} parent=11 // pred_check
          %p369 = pneg %p120
        $region18: #{tpu_custom_call.1} parent=11 // pred_check_branch
          %371 = sbr.rel (%p369) target = $region20
        $region19: #{tpu_custom_call.1} parent=11 // pred_region
          %373 = vsyncadd [#allocation11], 0
          %s374 = sshll.u32 %s3, 4
          %s375 = int_to_ptr.hbm [resolvable:$true] %s374
          %s376 = sshll.u32 [#allocation10], 4
          %s377 = int_to_ptr.vmem [resolvable:$true] %s376
          %382 = dma.hbm_to_vmem [thread:$0]  %s375, 512, %s377, [#allocation11], 256, 256, 16
        $region20: #{tpu_custom_call.1} parent=11 // pred_fallthru
          _
        // Predicated region
        $region21: #{tpu_custom_call.1} parent=11 // pred_check
          %p383 = pneg %p141
        $region22: #{tpu_custom_call.1} parent=11 // pred_check_branch
          %385 = sbr.rel (%p383) target = $region24
        $region23: #{tpu_custom_call.1} parent=11 // pred_region
          %387 = vsyncadd [#allocation14], 0
          %s388 = sshll.u32 %s4, 4
          %s389 = int_to_ptr.hbm [resolvable:$true] %s388
          %s390 = sshll.u32 [#allocation13], 4
          %s391 = int_to_ptr.vmem [resolvable:$true] %s390
          %396 = dma.hbm_to_vmem [thread:$0]  %s389, 512, %s391, [#allocation14], 256, 256, 16
        $region24: #{tpu_custom_call.1} parent=11 // pred_fallthru
          _
        // Predicated region
        $region25: #{tpu_custom_call.1} parent=11 // pred_check
          %p397 = pneg %p162
        $region26: #{tpu_custom_call.1} parent=11 // pred_check_branch
          %399 = sbr.rel (%p397) target = $region28
        $region27: #{tpu_custom_call.1} parent=11 // pred_region
          _
        $region28: #{tpu_custom_call.1} parent=11 // pred_fallthru
          _
        // Predicated region
        $region29: #{tpu_custom_call.1} parent=11 // pred_check
          %p400 = pneg %p183
        $region30: #{tpu_custom_call.1} parent=11 // pred_check_branch
          %402 = sbr.rel (%p400) target = $region32
        $region31: #{tpu_custom_call.1} parent=11 // pred_region
          _
        $region32: #{tpu_custom_call.1} parent=11 // pred_fallthru
          _
        // Predicated region
        $region33: #{tpu_custom_call.1} parent=11 // pred_check
          %p403 = pneg %p204
        $region34: #{tpu_custom_call.1} parent=11 // pred_check_branch
          %405 = sbr.rel (%p403) target = $region36
        $region35: #{tpu_custom_call.1} parent=11 // pred_region
          %407 = vsyncadd [#allocation14], 0
          %s408 = sshll.u32 %s7, 4
          %s409 = int_to_ptr.hbm [resolvable:$true] %s408
          %s410 = sshll.u32 [#allocation15], 4
          %s411 = int_to_ptr.vmem [resolvable:$true] %s410
          %416 = dma.hbm_to_vmem [thread:$0]  %s409, 4096, %s411, [#allocation14], 256, 256, 16
        $region36: #{tpu_custom_call.1} parent=11 // pred_fallthru
          _
        // Predicated region
        $region37: #{tpu_custom_call.1} parent=11 // pred_check
          %p417 = pneg %p225
        $region38: #{tpu_custom_call.1} parent=11 // pred_check_branch
          %419 = sbr.rel (%p417) target = $region40
        $region39: #{tpu_custom_call.1} parent=11 // pred_region
          %421 = vsyncadd [#allocation17], 0
          %s422 = sshll.u32 %s8, 4
          %s423 = int_to_ptr.hbm [resolvable:$true] %s422
          %s424 = sshll.u32 [#allocation16], 4
          %s425 = int_to_ptr.vmem [resolvable:$true] %s424
          %430 = dma.hbm_to_vmem [thread:$0]  %s423, 4096, %s425, [#allocation17], 256, 256, 16
        $region40: #{tpu_custom_call.1} parent=11 // pred_fallthru
          _
        // Predicated region
        $region41: #{tpu_custom_call.1} parent=11 // pred_check
          %p431 = pneg %p246
        $region42: #{tpu_custom_call.1} parent=11 // pred_check_branch
          %433 = sbr.rel (%p431) target = $region44
        $region43: #{tpu_custom_call.1} parent=11 // pred_region
          _
        $region44: #{tpu_custom_call.1} parent=11 // pred_fallthru
          _
        // Predicated region
        $region45: #{tpu_custom_call.1} parent=11 // pred_check
          %p434 = pneg %p267
        $region46: #{tpu_custom_call.1} parent=11 // pred_check_branch
          %436 = sbr.rel (%p434) target = $region48
        $region47: #{tpu_custom_call.1} parent=11 // pred_region
          _
        $region48: #{tpu_custom_call.1} parent=11 // pred_fallthru
          _
        // Predicated region
        $region49: #{tpu_custom_call.1} parent=11 // pred_check
          %p437 = pneg %p288
        $region50: #{tpu_custom_call.1} parent=11 // pred_check_branch
          %439 = sbr.rel (%p437) target = $region52
        $region51: #{tpu_custom_call.1} parent=11 // pred_region
          _
        $region52: #{tpu_custom_call.1} parent=11 // pred_fallthru
          _
        // Predicated region
        $region53: #{tpu_custom_call.1} parent=11 // pred_check
          %p440 = pneg %p309
        $region54: #{tpu_custom_call.1} parent=11 // pred_check_branch
          %442 = sbr.rel (%p440) target = $region56
        $region55: #{tpu_custom_call.1} parent=11 // pred_region
          %444 = vsyncadd [#allocation17], 0
          %s445 = sshll.u32 %s12, 4
          %s446 = int_to_ptr.hbm [resolvable:$true] %s445
          %s447 = sshll.u32 [#allocation18], 4
          %s448 = int_to_ptr.vmem [resolvable:$true] %s447
          %453 = dma.hbm_to_vmem [thread:$0]  %s446, 1024, %s448, [#allocation17], 64, 64, 4
        $region56: #{tpu_custom_call.1} parent=11 // pred_fallthru
          _
        // Predicated region
        $region57: #{tpu_custom_call.1} parent=11 // pred_check
          %p454 = pneg %p330
        $region58: #{tpu_custom_call.1} parent=11 // pred_check_branch
          %456 = sbr.rel (%p454) target = $region60
        $region59: #{tpu_custom_call.1} parent=11 // pred_region
          _
        $region60: #{tpu_custom_call.1} parent=11 // pred_fallthru
          _
      $region12: #{tpu_custom_call.1} parent=5 // pred_fallthru
        _
      %p457 = scmp.lt.s32.totalorder %s24, 2
      // Predicated region
      $region61: #{tpu_custom_call.1} parent=5 // pred_check
        %p458 = pneg %p457
      $region62: #{tpu_custom_call.1} parent=5 // pred_check_branch
        %460 = sbr.rel (%p458) target = $region64
      $region63: #{tpu_custom_call.1} parent=5 // pred_region
        // Predicated region
        $region65: #{tpu_custom_call.1} parent=63 // pred_check
          %p461 = pneg %p65
        $region66: #{tpu_custom_call.1} parent=63 // pred_check_branch
          %463 = sbr.rel (%p461) target = $region68
        $region67: #{tpu_custom_call.1} parent=63 // pred_region
          %s464 = smul.u32 8, %s24
          %p465 = scmp.lt.s32.totalorder %s464, 15
          %s466 = scalar_select %p465, %s464, 15
          %s467 = smul.addr %s466, 4
          %s468 = scalar_lea.vmem %s1, %s467
          %s469 = smul.u32 8, %s24
        $region68: #{tpu_custom_call.1} parent=63 // pred_fallthru
          _
        // Predicated region
        $region69: #{tpu_custom_call.1} parent=63 // pred_check
          %p470 = pneg %p93
        $region70: #{tpu_custom_call.1} parent=63 // pred_check_branch
          %472 = sbr.rel (%p470) target = $region72
        $region71: #{tpu_custom_call.1} parent=63 // pred_region
          %s473 = ssub.s32 1, %s24
          %s474 = smul.u32 8, %s473
          %p475 = scmp.lt.s32.totalorder %s474, 15
          %s476 = scalar_select %p475, %s474, 15
          %s477 = smul.addr %s476, 4
          %s478 = scalar_lea.vmem %s2, %s477
          %s479 = ssub.s32 1, %s24
          %s480 = smul.u32 8, %s479
        $region72: #{tpu_custom_call.1} parent=63 // pred_fallthru
          _
      $region64: #{tpu_custom_call.1} parent=5 // pred_fallthru
        _
      %p481 = scmp.le.s32.totalorder 1, %s24
      %p482 = scmp.lt.s32.totalorder %s24, 3
      %p483 = pnand %p481, %p482
      %p484 = pneg %p483
      // Predicated region
      $region73: #{tpu_custom_call.1} parent=5 // pred_check
        _
      $region74: #{tpu_custom_call.1} parent=5 // pred_check_branch
        %486 = sbr.rel (%p483) target = $region76
      $region75: #{tpu_custom_call.1} parent=5 // pred_region
        %s487 = ssub.s32 %s24, 1
        // Predicated region
        $region77: #{tpu_custom_call.1} parent=75 // pred_check
          %p488 = pneg %p120
        $region78: #{tpu_custom_call.1} parent=75 // pred_check_branch
          %490 = sbr.rel (%p488) target = $region80
        $region79: #{tpu_custom_call.1} parent=75 // pred_region
          %492 = dma.done [#allocation11], 512
        $region80: #{tpu_custom_call.1} parent=75 // pred_fallthru
          _
        // Predicated region
        $region81: #{tpu_custom_call.1} parent=75 // pred_check
          %p493 = pneg %p141
        $region82: #{tpu_custom_call.1} parent=75 // pred_check_branch
          %495 = sbr.rel (%p493) target = $region84
        $region83: #{tpu_custom_call.1} parent=75 // pred_region
          %497 = dma.done [#allocation14], 512
        $region84: #{tpu_custom_call.1} parent=75 // pred_fallthru
          _
        // Predicated region
        $region85: #{tpu_custom_call.1} parent=75 // pred_check
          %p498 = pneg %p204
        $region86: #{tpu_custom_call.1} parent=75 // pred_check_branch
          %500 = sbr.rel (%p498) target = $region88
        $region87: #{tpu_custom_call.1} parent=75 // pred_region
          %502 = dma.done [#allocation14], 4096
        $region88: #{tpu_custom_call.1} parent=75 // pred_fallthru
          _
        // Predicated region
        $region89: #{tpu_custom_call.1} parent=75 // pred_check
          %p503 = pneg %p225
        $region90: #{tpu_custom_call.1} parent=75 // pred_check_branch
          %505 = sbr.rel (%p503) target = $region92
        $region91: #{tpu_custom_call.1} parent=75 // pred_region
          %507 = dma.done [#allocation17], 4096
        $region92: #{tpu_custom_call.1} parent=75 // pred_fallthru
          _
        // Predicated region
        $region93: #{tpu_custom_call.1} parent=75 // pred_check
          %p508 = pneg %p309
        $region94: #{tpu_custom_call.1} parent=75 // pred_check_branch
          %510 = sbr.rel (%p508) target = $region96
        $region95: #{tpu_custom_call.1} parent=75 // pred_region
          %512 = dma.done [#allocation17], 1024
        $region96: #{tpu_custom_call.1} parent=75 // pred_fallthru
          _
        %p513 = pneg %p45
        %p514 = pneg %p42
        %s515 = smul.u32 8, %s29
        %p516 = scmp.lt.s32.totalorder %s515, 15
        %s517 = scalar_select %p516, %s515, 15
        %s518 = smul.addr %s517, 4
        %s519 = scalar_lea.vmem %s1, %s518
        %p520 = pneg %p71
        %p521 = pneg %p68
        %s522 = ssub.s32 1, %s29
        %s523 = smul.u32 8, %s522
        %p524 = scmp.lt.s32.totalorder %s523, 15
        %s525 = scalar_select %p524, %s523, 15
        %s526 = smul.addr %s525, 4
        %s527 = scalar_lea.vmem %s2, %s526
        %p528 = pneg %p99
        %p529 = pneg %p96
        %p530 = pneg %p120
        %p531 = pneg %p117
        %p532 = pneg %p141
        %p533 = pneg %p138
        %p534 = pneg %p162
        %p535 = pneg %p159
        %p536 = pneg %p183
        %p537 = pneg %p180
        %p538 = pneg %p204
        %p539 = pneg %p201
        %p540 = pneg %p225
        %p541 = pneg %p222
        %p542 = pneg %p246
        %p543 = pneg %p243
        %p544 = pneg %p267
        %p545 = pneg %p264
        %p546 = pneg %p288
        %p547 = pneg %p285
        %p548 = pneg %p309
        %p549 = pneg %p306
        %p550 = pneg %p330
        %p551 = pneg %p327
        %p552 = pneg %p351
        %p553 = pneg %p348
        %s554 = smul.u32 8, %s29
        %p555 = scmp.lt.s32.totalorder %s554, 15
        %s556 = scalar_select %p555, %s554, 15
        %s557 = smul.addr %s556, 4
        %s558 = scalar_lea.vmem %s1, %s557
        %s559 = smul.u32 8, %s29
        %s560 = ssub.s32 1, %s29
        %s561 = smul.u32 8, %s560
        %p562 = scmp.lt.s32.totalorder %s561, 15
        %s563 = scalar_select %p562, %s561, 15
        %s564 = smul.addr %s563, 4
        %s565 = scalar_lea.vmem %s2, %s564
        %s566 = ssub.s32 1, %s29
        %s567 = smul.u32 8, %s566
        %p569 = scmp.eq.s32.totalorder %s29, 0
        // Predicated region
        $region97: #{tpu_custom_call.1} parent=75 // pred_check
          %p570 = pneg %p569
        $region98: #{tpu_custom_call.1} parent=75 // pred_check_branch
          %572 = sbr.rel (%p570) target = $region100
        $region99: #{tpu_custom_call.1} parent=75 // pred_region
          %573 = vst [vmem:[#allocation4] sm:$0xff] 0.0
          %574 = vst [vmem:[#allocation4 + $0x8] sm:$0xff] 0.0
          %575 = vst [vmem:[#allocation5] sm:$0xff] 0.0
          %576 = vst [vmem:[#allocation5 + $0x8] sm:$0xff] 0.0
          %577 = vst [vmem:[#allocation6] sm:$0xff] 0.0
          %578 = vst [vmem:[#allocation6 + $0x8] sm:$0xff] 0.0
          %579 = vst [vmem:[#allocation7] sm:$0xff] 0.0
          %580 = vst [vmem:[#allocation7 + $0x8] sm:$0xff] 0.0
          %581 = vst [vmem:[#allocation8] sm:$0xff] 0.0
          %582 = vst [vmem:[#allocation8 + $0x8] sm:$0xff] 0.0
          %583 = vst [vmem:[#allocation9] sm:$0xff] 0.0
          %584 = vst [vmem:[#allocation9 + $0x8] sm:$0xff] 0.0
        $region100: #{tpu_custom_call.1} parent=75 // pred_fallthru
          _
        %v585 = vld [vmem:[%s558] sm:$0xf]
        %v586 = vld [vmem:[%s558 + $0x4] sm:$0xf]
        %v587 = vld [vmem:[%s558 + $0x8] sm:$0xf]
        %v588 = vld [vmem:[%s558 + $0xc] sm:$0xf]
        %v589 = vld [vmem:[%s558 + $0x10] sm:$0xf]
        %v590 = vld [vmem:[%s558 + $0x14] sm:$0xf]
        %v591 = vld [vmem:[%s558 + $0x18] sm:$0xf]
        %v592 = vld [vmem:[%s558 + $0x1c] sm:$0xf]
        %v593 = vld [vmem:[#allocation10] sm:$0xff]
        %v594 = vld [vmem:[#allocation10 + $0x8] sm:$0xff]
        %v595 = vld [vmem:[#allocation10 + $0x10] sm:$0xff]
        %v596 = vld [vmem:[#allocation10 + $0x18] sm:$0xff]
        %v597 = vld [vmem:[%s5] sm:$0xf]
        %v599 = vperm.slane %v597, 0
        %v600 = vperm.slane %v597, 1
        %v601 = vperm.slane %v597, 2
        %v602 = vperm.slane %v597, 3
        %v615 = vunpack.c.l.b16 %v585
        %v616 = vunpack.c.l.b16 %v586
        %v617 = vunpack.c.l.b16 %v587
        %v618 = vunpack.c.l.b16 %v588
        %v619 = vunpack.c.l.b16 %v589
        %v620 = vunpack.c.l.b16 %v590
        %v621 = vunpack.c.l.b16 %v591
        %v622 = vunpack.c.l.b16 %v592
        %v623 = vpack.c.b16 %v616, %v615
        %v624 = vpack.c.b16 %v618, %v617
        %v625 = vpack.c.b16 %v620, %v619
        %v626 = vpack.c.b16 %v622, %v621
        %v631 = vunpack.c.l.b16 %v593
        %v632 = vunpack.c.h.b16 %v593
        %v633 = vunpack.c.l.b16 %v594
        %v634 = vunpack.c.h.b16 %v594
        %v635 = vunpack.c.l.b16 %v595
        %v636 = vunpack.c.h.b16 %v595
        %v637 = vunpack.c.l.b16 %v596
        %v638 = vunpack.c.h.b16 %v596
        %v639 = vpack.c.b16 %v635, %v631
        %v640 = vpack.c.b16 %v636, %v632
        %v641 = vpack.c.b16 %v637, %v633
        %v642 = vpack.c.b16 %v638, %v634
        %vm647 = vcmask 130048
        %v649 = vsel %vm647, %v623, 0
        %v652 = vsel %vm647, %v624, 0
        %v655 = vsel %vm647, %v625, 0
        %v658 = vsel %vm647, %v626, 0
        %660 = vmatpush.bf16.msra.mxu0 0
        %661 = vmatpush.bf16.msra.mxu0 0
        %662 = vmatpush.bf16.msra.mxu0 0
        %663 = vmatpush.bf16.msra.mxu0 0
        %664 = vmatpush.bf16.msra.mxu0 0
        %665 = vmatpush.bf16.msra.mxu0 0
        %666 = vmatpush.bf16.msra.mxu0 0
        %667 = vmatpush.bf16.msra.mxu0 %v639
        %668 = vmatmul.bf16.gmra.mxu0 %v649
        %v669 = vpop.f32.mrf.mxu0
        %v670 = vadd.f32 %v599, %v669
        %v671 = vpop.f32.mrf.mxu0
        %v672 = vadd.f32 %v599, %v671
        %673 = vmatmul.bf16.gmra.mxu0 %v652
        %v674 = vpop.f32.mrf.mxu0
        %v675 = vadd.f32 %v599, %v674
        %v676 = vpop.f32.mrf.mxu0
        %v677 = vadd.f32 %v599, %v676
        %678 = vmatmul.bf16.gmra.mxu0 %v655
        %v679 = vpop.f32.mrf.mxu0
        %v680 = vadd.f32 %v599, %v679
        %v681 = vpop.f32.mrf.mxu0
        %v682 = vadd.f32 %v599, %v681
        %683 = vmatmul.bf16.gmra.mxu0 %v658
        %v684 = vpop.f32.mrf.mxu0
        %v685 = vadd.f32 %v599, %v684
        %v686 = vpop.f32.mrf.mxu0
        %v687 = vadd.f32 %v599, %v686
        %688 = vdwg.mxu0
        %689 = vmatpush.bf16.msra.mxu0 0
        %690 = vmatpush.bf16.msra.mxu0 0
        %691 = vmatpush.bf16.msra.mxu0 0
        %692 = vmatpush.bf16.msra.mxu0 0
        %693 = vmatpush.bf16.msra.mxu0 0
        %694 = vmatpush.bf16.msra.mxu0 0
        %695 = vmatpush.bf16.msra.mxu0 0
        %696 = vmatpush.bf16.msra.mxu0 %v640
        %697 = vmatmul.bf16.gmra.mxu0 %v649
        %v698 = vpop.f32.mrf.mxu0
        %v699 = vadd.f32 %v600, %v698
        %v700 = vpop.f32.mrf.mxu0
        %v701 = vadd.f32 %v600, %v700
        %702 = vmatmul.bf16.gmra.mxu0 %v652
        %v703 = vpop.f32.mrf.mxu0
        %v704 = vadd.f32 %v600, %v703
        %v705 = vpop.f32.mrf.mxu0
        %v706 = vadd.f32 %v600, %v705
        %707 = vmatmul.bf16.gmra.mxu0 %v655
        %v708 = vpop.f32.mrf.mxu0
        %v709 = vadd.f32 %v600, %v708
        %v710 = vpop.f32.mrf.mxu0
        %v711 = vadd.f32 %v600, %v710
        %712 = vmatmul.bf16.gmra.mxu0 %v658
        %v713 = vpop.f32.mrf.mxu0
        %v714 = vadd.f32 %v600, %v713
        %v715 = vpop.f32.mrf.mxu0
        %v716 = vadd.f32 %v600, %v715
        %717 = vdwg.mxu0
        %718 = vmatpush.bf16.msra.mxu0 0
        %719 = vmatpush.bf16.msra.mxu0 0
        %720 = vmatpush.bf16.msra.mxu0 0
        %721 = vmatpush.bf16.msra.mxu0 0
        %722 = vmatpush.bf16.msra.mxu0 0
        %723 = vmatpush.bf16.msra.mxu0 0
        %724 = vmatpush.bf16.msra.mxu0 0
        %725 = vmatpush.bf16.msra.mxu0 %v641
        %726 = vmatmul.bf16.gmra.mxu0 %v649
        %v727 = vpop.f32.mrf.mxu0
        %v728 = vadd.f32 %v601, %v727
        %v729 = vpop.f32.mrf.mxu0
        %v730 = vadd.f32 %v601, %v729
        %731 = vmatmul.bf16.gmra.mxu0 %v652
        %v732 = vpop.f32.mrf.mxu0
        %v733 = vadd.f32 %v601, %v732
        %v734 = vpop.f32.mrf.mxu0
        %v735 = vadd.f32 %v601, %v734
        %736 = vmatmul.bf16.gmra.mxu0 %v655
        %v737 = vpop.f32.mrf.mxu0
        %v738 = vadd.f32 %v601, %v737
        %v739 = vpop.f32.mrf.mxu0
        %v740 = vadd.f32 %v601, %v739
        %741 = vmatmul.bf16.gmra.mxu0 %v658
        %v742 = vpop.f32.mrf.mxu0
        %v743 = vadd.f32 %v601, %v742
        %v744 = vpop.f32.mrf.mxu0
        %v745 = vadd.f32 %v601, %v744
        %746 = vdwg.mxu0
        %747 = vmatpush.bf16.msra.mxu0 0
        %748 = vmatpush.bf16.msra.mxu0 0
        %749 = vmatpush.bf16.msra.mxu0 0
        %750 = vmatpush.bf16.msra.mxu0 0
        %751 = vmatpush.bf16.msra.mxu0 0
        %752 = vmatpush.bf16.msra.mxu0 0
        %753 = vmatpush.bf16.msra.mxu0 0
        %754 = vmatpush.bf16.msra.mxu0 %v642
        %755 = vmatmul.bf16.gmra.mxu0 %v649
        %v756 = vpop.f32.mrf.mxu0
        %v757 = vadd.f32 %v602, %v756
        %v758 = vpop.f32.mrf.mxu0
        %v759 = vadd.f32 %v602, %v758
        %760 = vmatmul.bf16.gmra.mxu0 %v652
        %v761 = vpop.f32.mrf.mxu0
        %v762 = vadd.f32 %v602, %v761
        %v763 = vpop.f32.mrf.mxu0
        %v764 = vadd.f32 %v602, %v763
        %765 = vmatmul.bf16.gmra.mxu0 %v655
        %v766 = vpop.f32.mrf.mxu0
        %v767 = vadd.f32 %v602, %v766
        %v768 = vpop.f32.mrf.mxu0
        %v769 = vadd.f32 %v602, %v768
        %770 = vmatmul.bf16.gmra.mxu0 %v658
        %v771 = vpop.f32.mrf.mxu0
        %v772 = vadd.f32 %v602, %v771
        %v773 = vpop.f32.mrf.mxu0
        %v774 = vadd.f32 %v602, %v773
        %775 = vdwg.mxu0
        %v776 = vpack.c.bf16 %v699, %v670
        %v777 = vpack.c.bf16 %v757, %v728
        %v778 = vpack.c.bf16 %v701, %v672
        %v779 = vpack.c.bf16 %v759, %v730
        %v780 = vpack.c.bf16 %v704, %v675
        %v781 = vpack.c.bf16 %v762, %v733
        %v782 = vpack.c.bf16 %v706, %v677
        %v783 = vpack.c.bf16 %v764, %v735
        %v784 = vpack.c.bf16 %v709, %v680
        %v785 = vpack.c.bf16 %v767, %v738
        %v786 = vpack.c.bf16 %v711, %v682
        %v787 = vpack.c.bf16 %v769, %v740
        %v788 = vpack.c.bf16 %v714, %v685
        %v789 = vpack.c.bf16 %v772, %v743
        %v790 = vpack.c.bf16 %v716, %v687
        %v791 = vpack.c.bf16 %v774, %v745
        %792 = vst [vmem:[#allocation2] sm:$0xff] %v776
        %793 = vst [vmem:[#allocation2 + $0x8] sm:$0xff] %v777
        %794 = vst [vmem:[#allocation2 + $0x10] sm:$0xff] %v778
        %795 = vst [vmem:[#allocation2 + $0x18] sm:$0xff] %v779
        %796 = vst [vmem:[#allocation2 + $0x20] sm:$0xff] %v780
        %797 = vst [vmem:[#allocation2 + $0x28] sm:$0xff] %v781
        %798 = vst [vmem:[#allocation2 + $0x30] sm:$0xff] %v782
        %799 = vst [vmem:[#allocation2 + $0x38] sm:$0xff] %v783
        %800 = vst [vmem:[#allocation2 + $0x40] sm:$0xff] %v784
        %801 = vst [vmem:[#allocation2 + $0x48] sm:$0xff] %v785
        %802 = vst [vmem:[#allocation2 + $0x50] sm:$0xff] %v786
        %803 = vst [vmem:[#allocation2 + $0x58] sm:$0xff] %v787
        %804 = vst [vmem:[#allocation2 + $0x60] sm:$0xff] %v788
        %805 = vst [vmem:[#allocation2 + $0x68] sm:$0xff] %v789
        %806 = vst [vmem:[#allocation2 + $0x70] sm:$0xff] %v790
        %807 = vst [vmem:[#allocation2 + $0x78] sm:$0xff] %v791
        %v808 = vld [vmem:[%s565] sm:$0xf]
        %v809 = vld [vmem:[%s565 + $0x4] sm:$0xf]
        %v810 = vld [vmem:[%s565 + $0x8] sm:$0xf]
        %v811 = vld [vmem:[%s565 + $0xc] sm:$0xf]
        %v812 = vld [vmem:[%s565 + $0x10] sm:$0xf]
        %v813 = vld [vmem:[%s565 + $0x14] sm:$0xf]
        %v814 = vld [vmem:[%s565 + $0x18] sm:$0xf]
        %v815 = vld [vmem:[%s565 + $0x1c] sm:$0xf]
        %v816 = vld [vmem:[#allocation13] sm:$0xff]
        %v817 = vld [vmem:[#allocation13 + $0x8] sm:$0xff]
        %v818 = vld [vmem:[#allocation13 + $0x10] sm:$0xff]
        %v819 = vld [vmem:[#allocation13 + $0x18] sm:$0xff]
        %v820 = vld [vmem:[%s6] sm:$0xf]
        %v822 = vperm.slane %v820, 0
        %v823 = vperm.slane %v820, 1
        %v824 = vperm.slane %v820, 2
        %v825 = vperm.slane %v820, 3
        %v838 = vunpack.c.l.b16 %v808
        %v839 = vunpack.c.l.b16 %v809
        %v840 = vunpack.c.l.b16 %v810
        %v841 = vunpack.c.l.b16 %v811
        %v842 = vunpack.c.l.b16 %v812
        %v843 = vunpack.c.l.b16 %v813
        %v844 = vunpack.c.l.b16 %v814
        %v845 = vunpack.c.l.b16 %v815
        %v846 = vpack.c.b16 %v839, %v838
        %v847 = vpack.c.b16 %v841, %v840
        %v848 = vpack.c.b16 %v843, %v842
        %v849 = vpack.c.b16 %v845, %v844
        %v854 = vunpack.c.l.b16 %v816
        %v855 = vunpack.c.h.b16 %v816
        %v856 = vunpack.c.l.b16 %v817
        %v857 = vunpack.c.h.b16 %v817
        %v858 = vunpack.c.l.b16 %v818
        %v859 = vunpack.c.h.b16 %v818
        %v860 = vunpack.c.l.b16 %v819
        %v861 = vunpack.c.h.b16 %v819
        %v862 = vpack.c.b16 %v858, %v854
        %v863 = vpack.c.b16 %v859, %v855
        %v864 = vpack.c.b16 %v860, %v856
        %v865 = vpack.c.b16 %v861, %v857
        %v871 = vsel %vm647, %v846, 0
        %v874 = vsel %vm647, %v847, 0
        %v877 = vsel %vm647, %v848, 0
        %v880 = vsel %vm647, %v849, 0
        %882 = vmatpush.bf16.msra.mxu0 0
        %883 = vmatpush.bf16.msra.mxu0 0
        %884 = vmatpush.bf16.msra.mxu0 0
        %885 = vmatpush.bf16.msra.mxu0 0
        %886 = vmatpush.bf16.msra.mxu0 0
        %887 = vmatpush.bf16.msra.mxu0 0
        %888 = vmatpush.bf16.msra.mxu0 0
        %889 = vmatpush.bf16.msra.mxu0 %v862
        %890 = vmatmul.bf16.gmra.mxu0 %v871
        %v891 = vpop.f32.mrf.mxu0
        %v892 = vadd.f32 %v822, %v891
        %v893 = vpop.f32.mrf.mxu0
        %v894 = vadd.f32 %v822, %v893
        %895 = vmatmul.bf16.gmra.mxu0 %v874
        %v896 = vpop.f32.mrf.mxu0
        %v897 = vadd.f32 %v822, %v896
        %v898 = vpop.f32.mrf.mxu0
        %v899 = vadd.f32 %v822, %v898
        %900 = vmatmul.bf16.gmra.mxu0 %v877
        %v901 = vpop.f32.mrf.mxu0
        %v902 = vadd.f32 %v822, %v901
        %v903 = vpop.f32.mrf.mxu0
        %v904 = vadd.f32 %v822, %v903
        %905 = vmatmul.bf16.gmra.mxu0 %v880
        %v906 = vpop.f32.mrf.mxu0
        %v907 = vadd.f32 %v822, %v906
        %v908 = vpop.f32.mrf.mxu0
        %v909 = vadd.f32 %v822, %v908
        %910 = vdwg.mxu0
        %911 = vmatpush.bf16.msra.mxu0 0
        %912 = vmatpush.bf16.msra.mxu0 0
        %913 = vmatpush.bf16.msra.mxu0 0
        %914 = vmatpush.bf16.msra.mxu0 0
        %915 = vmatpush.bf16.msra.mxu0 0
        %916 = vmatpush.bf16.msra.mxu0 0
        %917 = vmatpush.bf16.msra.mxu0 0
        %918 = vmatpush.bf16.msra.mxu0 %v863
        %919 = vmatmul.bf16.gmra.mxu0 %v871
        %v920 = vpop.f32.mrf.mxu0
        %v921 = vadd.f32 %v823, %v920
        %v922 = vpop.f32.mrf.mxu0
        %v923 = vadd.f32 %v823, %v922
        %924 = vmatmul.bf16.gmra.mxu0 %v874
        %v925 = vpop.f32.mrf.mxu0
        %v926 = vadd.f32 %v823, %v925
        %v927 = vpop.f32.mrf.mxu0
        %v928 = vadd.f32 %v823, %v927
        %929 = vmatmul.bf16.gmra.mxu0 %v877
        %v930 = vpop.f32.mrf.mxu0
        %v931 = vadd.f32 %v823, %v930
        %v932 = vpop.f32.mrf.mxu0
        %v933 = vadd.f32 %v823, %v932
        %934 = vmatmul.bf16.gmra.mxu0 %v880
        %v935 = vpop.f32.mrf.mxu0
        %v936 = vadd.f32 %v823, %v935
        %v937 = vpop.f32.mrf.mxu0
        %v938 = vadd.f32 %v823, %v937
        %939 = vdwg.mxu0
        %940 = vmatpush.bf16.msra.mxu0 0
        %941 = vmatpush.bf16.msra.mxu0 0
        %942 = vmatpush.bf16.msra.mxu0 0
        %943 = vmatpush.bf16.msra.mxu0 0
        %944 = vmatpush.bf16.msra.mxu0 0
        %945 = vmatpush.bf16.msra.mxu0 0
        %946 = vmatpush.bf16.msra.mxu0 0
        %947 = vmatpush.bf16.msra.mxu0 %v864
        %948 = vmatmul.bf16.gmra.mxu0 %v871
        %v949 = vpop.f32.mrf.mxu0
        %v950 = vadd.f32 %v824, %v949
        %v951 = vpop.f32.mrf.mxu0
        %v952 = vadd.f32 %v824, %v951
        %953 = vmatmul.bf16.gmra.mxu0 %v874
        %v954 = vpop.f32.mrf.mxu0
        %v955 = vadd.f32 %v824, %v954
        %v956 = vpop.f32.mrf.mxu0
        %v957 = vadd.f32 %v824, %v956
        %958 = vmatmul.bf16.gmra.mxu0 %v877
        %v959 = vpop.f32.mrf.mxu0
        %v960 = vadd.f32 %v824, %v959
        %v961 = vpop.f32.mrf.mxu0
        %v962 = vadd.f32 %v824, %v961
        %963 = vmatmul.bf16.gmra.mxu0 %v880
        %v964 = vpop.f32.mrf.mxu0
        %v965 = vadd.f32 %v824, %v964
        %v966 = vpop.f32.mrf.mxu0
        %v967 = vadd.f32 %v824, %v966
        %968 = vdwg.mxu0
        %969 = vmatpush.bf16.msra.mxu0 0
        %970 = vmatpush.bf16.msra.mxu0 0
        %971 = vmatpush.bf16.msra.mxu0 0
        %972 = vmatpush.bf16.msra.mxu0 0
        %973 = vmatpush.bf16.msra.mxu0 0
        %974 = vmatpush.bf16.msra.mxu0 0
        %975 = vmatpush.bf16.msra.mxu0 0
        %976 = vmatpush.bf16.msra.mxu0 %v865
        %977 = vmatmul.bf16.gmra.mxu0 %v871
        %v978 = vpop.f32.mrf.mxu0
        %v979 = vadd.f32 %v825, %v978
        %v980 = vpop.f32.mrf.mxu0
        %v981 = vadd.f32 %v825, %v980
        %982 = vmatmul.bf16.gmra.mxu0 %v874
        %v983 = vpop.f32.mrf.mxu0
        %v984 = vadd.f32 %v825, %v983
        %v985 = vpop.f32.mrf.mxu0
        %v986 = vadd.f32 %v825, %v985
        %987 = vmatmul.bf16.gmra.mxu0 %v877
        %v988 = vpop.f32.mrf.mxu0
        %v989 = vadd.f32 %v825, %v988
        %v990 = vpop.f32.mrf.mxu0
        %v991 = vadd.f32 %v825, %v990
        %992 = vmatmul.bf16.gmra.mxu0 %v880
        %v993 = vpop.f32.mrf.mxu0
        %v994 = vadd.f32 %v825, %v993
        %v995 = vpop.f32.mrf.mxu0
        %v996 = vadd.f32 %v825, %v995
        %997 = vdwg.mxu0
        %v998 = vpack.c.bf16 %v921, %v892
        %v999 = vpack.c.bf16 %v979, %v950
        %v1000 = vpack.c.bf16 %v923, %v894
        %v1001 = vpack.c.bf16 %v981, %v952
        %v1002 = vpack.c.bf16 %v926, %v897
        %v1003 = vpack.c.bf16 %v984, %v955
        %v1004 = vpack.c.bf16 %v928, %v899
        %v1005 = vpack.c.bf16 %v986, %v957
        %v1006 = vpack.c.bf16 %v931, %v902
        %v1007 = vpack.c.bf16 %v989, %v960
        %v1008 = vpack.c.bf16 %v933, %v904
        %v1009 = vpack.c.bf16 %v991, %v962
        %v1010 = vpack.c.bf16 %v936, %v907
        %v1011 = vpack.c.bf16 %v994, %v965
        %v1012 = vpack.c.bf16 %v938, %v909
        %v1013 = vpack.c.bf16 %v996, %v967
        %1014 = vst [vmem:[#allocation3] sm:$0xff] %v998
        %1015 = vst [vmem:[#allocation3 + $0x8] sm:$0xff] %v999
        %1016 = vst [vmem:[#allocation3 + $0x10] sm:$0xff] %v1000
        %1017 = vst [vmem:[#allocation3 + $0x18] sm:$0xff] %v1001
        %1018 = vst [vmem:[#allocation3 + $0x20] sm:$0xff] %v1002
        %1019 = vst [vmem:[#allocation3 + $0x28] sm:$0xff] %v1003
        %1020 = vst [vmem:[#allocation3 + $0x30] sm:$0xff] %v1004
        %1021 = vst [vmem:[#allocation3 + $0x38] sm:$0xff] %v1005
        %1022 = vst [vmem:[#allocation3 + $0x40] sm:$0xff] %v1006
        %1023 = vst [vmem:[#allocation3 + $0x48] sm:$0xff] %v1007
        %1024 = vst [vmem:[#allocation3 + $0x50] sm:$0xff] %v1008
        %1025 = vst [vmem:[#allocation3 + $0x58] sm:$0xff] %v1009
        %1026 = vst [vmem:[#allocation3 + $0x60] sm:$0xff] %v1010
        %1027 = vst [vmem:[#allocation3 + $0x68] sm:$0xff] %v1011
        %1028 = vst [vmem:[#allocation3 + $0x70] sm:$0xff] %v1012
        %1029 = vst [vmem:[#allocation3 + $0x78] sm:$0xff] %v1013
        %v1030 = vld [vmem:[%s0] sm:$0xff]
        %v1031 = vld [vmem:[%s0 + $0x8] sm:$0xff]
        %s1032 = smul.u32 %s29, 4
        %v1033 = vld [vmem:[#allocation4] sm:$0xff]
        %v1034 = vld [vmem:[#allocation4 + $0x8] sm:$0xff]
        %v1035 = vld [vmem:[#allocation5] sm:$0xff]
        %v1036 = vld [vmem:[#allocation5 + $0x8] sm:$0xff]
        %v1037 = vld [vmem:[#allocation6] sm:$0xff]
        %v1038 = vld [vmem:[#allocation6 + $0x8] sm:$0xff]
        %v1039 = vld [vmem:[#allocation7] sm:$0xff]
        %v1040 = vld [vmem:[#allocation7 + $0x8] sm:$0xff]
        loop: start=0, step=1, limit=4
        $region101: #{tpu_custom_call.1} parent=75 // loop_pre_header
          _
        $region102: #{tpu_custom_call.1} parent=75 // loop_header
          %s1042 = sphi 0, %s1046
          %p1043 = scmp.ge.s32.totalorder %s1042, 4
          %v1047 = vphi %v1033, %v1860
          %v1048 = vphi %v1034, %v1861
          %v1049 = vphi %v1035, %v1862
          %v1050 = vphi %v1036, %v1863
          %v1051 = vphi %v1037, %v1874
          %v1052 = vphi %v1038, %v1875
          %v1053 = vphi %v1039, %v1876
          %v1054 = vphi %v1040, %v1877
        $region103: #{tpu_custom_call.1} parent=75 // loop_header_branch
          %1045 = sbr.rel (%p1043) target = $region107
        $region104: #{tpu_custom_call.1} parent=75 // loop_body
          %s1055 = sadd.s32 %s1032, %s1042
          %v1056 = vpack.c.bf16 %v1048, %v1047
          %v1057 = vld [vmem:[#allocation15] sm:$0xff]
          %v1058 = vld [vmem:[#allocation15 + $0x8] sm:$0xff]
          %v1059 = vld [vmem:[#allocation15 + $0x10] sm:$0xff]
          %v1060 = vld [vmem:[#allocation15 + $0x18] sm:$0xff]
          %v1061 = vld [vmem:[#allocation15 + $0x20] sm:$0xff]
          %v1062 = vld [vmem:[#allocation15 + $0x28] sm:$0xff]
          %v1063 = vld [vmem:[#allocation15 + $0x30] sm:$0xff]
          %v1064 = vld [vmem:[#allocation15 + $0x38] sm:$0xff]
          %v1065 = vld [vmem:[#allocation15 + $0x40] sm:$0xff]
          %v1066 = vld [vmem:[#allocation15 + $0x48] sm:$0xff]
          %v1067 = vld [vmem:[#allocation15 + $0x50] sm:$0xff]
          %v1068 = vld [vmem:[#allocation15 + $0x58] sm:$0xff]
          %v1069 = vld [vmem:[#allocation15 + $0x60] sm:$0xff]
          %v1070 = vld [vmem:[#allocation15 + $0x68] sm:$0xff]
          %v1071 = vld [vmem:[#allocation15 + $0x70] sm:$0xff]
          %v1072 = vld [vmem:[#allocation15 + $0x78] sm:$0xff]
          %v1073 = vld [vmem:[#allocation15 + $0x80] sm:$0xff]
          %v1074 = vld [vmem:[#allocation15 + $0x88] sm:$0xff]
          %v1075 = vld [vmem:[#allocation15 + $0x90] sm:$0xff]
          %v1076 = vld [vmem:[#allocation15 + $0x98] sm:$0xff]
          %v1077 = vld [vmem:[#allocation15 + $0xa0] sm:$0xff]
          %v1078 = vld [vmem:[#allocation15 + $0xa8] sm:$0xff]
          %v1079 = vld [vmem:[#allocation15 + $0xb0] sm:$0xff]
          %v1080 = vld [vmem:[#allocation15 + $0xb8] sm:$0xff]
          %v1081 = vld [vmem:[#allocation15 + $0xc0] sm:$0xff]
          %v1082 = vld [vmem:[#allocation15 + $0xc8] sm:$0xff]
          %v1083 = vld [vmem:[#allocation15 + $0xd0] sm:$0xff]
          %v1084 = vld [vmem:[#allocation15 + $0xd8] sm:$0xff]
          %v1085 = vld [vmem:[#allocation15 + $0xe0] sm:$0xff]
          %v1086 = vld [vmem:[#allocation15 + $0xe8] sm:$0xff]
          %v1087 = vld [vmem:[#allocation15 + $0xf0] sm:$0xff]
          %v1088 = vld [vmem:[#allocation15 + $0xf8] sm:$0xff]
          %s1089 = smul.u32 %s1042, 16
          %s1090 = sshra.s32 %s1089, 3
          %s1091 = sand.u32 %s1089, 7
          %s1092 = smul.u32 %s1090, 4
          %s1093 = smul.addr %s1092, 4
          %s1094 = scalar_lea.vmem [#allocation2], %s1093
          %v1095 = vld [vmem:[%s1094] sm:$0xff]
          %v1096 = vld [vmem:[%s1094 + $0x8] sm:$0xff]
          %v1097 = vld [vmem:[%s1094 + $0x10] sm:$0xff]
          %v1098 = vld [vmem:[%s1094 + $0x18] sm:$0xff]
          %v1099 = vunpack.c.l.bf16 %v1095
          %v1100 = vunpack.c.h.bf16 %v1095
          %v1101 = vunpack.c.l.bf16 %v1096
          %v1102 = vunpack.c.h.bf16 %v1096
          %v1103 = vunpack.c.l.bf16 %v1097
          %v1104 = vunpack.c.h.bf16 %v1097
          %v1105 = vunpack.c.l.bf16 %v1098
          %v1106 = vunpack.c.h.bf16 %v1098
          %v1139 = vunpack.c.l.b16 %v1057
          %v1140 = vunpack.c.h.b16 %v1057
          %v1141 = vunpack.c.l.b16 %v1058
          %v1142 = vunpack.c.h.b16 %v1058
          %v1143 = vunpack.c.l.b16 %v1059
          %v1144 = vunpack.c.h.b16 %v1059
          %v1145 = vunpack.c.l.b16 %v1060
          %v1146 = vunpack.c.h.b16 %v1060
          %v1147 = vunpack.c.l.b16 %v1061
          %v1148 = vunpack.c.h.b16 %v1061
          %v1149 = vunpack.c.l.b16 %v1062
          %v1150 = vunpack.c.h.b16 %v1062
          %v1151 = vunpack.c.l.b16 %v1063
          %v1152 = vunpack.c.h.b16 %v1063
          %v1153 = vunpack.c.l.b16 %v1064
          %v1154 = vunpack.c.h.b16 %v1064
          %v1155 = vunpack.c.l.b16 %v1065
          %v1156 = vunpack.c.h.b16 %v1065
          %v1157 = vunpack.c.l.b16 %v1066
          %v1158 = vunpack.c.h.b16 %v1066
          %v1159 = vunpack.c.l.b16 %v1067
          %v1160 = vunpack.c.h.b16 %v1067
          %v1161 = vunpack.c.l.b16 %v1068
          %v1162 = vunpack.c.h.b16 %v1068
          %v1163 = vunpack.c.l.b16 %v1069
          %v1164 = vunpack.c.h.b16 %v1069
          %v1165 = vunpack.c.l.b16 %v1070
          %v1166 = vunpack.c.h.b16 %v1070
          %v1167 = vunpack.c.l.b16 %v1071
          %v1168 = vunpack.c.h.b16 %v1071
          %v1169 = vunpack.c.l.b16 %v1072
          %v1170 = vunpack.c.h.b16 %v1072
          %v1171 = vunpack.c.l.b16 %v1073
          %v1172 = vunpack.c.h.b16 %v1073
          %v1173 = vunpack.c.l.b16 %v1074
          %v1174 = vunpack.c.h.b16 %v1074
          %v1175 = vunpack.c.l.b16 %v1075
          %v1176 = vunpack.c.h.b16 %v1075
          %v1177 = vunpack.c.l.b16 %v1076
          %v1178 = vunpack.c.h.b16 %v1076
          %v1179 = vunpack.c.l.b16 %v1077
          %v1180 = vunpack.c.h.b16 %v1077
          %v1181 = vunpack.c.l.b16 %v1078
          %v1182 = vunpack.c.h.b16 %v1078
          %v1183 = vunpack.c.l.b16 %v1079
          %v1184 = vunpack.c.h.b16 %v1079
          %v1185 = vunpack.c.l.b16 %v1080
          %v1186 = vunpack.c.h.b16 %v1080
          %v1187 = vunpack.c.l.b16 %v1081
          %v1188 = vunpack.c.h.b16 %v1081
          %v1189 = vunpack.c.l.b16 %v1082
          %v1190 = vunpack.c.h.b16 %v1082
          %v1191 = vunpack.c.l.b16 %v1083
          %v1192 = vunpack.c.h.b16 %v1083
          %v1193 = vunpack.c.l.b16 %v1084
          %v1194 = vunpack.c.h.b16 %v1084
          %v1195 = vunpack.c.l.b16 %v1085
          %v1196 = vunpack.c.h.b16 %v1085
          %v1197 = vunpack.c.l.b16 %v1086
          %v1198 = vunpack.c.h.b16 %v1086
          %v1199 = vunpack.c.l.b16 %v1087
          %v1200 = vunpack.c.h.b16 %v1087
          %v1201 = vunpack.c.l.b16 %v1088
          %v1202 = vunpack.c.h.b16 %v1088
          %v1203 = vpack.c.b16 %v1143, %v1139
          %v1204 = vpack.c.b16 %v1144, %v1140
          %v1205 = vpack.c.b16 %v1145, %v1141
          %v1206 = vpack.c.b16 %v1146, %v1142
          %v1207 = vpack.c.b16 %v1151, %v1147
          %v1208 = vpack.c.b16 %v1152, %v1148
          %v1209 = vpack.c.b16 %v1153, %v1149
          %v1210 = vpack.c.b16 %v1154, %v1150
          %v1211 = vpack.c.b16 %v1159, %v1155
          %v1212 = vpack.c.b16 %v1160, %v1156
          %v1213 = vpack.c.b16 %v1161, %v1157
          %v1214 = vpack.c.b16 %v1162, %v1158
          %v1215 = vpack.c.b16 %v1167, %v1163
          %v1216 = vpack.c.b16 %v1168, %v1164
          %v1217 = vpack.c.b16 %v1169, %v1165
          %v1218 = vpack.c.b16 %v1170, %v1166
          %v1219 = vpack.c.b16 %v1175, %v1171
          %v1220 = vpack.c.b16 %v1176, %v1172
          %v1221 = vpack.c.b16 %v1177, %v1173
          %v1222 = vpack.c.b16 %v1178, %v1174
          %v1223 = vpack.c.b16 %v1183, %v1179
          %v1224 = vpack.c.b16 %v1184, %v1180
          %v1225 = vpack.c.b16 %v1185, %v1181
          %v1226 = vpack.c.b16 %v1186, %v1182
          %v1227 = vpack.c.b16 %v1191, %v1187
          %v1228 = vpack.c.b16 %v1192, %v1188
          %v1229 = vpack.c.b16 %v1193, %v1189
          %v1230 = vpack.c.b16 %v1194, %v1190
          %v1231 = vpack.c.b16 %v1199, %v1195
          %v1232 = vpack.c.b16 %v1200, %v1196
          %v1233 = vpack.c.b16 %v1201, %v1197
          %v1234 = vpack.c.b16 %v1202, %v1198
          %1267 = vmatpush.bf16.msra.mxu0 %v1231
          %1268 = vmatpush.bf16.msra.mxu0 %v1227
          %1269 = vmatpush.bf16.msra.mxu0 %v1223
          %1270 = vmatpush.bf16.msra.mxu0 %v1219
          %1271 = vmatpush.bf16.msra.mxu0 %v1215
          %1272 = vmatpush.bf16.msra.mxu0 %v1211
          %1273 = vmatpush.bf16.msra.mxu0 %v1207
          %1274 = vmatpush.bf16.msra.mxu0 %v1203
          %1275 = vmatmul.bf16.gmra.mxu0 %v1056
          %v1276 = vpop.f32.mrf.mxu0
          %v1277 = vadd.f32 %v1099, %v1276
          %v1278 = vpop.f32.mrf.mxu0
          %v1279 = vadd.f32 %v1103, %v1278
          %1280 = vdwg.mxu0
          %1281 = vmatpush.bf16.msra.mxu0 %v1232
          %1282 = vmatpush.bf16.msra.mxu0 %v1228
          %1283 = vmatpush.bf16.msra.mxu0 %v1224
          %1284 = vmatpush.bf16.msra.mxu0 %v1220
          %1285 = vmatpush.bf16.msra.mxu0 %v1216
          %1286 = vmatpush.bf16.msra.mxu0 %v1212
          %1287 = vmatpush.bf16.msra.mxu0 %v1208
          %1288 = vmatpush.bf16.msra.mxu0 %v1204
          %1289 = vmatmul.bf16.gmra.mxu0 %v1056
          %v1290 = vpop.f32.mrf.mxu0
          %v1291 = vadd.f32 %v1100, %v1290
          %v1292 = vpop.f32.mrf.mxu0
          %v1293 = vadd.f32 %v1104, %v1292
          %1294 = vdwg.mxu0
          %1295 = vmatpush.bf16.msra.mxu0 %v1233
          %1296 = vmatpush.bf16.msra.mxu0 %v1229
          %1297 = vmatpush.bf16.msra.mxu0 %v1225
          %1298 = vmatpush.bf16.msra.mxu0 %v1221
          %1299 = vmatpush.bf16.msra.mxu0 %v1217
          %1300 = vmatpush.bf16.msra.mxu0 %v1213
          %1301 = vmatpush.bf16.msra.mxu0 %v1209
          %1302 = vmatpush.bf16.msra.mxu0 %v1205
          %1303 = vmatmul.bf16.gmra.mxu0 %v1056
          %v1304 = vpop.f32.mrf.mxu0
          %v1305 = vadd.f32 %v1101, %v1304
          %v1306 = vpop.f32.mrf.mxu0
          %v1307 = vadd.f32 %v1105, %v1306
          %1308 = vdwg.mxu0
          %1309 = vmatpush.bf16.msra.mxu0 %v1234
          %1310 = vmatpush.bf16.msra.mxu0 %v1230
          %1311 = vmatpush.bf16.msra.mxu0 %v1226
          %1312 = vmatpush.bf16.msra.mxu0 %v1222
          %1313 = vmatpush.bf16.msra.mxu0 %v1218
          %1314 = vmatpush.bf16.msra.mxu0 %v1214
          %1315 = vmatpush.bf16.msra.mxu0 %v1210
          %1316 = vmatpush.bf16.msra.mxu0 %v1206
          %1317 = vmatmul.bf16.gmra.mxu0 %v1056
          %v1318 = vpop.f32.mrf.mxu0
          %v1319 = vadd.f32 %v1102, %v1318
          %v1320 = vpop.f32.mrf.mxu0
          %v1321 = vadd.f32 %v1106, %v1320
          %1322 = vdwg.mxu0
          %v1323 = vpack.c.bf16 %v1052, %v1051
          %v1324 = vld [vmem:[#allocation16] sm:$0xff]
          %v1325 = vld [vmem:[#allocation16 + $0x8] sm:$0xff]
          %v1326 = vld [vmem:[#allocation16 + $0x10] sm:$0xff]
          %v1327 = vld [vmem:[#allocation16 + $0x18] sm:$0xff]
          %v1328 = vld [vmem:[#allocation16 + $0x20] sm:$0xff]
          %v1329 = vld [vmem:[#allocation16 + $0x28] sm:$0xff]
          %v1330 = vld [vmem:[#allocation16 + $0x30] sm:$0xff]
          %v1331 = vld [vmem:[#allocation16 + $0x38] sm:$0xff]
          %v1332 = vld [vmem:[#allocation16 + $0x40] sm:$0xff]
          %v1333 = vld [vmem:[#allocation16 + $0x48] sm:$0xff]
          %v1334 = vld [vmem:[#allocation16 + $0x50] sm:$0xff]
          %v1335 = vld [vmem:[#allocation16 + $0x58] sm:$0xff]
          %v1336 = vld [vmem:[#allocation16 + $0x60] sm:$0xff]
          %v1337 = vld [vmem:[#allocation16 + $0x68] sm:$0xff]
          %v1338 = vld [vmem:[#allocation16 + $0x70] sm:$0xff]
          %v1339 = vld [vmem:[#allocation16 + $0x78] sm:$0xff]
          %v1340 = vld [vmem:[#allocation16 + $0x80] sm:$0xff]
          %v1341 = vld [vmem:[#allocation16 + $0x88] sm:$0xff]
          %v1342 = vld [vmem:[#allocation16 + $0x90] sm:$0xff]
          %v1343 = vld [vmem:[#allocation16 + $0x98] sm:$0xff]
          %v1344 = vld [vmem:[#allocation16 + $0xa0] sm:$0xff]
          %v1345 = vld [vmem:[#allocation16 + $0xa8] sm:$0xff]
          %v1346 = vld [vmem:[#allocation16 + $0xb0] sm:$0xff]
          %v1347 = vld [vmem:[#allocation16 + $0xb8] sm:$0xff]
          %v1348 = vld [vmem:[#allocation16 + $0xc0] sm:$0xff]
          %v1349 = vld [vmem:[#allocation16 + $0xc8] sm:$0xff]
          %v1350 = vld [vmem:[#allocation16 + $0xd0] sm:$0xff]
          %v1351 = vld [vmem:[#allocation16 + $0xd8] sm:$0xff]
          %v1352 = vld [vmem:[#allocation16 + $0xe0] sm:$0xff]
          %v1353 = vld [vmem:[#allocation16 + $0xe8] sm:$0xff]
          %v1354 = vld [vmem:[#allocation16 + $0xf0] sm:$0xff]
          %v1355 = vld [vmem:[#allocation16 + $0xf8] sm:$0xff]
          %s1356 = ssub.s32 3, %s1042
          %s1357 = smul.u32 %s1356, 16
          %s1358 = sshra.s32 %s1357, 3
          %s1359 = sand.u32 %s1357, 7
          %s1360 = smul.u32 %s1358, 4
          %s1361 = smul.addr %s1360, 4
          %s1362 = scalar_lea.vmem [#allocation3], %s1361
          %v1363 = vld [vmem:[%s1362] sm:$0xff]
          %v1364 = vld [vmem:[%s1362 + $0x8] sm:$0xff]
          %v1365 = vld [vmem:[%s1362 + $0x10] sm:$0xff]
          %v1366 = vld [vmem:[%s1362 + $0x18] sm:$0xff]
          %v1367 = vunpack.c.l.bf16 %v1363
          %v1368 = vunpack.c.h.bf16 %v1363
          %v1369 = vunpack.c.l.bf16 %v1364
          %v1370 = vunpack.c.h.bf16 %v1364
          %v1371 = vunpack.c.l.bf16 %v1365
          %v1372 = vunpack.c.h.bf16 %v1365
          %v1373 = vunpack.c.l.bf16 %v1366
          %v1374 = vunpack.c.h.bf16 %v1366
          %v1407 = vunpack.c.l.b16 %v1324
          %v1408 = vunpack.c.h.b16 %v1324
          %v1409 = vunpack.c.l.b16 %v1325
          %v1410 = vunpack.c.h.b16 %v1325
          %v1411 = vunpack.c.l.b16 %v1326
          %v1412 = vunpack.c.h.b16 %v1326
          %v1413 = vunpack.c.l.b16 %v1327
          %v1414 = vunpack.c.h.b16 %v1327
          %v1415 = vunpack.c.l.b16 %v1328
          %v1416 = vunpack.c.h.b16 %v1328
          %v1417 = vunpack.c.l.b16 %v1329
          %v1418 = vunpack.c.h.b16 %v1329
          %v1419 = vunpack.c.l.b16 %v1330
          %v1420 = vunpack.c.h.b16 %v1330
          %v1421 = vunpack.c.l.b16 %v1331
          %v1422 = vunpack.c.h.b16 %v1331
          %v1423 = vunpack.c.l.b16 %v1332
          %v1424 = vunpack.c.h.b16 %v1332
          %v1425 = vunpack.c.l.b16 %v1333
          %v1426 = vunpack.c.h.b16 %v1333
          %v1427 = vunpack.c.l.b16 %v1334
          %v1428 = vunpack.c.h.b16 %v1334
          %v1429 = vunpack.c.l.b16 %v1335
          %v1430 = vunpack.c.h.b16 %v1335
          %v1431 = vunpack.c.l.b16 %v1336
          %v1432 = vunpack.c.h.b16 %v1336
          %v1433 = vunpack.c.l.b16 %v1337
          %v1434 = vunpack.c.h.b16 %v1337
          %v1435 = vunpack.c.l.b16 %v1338
          %v1436 = vunpack.c.h.b16 %v1338
          %v1437 = vunpack.c.l.b16 %v1339
          %v1438 = vunpack.c.h.b16 %v1339
          %v1439 = vunpack.c.l.b16 %v1340
          %v1440 = vunpack.c.h.b16 %v1340
          %v1441 = vunpack.c.l.b16 %v1341
          %v1442 = vunpack.c.h.b16 %v1341
          %v1443 = vunpack.c.l.b16 %v1342
          %v1444 = vunpack.c.h.b16 %v1342
          %v1445 = vunpack.c.l.b16 %v1343
          %v1446 = vunpack.c.h.b16 %v1343
          %v1447 = vunpack.c.l.b16 %v1344
          %v1448 = vunpack.c.h.b16 %v1344
          %v1449 = vunpack.c.l.b16 %v1345
          %v1450 = vunpack.c.h.b16 %v1345
          %v1451 = vunpack.c.l.b16 %v1346
          %v1452 = vunpack.c.h.b16 %v1346
          %v1453 = vunpack.c.l.b16 %v1347
          %v1454 = vunpack.c.h.b16 %v1347
          %v1455 = vunpack.c.l.b16 %v1348
          %v1456 = vunpack.c.h.b16 %v1348
          %v1457 = vunpack.c.l.b16 %v1349
          %v1458 = vunpack.c.h.b16 %v1349
          %v1459 = vunpack.c.l.b16 %v1350
          %v1460 = vunpack.c.h.b16 %v1350
          %v1461 = vunpack.c.l.b16 %v1351
          %v1462 = vunpack.c.h.b16 %v1351
          %v1463 = vunpack.c.l.b16 %v1352
          %v1464 = vunpack.c.h.b16 %v1352
          %v1465 = vunpack.c.l.b16 %v1353
          %v1466 = vunpack.c.h.b16 %v1353
          %v1467 = vunpack.c.l.b16 %v1354
          %v1468 = vunpack.c.h.b16 %v1354
          %v1469 = vunpack.c.l.b16 %v1355
          %v1470 = vunpack.c.h.b16 %v1355
          %v1471 = vpack.c.b16 %v1411, %v1407
          %v1472 = vpack.c.b16 %v1412, %v1408
          %v1473 = vpack.c.b16 %v1413, %v1409
          %v1474 = vpack.c.b16 %v1414, %v1410
          %v1475 = vpack.c.b16 %v1419, %v1415
          %v1476 = vpack.c.b16 %v1420, %v1416
          %v1477 = vpack.c.b16 %v1421, %v1417
          %v1478 = vpack.c.b16 %v1422, %v1418
          %v1479 = vpack.c.b16 %v1427, %v1423
          %v1480 = vpack.c.b16 %v1428, %v1424
          %v1481 = vpack.c.b16 %v1429, %v1425
          %v1482 = vpack.c.b16 %v1430, %v1426
          %v1483 = vpack.c.b16 %v1435, %v1431
          %v1484 = vpack.c.b16 %v1436, %v1432
          %v1485 = vpack.c.b16 %v1437, %v1433
          %v1486 = vpack.c.b16 %v1438, %v1434
          %v1487 = vpack.c.b16 %v1443, %v1439
          %v1488 = vpack.c.b16 %v1444, %v1440
          %v1489 = vpack.c.b16 %v1445, %v1441
          %v1490 = vpack.c.b16 %v1446, %v1442
          %v1491 = vpack.c.b16 %v1451, %v1447
          %v1492 = vpack.c.b16 %v1452, %v1448
          %v1493 = vpack.c.b16 %v1453, %v1449
          %v1494 = vpack.c.b16 %v1454, %v1450
          %v1495 = vpack.c.b16 %v1459, %v1455
          %v1496 = vpack.c.b16 %v1460, %v1456
          %v1497 = vpack.c.b16 %v1461, %v1457
          %v1498 = vpack.c.b16 %v1462, %v1458
          %v1499 = vpack.c.b16 %v1467, %v1463
          %v1500 = vpack.c.b16 %v1468, %v1464
          %v1501 = vpack.c.b16 %v1469, %v1465
          %v1502 = vpack.c.b16 %v1470, %v1466
          %1535 = vmatpush.bf16.msra.mxu0 %v1499
          %1536 = vmatpush.bf16.msra.mxu0 %v1495
          %1537 = vmatpush.bf16.msra.mxu0 %v1491
          %1538 = vmatpush.bf16.msra.mxu0 %v1487
          %1539 = vmatpush.bf16.msra.mxu0 %v1483
          %1540 = vmatpush.bf16.msra.mxu0 %v1479
          %1541 = vmatpush.bf16.msra.mxu0 %v1475
          %1542 = vmatpush.bf16.msra.mxu0 %v1471
          %1543 = vmatmul.bf16.gmra.mxu0 %v1323
          %v1544 = vpop.f32.mrf.mxu0
          %v1545 = vadd.f32 %v1367, %v1544
          %v1546 = vpop.f32.mrf.mxu0
          %v1547 = vadd.f32 %v1371, %v1546
          %1548 = vdwg.mxu0
          %1549 = vmatpush.bf16.msra.mxu0 %v1500
          %1550 = vmatpush.bf16.msra.mxu0 %v1496
          %1551 = vmatpush.bf16.msra.mxu0 %v1492
          %1552 = vmatpush.bf16.msra.mxu0 %v1488
          %1553 = vmatpush.bf16.msra.mxu0 %v1484
          %1554 = vmatpush.bf16.msra.mxu0 %v1480
          %1555 = vmatpush.bf16.msra.mxu0 %v1476
          %1556 = vmatpush.bf16.msra.mxu0 %v1472
          %1557 = vmatmul.bf16.gmra.mxu0 %v1323
          %v1558 = vpop.f32.mrf.mxu0
          %v1559 = vadd.f32 %v1368, %v1558
          %v1560 = vpop.f32.mrf.mxu0
          %v1561 = vadd.f32 %v1372, %v1560
          %1562 = vdwg.mxu0
          %1563 = vmatpush.bf16.msra.mxu0 %v1501
          %1564 = vmatpush.bf16.msra.mxu0 %v1497
          %1565 = vmatpush.bf16.msra.mxu0 %v1493
          %1566 = vmatpush.bf16.msra.mxu0 %v1489
          %1567 = vmatpush.bf16.msra.mxu0 %v1485
          %1568 = vmatpush.bf16.msra.mxu0 %v1481
          %1569 = vmatpush.bf16.msra.mxu0 %v1477
          %1570 = vmatpush.bf16.msra.mxu0 %v1473
          %1571 = vmatmul.bf16.gmra.mxu0 %v1323
          %v1572 = vpop.f32.mrf.mxu0
          %v1573 = vadd.f32 %v1369, %v1572
          %v1574 = vpop.f32.mrf.mxu0
          %v1575 = vadd.f32 %v1373, %v1574
          %1576 = vdwg.mxu0
          %1577 = vmatpush.bf16.msra.mxu0 %v1502
          %1578 = vmatpush.bf16.msra.mxu0 %v1498
          %1579 = vmatpush.bf16.msra.mxu0 %v1494
          %1580 = vmatpush.bf16.msra.mxu0 %v1490
          %1581 = vmatpush.bf16.msra.mxu0 %v1486
          %1582 = vmatpush.bf16.msra.mxu0 %v1482
          %1583 = vmatpush.bf16.msra.mxu0 %v1478
          %1584 = vmatpush.bf16.msra.mxu0 %v1474
          %1585 = vmatmul.bf16.gmra.mxu0 %v1323
          %v1586 = vpop.f32.mrf.mxu0
          %v1587 = vadd.f32 %v1370, %v1586
          %v1588 = vpop.f32.mrf.mxu0
          %v1589 = vadd.f32 %v1374, %v1588
          %1590 = vdwg.mxu0
          %v1591 = vxor.u32 %v1277, 2147483648
          %v1592 = vxor.u32 %v1279, 2147483648
          %v1593 = vmul.f32 %v1591, 1.442695
          %v1594 = vpow.pop %v1593
          %v1595 = vmul.f32 %v1592, 1.442695
          %v1596 = vpow.pop %v1595
          %v1597 = vadd.f32 %v1594, 1.0
          %v1598 = vadd.f32 %v1596, 1.0
          %v1599 = vrcp.pop %v1597
          %v1600 = vmul.f32 %v1597, %v1599
          %v1601 = vsub.f32 1.0, %v1600
          %v1602 = vmul.f32 %v1599, %v1601
          %v1603 = vadd.f32 %v1599, %v1602
          %vm1604 = vweird.f32 %v1597
          %vm1605 = vweird.f32 %v1599
          %vm1606 = vmor %vm1604, %vm1605
          %v1607 = vsel %vm1606, %v1599, %v1603
          %v1608 = vand.u32 2147483647, %v1597
          %vm1609 = vcmp.eq.f32.partialorder %v1608, 8.507059e+37
          %v1610 = vand.u32 %v1597, 2147483648
          %v1611 = vor.u32 1.1754944e-38, %v1610
          %v1612 = vsel %vm1609, %v1611, %v1607
          %v1613 = vmul.f32 1.0, %v1612
          %v1614 = vrcp.pop %v1598
          %v1615 = vmul.f32 %v1598, %v1614
          %v1616 = vsub.f32 1.0, %v1615
          %v1617 = vmul.f32 %v1614, %v1616
          %v1618 = vadd.f32 %v1614, %v1617
          %vm1619 = vweird.f32 %v1598
          %vm1620 = vweird.f32 %v1614
          %vm1621 = vmor %vm1619, %vm1620
          %v1622 = vsel %vm1621, %v1614, %v1618
          %v1623 = vand.u32 2147483647, %v1598
          %vm1624 = vcmp.eq.f32.partialorder %v1623, 8.507059e+37
          %v1625 = vand.u32 %v1598, 2147483648
          %v1626 = vor.u32 1.1754944e-38, %v1625
          %v1627 = vsel %vm1624, %v1626, %v1622
          %v1628 = vmul.f32 1.0, %v1627
          %v1629 = vxor.u32 %v1291, 2147483648
          %v1630 = vxor.u32 %v1293, 2147483648
          %v1631 = vmul.f32 %v1629, 1.442695
          %v1632 = vpow.pop %v1631
          %v1633 = vmul.f32 %v1630, 1.442695
          %v1634 = vpow.pop %v1633
          %v1635 = vadd.f32 %v1632, 1.0
          %v1636 = vadd.f32 %v1634, 1.0
          %v1637 = vrcp.pop %v1635
          %v1638 = vmul.f32 %v1635, %v1637
          %v1639 = vsub.f32 1.0, %v1638
          %v1640 = vmul.f32 %v1637, %v1639
          %v1641 = vadd.f32 %v1637, %v1640
          %vm1642 = vweird.f32 %v1635
          %vm1643 = vweird.f32 %v1637
          %vm1644 = vmor %vm1642, %vm1643
          %v1645 = vsel %vm1644, %v1637, %v1641
          %v1646 = vand.u32 2147483647, %v1635
          %vm1647 = vcmp.eq.f32.partialorder %v1646, 8.507059e+37
          %v1648 = vand.u32 %v1635, 2147483648
          %v1649 = vor.u32 1.1754944e-38, %v1648
          %v1650 = vsel %vm1647, %v1649, %v1645
          %v1651 = vmul.f32 1.0, %v1650
          %v1652 = vrcp.pop %v1636
          %v1653 = vmul.f32 %v1636, %v1652
          %v1654 = vsub.f32 1.0, %v1653
          %v1655 = vmul.f32 %v1652, %v1654
          %v1656 = vadd.f32 %v1652, %v1655
          %vm1657 = vweird.f32 %v1636
          %vm1658 = vweird.f32 %v1652
          %vm1659 = vmor %vm1657, %vm1658
          %v1660 = vsel %vm1659, %v1652, %v1656
          %v1661 = vand.u32 2147483647, %v1636
          %vm1662 = vcmp.eq.f32.partialorder %v1661, 8.507059e+37
          %v1663 = vand.u32 %v1636, 2147483648
          %v1664 = vor.u32 1.1754944e-38, %v1663
          %v1665 = vsel %vm1662, %v1664, %v1660
          %v1666 = vmul.f32 1.0, %v1665
          %v1667 = vtanh.pop %v1305
          %v1668 = vtanh.pop %v1307
          %v1669 = vxor.u32 %v1319, 2147483648
          %v1670 = vxor.u32 %v1321, 2147483648
          %v1671 = vmul.f32 %v1669, 1.442695
          %v1672 = vpow.pop %v1671
          %v1673 = vmul.f32 %v1670, 1.442695
          %v1674 = vpow.pop %v1673
          %v1675 = vadd.f32 %v1672, 1.0
          %v1676 = vadd.f32 %v1674, 1.0
          %v1677 = vrcp.pop %v1675
          %v1678 = vmul.f32 %v1675, %v1677
          %v1679 = vsub.f32 1.0, %v1678
          %v1680 = vmul.f32 %v1677, %v1679
          %v1681 = vadd.f32 %v1677, %v1680
          %vm1682 = vweird.f32 %v1675
          %vm1683 = vweird.f32 %v1677
          %vm1684 = vmor %vm1682, %vm1683
          %v1685 = vsel %vm1684, %v1677, %v1681
          %v1686 = vand.u32 2147483647, %v1675
          %vm1687 = vcmp.eq.f32.partialorder %v1686, 8.507059e+37
          %v1688 = vand.u32 %v1675, 2147483648
          %v1689 = vor.u32 1.1754944e-38, %v1688
          %v1690 = vsel %vm1687, %v1689, %v1685
          %v1691 = vmul.f32 1.0, %v1690
          %v1692 = vrcp.pop %v1676
          %v1693 = vmul.f32 %v1676, %v1692
          %v1694 = vsub.f32 1.0, %v1693
          %v1695 = vmul.f32 %v1692, %v1694
          %v1696 = vadd.f32 %v1692, %v1695
          %vm1697 = vweird.f32 %v1676
          %vm1698 = vweird.f32 %v1692
          %vm1699 = vmor %vm1697, %vm1698
          %v1700 = vsel %vm1699, %v1692, %v1696
          %v1701 = vand.u32 2147483647, %v1676
          %vm1702 = vcmp.eq.f32.partialorder %v1701, 8.507059e+37
          %v1703 = vand.u32 %v1676, 2147483648
          %v1704 = vor.u32 1.1754944e-38, %v1703
          %v1705 = vsel %vm1702, %v1704, %v1700
          %v1706 = vmul.f32 1.0, %v1705
          %v1707 = vmul.f32 %v1651, %v1049
          %v1708 = vmul.f32 %v1666, %v1050
          %v1709 = vmul.f32 %v1613, %v1667
          %v1710 = vmul.f32 %v1628, %v1668
          %v1711 = vadd.f32 %v1707, %v1709
          %v1712 = vadd.f32 %v1708, %v1710
          %v1713 = vtanh.pop %v1711
          %v1714 = vtanh.pop %v1712
          %v1715 = vmul.f32 %v1691, %v1713
          %v1716 = vmul.f32 %v1706, %v1714
          %v1717 = vxor.u32 %v1545, 2147483648
          %v1718 = vxor.u32 %v1547, 2147483648
          %v1719 = vmul.f32 %v1717, 1.442695
          %v1720 = vpow.pop %v1719
          %v1721 = vmul.f32 %v1718, 1.442695
          %v1722 = vpow.pop %v1721
          %v1723 = vadd.f32 %v1720, 1.0
          %v1724 = vadd.f32 %v1722, 1.0
          %v1725 = vrcp.pop %v1723
          %v1726 = vmul.f32 %v1723, %v1725
          %v1727 = vsub.f32 1.0, %v1726
          %v1728 = vmul.f32 %v1725, %v1727
          %v1729 = vadd.f32 %v1725, %v1728
          %vm1730 = vweird.f32 %v1723
          %vm1731 = vweird.f32 %v1725
          %vm1732 = vmor %vm1730, %vm1731
          %v1733 = vsel %vm1732, %v1725, %v1729
          %v1734 = vand.u32 2147483647, %v1723
          %vm1735 = vcmp.eq.f32.partialorder %v1734, 8.507059e+37
          %v1736 = vand.u32 %v1723, 2147483648
          %v1737 = vor.u32 1.1754944e-38, %v1736
          %v1738 = vsel %vm1735, %v1737, %v1733
          %v1739 = vmul.f32 1.0, %v1738
          %v1740 = vrcp.pop %v1724
          %v1741 = vmul.f32 %v1724, %v1740
          %v1742 = vsub.f32 1.0, %v1741
          %v1743 = vmul.f32 %v1740, %v1742
          %v1744 = vadd.f32 %v1740, %v1743
          %vm1745 = vweird.f32 %v1724
          %vm1746 = vweird.f32 %v1740
          %vm1747 = vmor %vm1745, %vm1746
          %v1748 = vsel %vm1747, %v1740, %v1744
          %v1749 = vand.u32 2147483647, %v1724
          %vm1750 = vcmp.eq.f32.partialorder %v1749, 8.507059e+37
          %v1751 = vand.u32 %v1724, 2147483648
          %v1752 = vor.u32 1.1754944e-38, %v1751
          %v1753 = vsel %vm1750, %v1752, %v1748
          %v1754 = vmul.f32 1.0, %v1753
          %v1755 = vxor.u32 %v1559, 2147483648
          %v1756 = vxor.u32 %v1561, 2147483648
          %v1757 = vmul.f32 %v1755, 1.442695
          %v1758 = vpow.pop %v1757
          %v1759 = vmul.f32 %v1756, 1.442695
          %v1760 = vpow.pop %v1759
          %v1761 = vadd.f32 %v1758, 1.0
          %v1762 = vadd.f32 %v1760, 1.0
          %v1763 = vrcp.pop %v1761
          %v1764 = vmul.f32 %v1761, %v1763
          %v1765 = vsub.f32 1.0, %v1764
          %v1766 = vmul.f32 %v1763, %v1765
          %v1767 = vadd.f32 %v1763, %v1766
          %vm1768 = vweird.f32 %v1761
          %vm1769 = vweird.f32 %v1763
          %vm1770 = vmor %vm1768, %vm1769
          %v1771 = vsel %vm1770, %v1763, %v1767
          %v1772 = vand.u32 2147483647, %v1761
          %vm1773 = vcmp.eq.f32.partialorder %v1772, 8.507059e+37
          %v1774 = vand.u32 %v1761, 2147483648
          %v1775 = vor.u32 1.1754944e-38, %v1774
          %v1776 = vsel %vm1773, %v1775, %v1771
          %v1777 = vmul.f32 1.0, %v1776
          %v1778 = vrcp.pop %v1762
          %v1779 = vmul.f32 %v1762, %v1778
          %v1780 = vsub.f32 1.0, %v1779
          %v1781 = vmul.f32 %v1778, %v1780
          %v1782 = vadd.f32 %v1778, %v1781
          %vm1783 = vweird.f32 %v1762
          %vm1784 = vweird.f32 %v1778
          %vm1785 = vmor %vm1783, %vm1784
          %v1786 = vsel %vm1785, %v1778, %v1782
          %v1787 = vand.u32 2147483647, %v1762
          %vm1788 = vcmp.eq.f32.partialorder %v1787, 8.507059e+37
          %v1789 = vand.u32 %v1762, 2147483648
          %v1790 = vor.u32 1.1754944e-38, %v1789
          %v1791 = vsel %vm1788, %v1790, %v1786
          %v1792 = vmul.f32 1.0, %v1791
          %v1793 = vtanh.pop %v1573
          %v1794 = vtanh.pop %v1575
          %v1795 = vxor.u32 %v1587, 2147483648
          %v1796 = vxor.u32 %v1589, 2147483648
          %v1797 = vmul.f32 %v1795, 1.442695
          %v1798 = vpow.pop %v1797
          %v1799 = vmul.f32 %v1796, 1.442695
          %v1800 = vpow.pop %v1799
          %v1801 = vadd.f32 %v1798, 1.0
          %v1802 = vadd.f32 %v1800, 1.0
          %v1803 = vrcp.pop %v1801
          %v1804 = vmul.f32 %v1801, %v1803
          %v1805 = vsub.f32 1.0, %v1804
          %v1806 = vmul.f32 %v1803, %v1805
          %v1807 = vadd.f32 %v1803, %v1806
          %vm1808 = vweird.f32 %v1801
          %vm1809 = vweird.f32 %v1803
          %vm1810 = vmor %vm1808, %vm1809
          %v1811 = vsel %vm1810, %v1803, %v1807
          %v1812 = vand.u32 2147483647, %v1801
          %vm1813 = vcmp.eq.f32.partialorder %v1812, 8.507059e+37
          %v1814 = vand.u32 %v1801, 2147483648
          %v1815 = vor.u32 1.1754944e-38, %v1814
          %v1816 = vsel %vm1813, %v1815, %v1811
          %v1817 = vmul.f32 1.0, %v1816
          %v1818 = vrcp.pop %v1802
          %v1819 = vmul.f32 %v1802, %v1818
          %v1820 = vsub.f32 1.0, %v1819
          %v1821 = vmul.f32 %v1818, %v1820
          %v1822 = vadd.f32 %v1818, %v1821
          %vm1823 = vweird.f32 %v1802
          %vm1824 = vweird.f32 %v1818
          %vm1825 = vmor %vm1823, %vm1824
          %v1826 = vsel %vm1825, %v1818, %v1822
          %v1827 = vand.u32 2147483647, %v1802
          %vm1828 = vcmp.eq.f32.partialorder %v1827, 8.507059e+37
          %v1829 = vand.u32 %v1802, 2147483648
          %v1830 = vor.u32 1.1754944e-38, %v1829
          %v1831 = vsel %vm1828, %v1830, %v1826
          %v1832 = vmul.f32 1.0, %v1831
          %v1833 = vmul.f32 %v1777, %v1053
          %v1834 = vmul.f32 %v1792, %v1054
          %v1835 = vmul.f32 %v1739, %v1793
          %v1836 = vmul.f32 %v1754, %v1794
          %v1837 = vadd.f32 %v1833, %v1835
          %v1838 = vadd.f32 %v1834, %v1836
          %v1839 = vtanh.pop %v1837
          %v1840 = vtanh.pop %v1838
          %v1841 = vmul.f32 %v1817, %v1839
          %v1842 = vmul.f32 %v1832, %v1840
          %v1843 = vstv %s1055
          %vm1844 = vcmp.gt.s32.totalorder %v1030, %v1843
          %vm1845 = vcmp.gt.s32.totalorder %v1031, %v1843
          %s1846 = ssub.s32 7, %s1055
          %v1847 = vstv %s1846
          %vm1848 = vcmp.gt.s32.totalorder %v1030, %v1847
          %vm1849 = vcmp.gt.s32.totalorder %v1031, %v1847
          %v1850 = vsel %vm1844, 1, 0
          %v1851 = vsel %vm1845, 1, 0
          %1852 = vset.pattern.permute.xlu0 0
          %1853 = vperm.xlu0 %1852, %v1850
          %v1854 = vpop.permute.xlu0 %1853
          %1855 = vset.pattern.permute.xlu0 0
          %1856 = vperm.xlu0 %1855, %v1851
          %v1857 = vpop.permute.xlu0 %1856
          %vm1858 = vcmp.eq.s32.totalorder %v1854, 1
          %vm1859 = vcmp.eq.s32.totalorder %v1857, 1
          %v1860 = vsel %vm1858, %v1715, %v1047
          %v1861 = vsel %vm1859, %v1716, %v1048
          %v1862 = vsel %vm1858, %v1711, %v1049
          %v1863 = vsel %vm1859, %v1712, %v1050
          %v1864 = vsel %vm1848, 1, 0
          %v1865 = vsel %vm1849, 1, 0
          %1866 = vset.pattern.permute.xlu0 0
          %1867 = vperm.xlu0 %1866, %v1864
          %v1868 = vpop.permute.xlu0 %1867
          %1869 = vset.pattern.permute.xlu0 0
          %1870 = vperm.xlu0 %1869, %v1865
          %v1871 = vpop.permute.xlu0 %1870
          %vm1872 = vcmp.eq.s32.totalorder %v1868, 1
          %vm1873 = vcmp.eq.s32.totalorder %v1871, 1
          %v1874 = vsel %vm1872, %v1841, %v1051
          %v1875 = vsel %vm1873, %v1842, %v1052
          %v1876 = vsel %vm1872, %v1837, %v1053
          %v1877 = vsel %vm1873, %v1838, %v1054
          %v1878 = vld [vmem:[#allocation8] sm:$0xff]
          %v1879 = vld [vmem:[#allocation8 + $0x8] sm:$0xff]
          %v1880 = vsel %vm1858, %v1715, 0.0
          %v1881 = vsel %vm1859, %v1716, 0.0
          %v1882 = vadd.f32 %v1878, %v1880
          %v1883 = vadd.f32 %v1879, %v1881
          %1884 = vst [vmem:[#allocation8] sm:$0xff] %v1882
          %1885 = vst [vmem:[#allocation8 + $0x8] sm:$0xff] %v1883
          %v1886 = vld [vmem:[#allocation9] sm:$0xff]
          %v1887 = vld [vmem:[#allocation9 + $0x8] sm:$0xff]
          %v1888 = vsel %vm1872, %v1841, 0.0
          %v1889 = vsel %vm1873, %v1842, 0.0
          %v1890 = vadd.f32 %v1886, %v1888
          %v1891 = vadd.f32 %v1887, %v1889
          %1892 = vst [vmem:[#allocation9] sm:$0xff] %v1890
          %1893 = vst [vmem:[#allocation9 + $0x8] sm:$0xff] %v1891
        $region105: #{tpu_custom_call.1} parent=75 // loop_footer
          %s1046 = sadd.s32 1, %s1042
        $region106: #{tpu_custom_call.1} parent=75 // loop_footer_branch
          %1041 = sbr.rel target = $region102
        $region107: #{tpu_custom_call.1} parent=75 // loop_exit
          _
        %1894 = vst [vmem:[#allocation4] sm:$0xff] %v1047
        %1895 = vst [vmem:[#allocation4 + $0x8] sm:$0xff] %v1048
        %1896 = vst [vmem:[#allocation5] sm:$0xff] %v1049
        %1897 = vst [vmem:[#allocation5 + $0x8] sm:$0xff] %v1050
        %1898 = vst [vmem:[#allocation6] sm:$0xff] %v1051
        %1899 = vst [vmem:[#allocation6 + $0x8] sm:$0xff] %v1052
        %1900 = vst [vmem:[#allocation7] sm:$0xff] %v1053
        %1901 = vst [vmem:[#allocation7 + $0x8] sm:$0xff] %v1054
        %p1902 = scmp.eq.s32.totalorder %s29, 1
        // Predicated region
        $region108: #{tpu_custom_call.1} parent=75 // pred_check
          %p1903 = pneg %p1902
        $region109: #{tpu_custom_call.1} parent=75 // pred_check_branch
          %1905 = sbr.rel (%p1903) target = $region111
        $region110: #{tpu_custom_call.1} parent=75 // pred_region
          %vm1906 = vcmp.gt.s32.totalorder %v1030, 1
          %v1907 = vsel %vm1906, %v1030, 1
          %vm1908 = vcmp.gt.s32.totalorder %v1031, 1
          %v1909 = vsel %vm1908, %v1031, 1
          %v1910 = vcvt.s32.f32 %v1907
          %v1911 = vcvt.s32.f32 %v1909
          %v1912 = vrcp.pop %v1910
          %v1913 = vmul.f32 %v1910, %v1912
          %v1914 = vsub.f32 1.0, %v1913
          %v1915 = vmul.f32 %v1912, %v1914
          %v1916 = vadd.f32 %v1912, %v1915
          %vm1917 = vweird.f32 %v1910
          %vm1918 = vweird.f32 %v1912
          %vm1919 = vmor %vm1917, %vm1918
          %v1920 = vsel %vm1919, %v1912, %v1916
          %v1921 = vand.u32 2147483647, %v1910
          %vm1922 = vcmp.eq.f32.partialorder %v1921, 8.507059e+37
          %v1923 = vand.u32 %v1910, 2147483648
          %v1924 = vor.u32 1.1754944e-38, %v1923
          %v1925 = vsel %vm1922, %v1924, %v1920
          %v1926 = vmul.f32 1.0, %v1925
          %v1927 = vrcp.pop %v1911
          %v1928 = vmul.f32 %v1911, %v1927
          %v1929 = vsub.f32 1.0, %v1928
          %v1930 = vmul.f32 %v1927, %v1929
          %v1931 = vadd.f32 %v1927, %v1930
          %vm1932 = vweird.f32 %v1911
          %vm1933 = vweird.f32 %v1927
          %vm1934 = vmor %vm1932, %vm1933
          %v1935 = vsel %vm1934, %v1927, %v1931
          %v1936 = vand.u32 2147483647, %v1911
          %vm1937 = vcmp.eq.f32.partialorder %v1936, 8.507059e+37
          %v1938 = vand.u32 %v1911, 2147483648
          %v1939 = vor.u32 1.1754944e-38, %v1938
          %v1940 = vsel %vm1937, %v1939, %v1935
          %v1941 = vmul.f32 1.0, %v1940
          %v1942 = vld [vmem:[#allocation8] sm:$0xff]
          %v1943 = vld [vmem:[#allocation8 + $0x8] sm:$0xff]
          %1945 = vset.pattern.permute.xlu0 0
          %1946 = vperm.xlu0 %1945, %v1926
          %v1947 = vpop.permute.xlu0 %1946
          %1950 = vset.pattern.permute.xlu0 0
          %1951 = vperm.xlu0 %1950, %v1941
          %v1952 = vpop.permute.xlu0 %1951
          %v1954 = vmul.f32 %v1942, %v1947
          %v1955 = vmul.f32 %v1943, %v1952
          %v1956 = vpack.c.bf16 %v1955, %v1954
          %v1957 = vld [vmem:[#allocation9] sm:$0xff]
          %v1958 = vld [vmem:[#allocation9 + $0x8] sm:$0xff]
          %v1959 = vmul.f32 %v1957, %v1947
          %v1960 = vmul.f32 %v1958, %v1952
          %v1961 = vpack.c.bf16 %v1960, %v1959
          %v1962 = vld [vmem:[%s9] sm:$0xf]
          %v1963 = vld [vmem:[%s9 + $0x4] sm:$0xf]
          %v1964 = vld [vmem:[%s9 + $0x8] sm:$0xf]
          %v1965 = vld [vmem:[%s9 + $0xc] sm:$0xf]
          %v1966 = vld [vmem:[%s9 + $0x10] sm:$0xf]
          %v1967 = vld [vmem:[%s9 + $0x14] sm:$0xf]
          %v1968 = vld [vmem:[%s9 + $0x18] sm:$0xf]
          %v1969 = vld [vmem:[%s9 + $0x1c] sm:$0xf]
          %v1970 = vld [vmem:[%s9 + $0x20] sm:$0xf]
          %v1971 = vld [vmem:[%s9 + $0x24] sm:$0xf]
          %v1972 = vld [vmem:[%s9 + $0x28] sm:$0xf]
          %v1973 = vld [vmem:[%s9 + $0x2c] sm:$0xf]
          %v1974 = vld [vmem:[%s9 + $0x30] sm:$0xf]
          %v1975 = vld [vmem:[%s9 + $0x34] sm:$0xf]
          %v1976 = vld [vmem:[%s9 + $0x38] sm:$0xf]
          %v1977 = vld [vmem:[%s9 + $0x3c] sm:$0xf]
          %v1978 = vld [vmem:[%s10] sm:$0xf]
          %v1979 = vld [vmem:[%s10 + $0x4] sm:$0xf]
          %v1980 = vld [vmem:[%s10 + $0x8] sm:$0xf]
          %v1981 = vld [vmem:[%s10 + $0xc] sm:$0xf]
          %v1982 = vld [vmem:[%s10 + $0x10] sm:$0xf]
          %v1983 = vld [vmem:[%s10 + $0x14] sm:$0xf]
          %v1984 = vld [vmem:[%s10 + $0x18] sm:$0xf]
          %v1985 = vld [vmem:[%s10 + $0x1c] sm:$0xf]
          %v1986 = vld [vmem:[%s10 + $0x20] sm:$0xf]
          %v1987 = vld [vmem:[%s10 + $0x24] sm:$0xf]
          %v1988 = vld [vmem:[%s10 + $0x28] sm:$0xf]
          %v1989 = vld [vmem:[%s10 + $0x2c] sm:$0xf]
          %v1990 = vld [vmem:[%s10 + $0x30] sm:$0xf]
          %v1991 = vld [vmem:[%s10 + $0x34] sm:$0xf]
          %v1992 = vld [vmem:[%s10 + $0x38] sm:$0xf]
          %v1993 = vld [vmem:[%s10 + $0x3c] sm:$0xf]
          %v2010 = vunpack.c.l.b16 %v1978
          %v2011 = vunpack.c.l.b16 %v1979
          %v2012 = vunpack.c.l.b16 %v1980
          %v2013 = vunpack.c.l.b16 %v1981
          %v2014 = vunpack.c.l.b16 %v1982
          %v2015 = vunpack.c.l.b16 %v1983
          %v2016 = vunpack.c.l.b16 %v1984
          %v2017 = vunpack.c.l.b16 %v1985
          %v2018 = vunpack.c.l.b16 %v1986
          %v2019 = vunpack.c.l.b16 %v1987
          %v2020 = vunpack.c.l.b16 %v1988
          %v2021 = vunpack.c.l.b16 %v1989
          %v2022 = vunpack.c.l.b16 %v1990
          %v2023 = vunpack.c.l.b16 %v1991
          %v2024 = vunpack.c.l.b16 %v1992
          %v2025 = vunpack.c.l.b16 %v1993
          %v2026 = vpack.c.b16 %v2011, %v2010
          %v2027 = vpack.c.b16 %v2013, %v2012
          %v2028 = vpack.c.b16 %v2015, %v2014
          %v2029 = vpack.c.b16 %v2017, %v2016
          %v2030 = vpack.c.b16 %v2019, %v2018
          %v2031 = vpack.c.b16 %v2021, %v2020
          %v2032 = vpack.c.b16 %v2023, %v2022
          %v2033 = vpack.c.b16 %v2025, %v2024
          %2042 = vmatpush.bf16.msra.mxu0 %v2033
          %2043 = vmatpush.bf16.msra.mxu0 %v2032
          %2044 = vmatpush.bf16.msra.mxu0 %v2031
          %2045 = vmatpush.bf16.msra.mxu0 %v2030
          %2046 = vmatpush.bf16.msra.mxu0 %v2029
          %2047 = vmatpush.bf16.msra.mxu0 %v2028
          %2048 = vmatpush.bf16.msra.mxu0 %v2027
          %2049 = vmatpush.bf16.msra.mxu0 %v2026
          %2050 = vmatmul.bf16.gmra.mxu0 %v1961
          %v2051 = vpop.f32.mrf.mxu0
          %v2052 = vadd.f32 0.0, %v2051
          %v2053 = vpop.f32.mrf.mxu0
          %v2054 = vadd.f32 0.0, %v2053
          %2055 = vdwg.mxu0
          %v2072 = vunpack.c.l.b16 %v1962
          %v2073 = vunpack.c.l.b16 %v1963
          %v2074 = vunpack.c.l.b16 %v1964
          %v2075 = vunpack.c.l.b16 %v1965
          %v2076 = vunpack.c.l.b16 %v1966
          %v2077 = vunpack.c.l.b16 %v1967
          %v2078 = vunpack.c.l.b16 %v1968
          %v2079 = vunpack.c.l.b16 %v1969
          %v2080 = vunpack.c.l.b16 %v1970
          %v2081 = vunpack.c.l.b16 %v1971
          %v2082 = vunpack.c.l.b16 %v1972
          %v2083 = vunpack.c.l.b16 %v1973
          %v2084 = vunpack.c.l.b16 %v1974
          %v2085 = vunpack.c.l.b16 %v1975
          %v2086 = vunpack.c.l.b16 %v1976
          %v2087 = vunpack.c.l.b16 %v1977
          %v2088 = vpack.c.b16 %v2073, %v2072
          %v2089 = vpack.c.b16 %v2075, %v2074
          %v2090 = vpack.c.b16 %v2077, %v2076
          %v2091 = vpack.c.b16 %v2079, %v2078
          %v2092 = vpack.c.b16 %v2081, %v2080
          %v2093 = vpack.c.b16 %v2083, %v2082
          %v2094 = vpack.c.b16 %v2085, %v2084
          %v2095 = vpack.c.b16 %v2087, %v2086
          %2104 = vmatpush.bf16.msra.mxu0 %v2095
          %2105 = vmatpush.bf16.msra.mxu0 %v2094
          %2106 = vmatpush.bf16.msra.mxu0 %v2093
          %2107 = vmatpush.bf16.msra.mxu0 %v2092
          %2108 = vmatpush.bf16.msra.mxu0 %v2091
          %2109 = vmatpush.bf16.msra.mxu0 %v2090
          %2110 = vmatpush.bf16.msra.mxu0 %v2089
          %2111 = vmatpush.bf16.msra.mxu0 %v2088
          %2112 = vmatmul.bf16.gmra.mxu0 %v1956
          %v2113 = vpop.f32.mrf.mxu0
          %v2114 = vadd.f32 %v2052, %v2113
          %v2115 = vpop.f32.mrf.mxu0
          %v2116 = vadd.f32 %v2054, %v2115
          %2117 = vdwg.mxu0
          %v2118 = vld [vmem:[%s11] sm:$0x1]
          %v2120 = vperm.slane %v2118, 0
          %v2122 = vadd.f32 %v2114, %v2120
          %v2123 = vadd.f32 %v2116, %v2120
          %v2124 = vpack.c.bf16 %v2123, %v2122
          %v2125 = vld [vmem:[#allocation18] sm:$0xf]
          %v2126 = vld [vmem:[#allocation18 + $0x4] sm:$0xf]
          %v2127 = vld [vmem:[#allocation18 + $0x8] sm:$0xf]
          %v2128 = vld [vmem:[#allocation18 + $0xc] sm:$0xf]
          %v2129 = vld [vmem:[#allocation18 + $0x10] sm:$0xf]
          %v2130 = vld [vmem:[#allocation18 + $0x14] sm:$0xf]
          %v2131 = vld [vmem:[#allocation18 + $0x18] sm:$0xf]
          %v2132 = vld [vmem:[#allocation18 + $0x1c] sm:$0xf]
          %v2133 = vld [vmem:[#allocation18 + $0x20] sm:$0xf]
          %v2134 = vld [vmem:[#allocation18 + $0x24] sm:$0xf]
          %v2135 = vld [vmem:[#allocation18 + $0x28] sm:$0xf]
          %v2136 = vld [vmem:[#allocation18 + $0x2c] sm:$0xf]
          %v2137 = vld [vmem:[#allocation18 + $0x30] sm:$0xf]
          %v2138 = vld [vmem:[#allocation18 + $0x34] sm:$0xf]
          %v2139 = vld [vmem:[#allocation18 + $0x38] sm:$0xf]
          %v2140 = vld [vmem:[#allocation18 + $0x3c] sm:$0xf]
          %v2141 = vld [vmem:[%s13] sm:$0x1]
          %v2143 = vperm.slane %v2141, 0
          %v2161 = vunpack.c.l.b16 %v2125
          %v2162 = vunpack.c.l.b16 %v2126
          %v2163 = vunpack.c.l.b16 %v2127
          %v2164 = vunpack.c.l.b16 %v2128
          %v2165 = vunpack.c.l.b16 %v2129
          %v2166 = vunpack.c.l.b16 %v2130
          %v2167 = vunpack.c.l.b16 %v2131
          %v2168 = vunpack.c.l.b16 %v2132
          %v2169 = vunpack.c.l.b16 %v2133
          %v2170 = vunpack.c.l.b16 %v2134
          %v2171 = vunpack.c.l.b16 %v2135
          %v2172 = vunpack.c.l.b16 %v2136
          %v2173 = vunpack.c.l.b16 %v2137
          %v2174 = vunpack.c.l.b16 %v2138
          %v2175 = vunpack.c.l.b16 %v2139
          %v2176 = vunpack.c.l.b16 %v2140
          %v2177 = vpack.c.b16 %v2162, %v2161
          %v2178 = vpack.c.b16 %v2164, %v2163
          %v2179 = vpack.c.b16 %v2166, %v2165
          %v2180 = vpack.c.b16 %v2168, %v2167
          %v2181 = vpack.c.b16 %v2170, %v2169
          %v2182 = vpack.c.b16 %v2172, %v2171
          %v2183 = vpack.c.b16 %v2174, %v2173
          %v2184 = vpack.c.b16 %v2176, %v2175
          %2193 = vmatpush.bf16.msra.mxu0 %v2184
          %2194 = vmatpush.bf16.msra.mxu0 %v2183
          %2195 = vmatpush.bf16.msra.mxu0 %v2182
          %2196 = vmatpush.bf16.msra.mxu0 %v2181
          %2197 = vmatpush.bf16.msra.mxu0 %v2180
          %2198 = vmatpush.bf16.msra.mxu0 %v2179
          %2199 = vmatpush.bf16.msra.mxu0 %v2178
          %2200 = vmatpush.bf16.msra.mxu0 %v2177
          %2201 = vmatmul.bf16.gmra.mxu0 %v2124
          %v2202 = vpop.f32.mrf.mxu0
          %v2203 = vadd.f32 %v2143, %v2202
          %v2204 = vpop.f32.mrf.mxu0
          %v2205 = vadd.f32 %v2143, %v2204
          %2206 = vdwg.mxu0
          %2207 = vst [vmem:[#allocation19] sm:$0xff] %v2203
          %2208 = vst [vmem:[#allocation19 + $0x8] sm:$0xff] %v2205
        $region111: #{tpu_custom_call.1} parent=75 // pred_fallthru
          _
        // Predicated region
        $region112: #{tpu_custom_call.1} parent=75 // pred_check
          %p2209 = pneg %p348
        $region113: #{tpu_custom_call.1} parent=75 // pred_check_branch
          %2211 = sbr.rel (%p2209) target = $region115
        $region114: #{tpu_custom_call.1} parent=75 // pred_region
          %2213 = vsyncadd [#allocation12], 0
          %s2214 = sshll.u32 [#allocation19], 4
          %s2215 = int_to_ptr.vmem [resolvable:$true] %s2214
          %s2216 = sshll.u32 %s14, 4
          %s2217 = int_to_ptr.hbm [resolvable:$true] %s2216
          %2222 = dma.vmem_to_hbm [thread:$0]  %s2215, 256, %s2217, [#allocation12], 128, 128, 8
        $region115: #{tpu_custom_call.1} parent=75 // pred_fallthru
          _
        // Predicated region
        $region116: #{tpu_custom_call.1} parent=75 // pred_check
          %p2223 = pneg %p348
        $region117: #{tpu_custom_call.1} parent=75 // pred_check_branch
          %2225 = sbr.rel (%p2223) target = $region119
        $region118: #{tpu_custom_call.1} parent=75 // pred_region
          %2227 = dma.done [#allocation12], 256
        $region119: #{tpu_custom_call.1} parent=75 // pred_fallthru
          _
      $region76: #{tpu_custom_call.1} parent=5 // pred_fallthru
        _
      %p2228 = scmp.le.s32.totalorder 2, %s24
      // Predicated region
      $region120: #{tpu_custom_call.1} parent=5 // pred_check
        %p2229 = pneg %p2228
      $region121: #{tpu_custom_call.1} parent=5 // pred_check_branch
        %2231 = sbr.rel (%p2229) target = $region123
      $region122: #{tpu_custom_call.1} parent=5 // pred_region
        %s2232 = ssub.s32 %s24, 2
      $region123: #{tpu_custom_call.1} parent=5 // pred_fallthru
        _
    $region6: #{tpu_custom_call.1} parent=1 // loop_footer
      %s28 = sadd.s32 1, %s24
    $region7: #{tpu_custom_call.1} parent=1 // loop_footer_branch
      %23 = sbr.rel target = $region3
    $region8: #{tpu_custom_call.1} parent=1 // loop_exit
      _
    %2233 = vsyncpa [#allocation11], 1
    %s2234 = scalar_lea.sflag [#allocation11], 1
    %2235 = vsyncpa %s2234, 1
    %2236 = vsyncpa [#allocation14], 1
    %2237 = vsyncpa [#allocation17], 1
    %2238 = vsyncpa [#allocation12], 1
    %s2239 = scalar_lea.sflag [#allocation12], 1
    %2240 = vsyncpa %s2239, 1

</llo_original>
